<compile_context>
chip_gen: v5e
topology: v5e:2x2
jax: 0.10.0
libtpu: 0.0.40
codegen_flags: <defaults>
</compile_context>

<pallas_src>
import functools

import numpy as np
import jax
import jax.numpy as jnp
from jax.experimental import pallas as pl
from jax.experimental.pallas import tpu as pltpu


# ---------------------------------------------------------------------------
# Host-side constant: validity masks for the SAME zero-padding taps.
# ---------------------------------------------------------------------------
def _border_masks(H, W, K):
    """(K*K, 1, H*W) float32: mask[t, 0, i*W+j] = 1 iff tap t of output (i,j)
    reads an in-bounds input pixel (i.e. not a zero-padding tap)."""
    pad = K // 2
    ii, jj = np.meshgrid(np.arange(H), np.arange(W), indexing="ij")
    masks = np.zeros((K * K, 1, H * W), np.float32)
    for kh in range(K):
        for kw in range(K):
            dh, dw = kh - pad, kw - pad
            valid = ((ii + dh >= 0) & (ii + dh < H) &
                     (jj + dw >= 0) & (jj + dw < W))
            masks[kh * K + kw, 0, :] = valid.reshape(-1).astype(np.float32)
    return masks


# ---------------------------------------------------------------------------
# Fused kernel: normalize -> conv (9 shifted matmul-adds) -> bias+ReLU
#               -> global avg pool -> linear head.  One image per grid step.
# All big tensors are lane-dense: last dim = H*W = 256.
# ---------------------------------------------------------------------------
def _fused_forward_kernel(x_ref, mean_ref, istd_ref, mask_ref, wt_ref, bc_ref,
                          wf_ref, bf_ref, out_ref, *, H, W, K):
    # x_ref   : (1, C, H*W)      raw input image (NCHW, spatially flattened)
    # mean_ref: (C, 1)           normalizer mean
    # istd_ref: (C, 1)           normalizer 1/std
    # mask_ref: (K*K, 1, H*W)    border-tap validity masks (constants)
    # wt_ref  : (K*K, Cout, C)   conv weights per tap, wt[kh*K+kw] = w[:, :, kh, kw]
    # bc_ref  : (Cout, 1)        conv bias
    # wf_ref  : (Cout, NPAD)     head weights, zero-padded to NPAD lanes
    # bf_ref  : (1, NPAD)        head bias, zero-padded
    # out_ref : (1, 1, NPAD)     logits (lane-dense store)
    HW = H * W
    pad = K // 2
    Cout = wt_ref.shape[1]

    # Normalize once, lane-dense (C, HW).
    xn = (x_ref[0] - mean_ref[...]) * istd_ref[...]

    # Conv as 9 shifted matmul-accumulates: acc (Cout, HW) += W_t (Cout, C) @ slab (C, HW).
    acc = jnp.zeros((Cout, HW), jnp.float32)
    for kh in range(K):
        for kw in range(K):
            t = kh * K + kw
            d = (kh - pad) * W + (kw - pad)
            # shifted[p] = xn[p + d]: lane rotation (XLU).  Wrapped / cross-row
            # positions are exactly the ones the border mask zeroes out.
            shifted = xn if d == 0 else jnp.roll(xn, shift=-d, axis=1)
            slab = shifted * mask_ref[t]                     # SAME padding taps -> 0
            acc = acc + jnp.dot(wt_ref[t], slab,
                                preferred_element_type=jnp.float32,
                                precision=jax.lax.Precision.HIGHEST)

    y = jnp.maximum(acc + bc_ref[...], 0.0)                  # bias + ReLU, (Cout, HW)
    pooled = jnp.mean(y, axis=1, keepdims=True)              # lane-axis mean -> (Cout, 1)

    # Tiny head: (1, NPAD) = sum_o pooled[o] * wf[o, :] + bf.  VPU+XLU only,
    # no transpose, output store is a full 128-lane block.
    logits = jnp.sum(pooled * wf_ref[...], axis=0, keepdims=True) + bf_ref[...]
    out_ref[0] = logits


# ---------------------------------------------------------------------------
# Wrapper: layout plumbing (all free/tiny) + launch.
# ---------------------------------------------------------------------------
def model_wrapper_forward(x, params, K=3):
    """x: (B, C, H, W) float32 NCHW.  Returns logits (B, num_classes)."""
    B, C, H, W = x.shape
    HW = H * W
    mean, std = params["mean"], params["std"]
    conv_w, conv_b = params["conv_w"], params["conv_b"]      # (Cout,C,K,K), (Cout,)
    fc_w, fc_b = params["fc_w"], params["fc_b"]              # (Cout,Ncls), (Ncls,)
    Cout = conv_w.shape[0]
    Ncls = fc_w.shape[1]
    NPAD = max(128, ((Ncls + 127) // 128) * 128)             # lane-dense output width

    # Activation side: a single free row-major reshape; no transpose, no padded
    # HBM copy (the input is read exactly once by the kernel).
    x_flat = x.reshape(B, C, HW)

    # Parameter prep (tiny; hoist/jit once in a real model).
    mean2 = mean.reshape(C, 1).astype(jnp.float32)
    istd2 = (1.0 / std).reshape(C, 1).astype(jnp.float32)
    w_taps = conv_w.transpose(2, 3, 0, 1).reshape(K * K, Cout, C)   # tap-major
    bc = conv_b.reshape(Cout, 1)
    wf = jnp.zeros((Cout, NPAD), jnp.float32).at[:, :Ncls].set(fc_w)
    bf = jnp.zeros((1, NPAD), jnp.float32).at[0, :Ncls].set(fc_b)
    masks = jnp.asarray(_border_masks(H, W, K))              # (K*K, 1, HW) constants

    kernel = functools.partial(_fused_forward_kernel, H=H, W=W, K=K)

    out = pl.pallas_call(
        kernel,
        out_shape=jax.ShapeDtypeStruct((B, 1, NPAD), jnp.float32),
        grid=(B,),
        in_specs=[
            pl.BlockSpec((1, C, HW), lambda b: (b, 0, 0)),          # per-image tile
            pl.BlockSpec((C, 1), lambda b: (0, 0)),                 # mean  (resident)
            pl.BlockSpec((C, 1), lambda b: (0, 0)),                 # 1/std (resident)
            pl.BlockSpec((K * K, 1, HW), lambda b: (0, 0, 0)),      # border masks
            pl.BlockSpec((K * K, Cout, C), lambda b: (0, 0, 0)),    # conv weights
            pl.BlockSpec((Cout, 1), lambda b: (0, 0)),              # conv bias
            pl.BlockSpec((Cout, NPAD), lambda b: (0, 0)),           # head weights
            pl.BlockSpec((1, NPAD), lambda b: (0, 0)),              # head bias
        ],
        out_specs=pl.BlockSpec((1, 1, NPAD), lambda b: (b, 0, 0)),
        compiler_params=pltpu.CompilerParams(
            dimension_semantics=("parallel",)),                     # both v7x TCs busy
    )(x_flat, mean2, istd2, masks, w_taps, bc, wf, bf)

    return out.reshape(B, NPAD)[:, :Ncls]


# ---------------------------------------------------------------------------
# Pure-JAX reference (for correctness check)
# ---------------------------------------------------------------------------
def reference_forward(x, params):
    mean, std = params["mean"], params["std"]
    xn = (x - mean[None, :, None, None]) / std[None, :, None, None]
    y = jax.lax.conv_general_dilated(
        xn, params["conv_w"], window_strides=(1, 1), padding="SAME",
        dimension_numbers=("NCHW", "OIHW", "NCHW"),
        precision=jax.lax.Precision.HIGHEST)
    y = y + params["conv_b"][None, :, None, None]
    y = jnp.maximum(y, 0.0)
    pooled = y.mean(axis=(2, 3))
    return jnp.dot(pooled, params["fc_w"],
                   precision=jax.lax.Precision.HIGHEST) + params["fc_b"]


if __name__ == "__main__":
    B, C, H, W = 2, 4, 16, 16
    Cout, Ncls, K = 8, 10, 3

    key = jax.random.PRNGKey(0)
    k_x, k_cw, k_cb, k_fw, k_fb = jax.random.split(key, 5)

    x = jax.random.normal(k_x, (B, C, H, W), dtype=jnp.float32)

    params = {
        "mean": jnp.array([0.485, 0.456, 0.406, 0.5], dtype=jnp.float32),
        "std": jnp.array([0.229, 0.224, 0.225, 0.25], dtype=jnp.float32),
        "conv_w": 0.1 * jax.random.normal(k_cw, (Cout, C, K, K), jnp.float32),
        "conv_b": 0.1 * jax.random.normal(k_cb, (Cout,), jnp.float32),
        "fc_w": 0.1 * jax.random.normal(k_fw, (Cout, Ncls), jnp.float32),
        "fc_b": 0.1 * jax.random.normal(k_fb, (Ncls,), jnp.float32),
    }

    out = jax.block_until_ready(model_wrapper_forward(x, params))
    ref = jax.block_until_ready(reference_forward(x, params))

    assert out.shape == (B, Ncls)
    assert jnp.allclose(out, ref, atol=1e-4, rtol=1e-4), (
        f"mismatch: max abs diff {jnp.max(jnp.abs(out - ref))}")

    # TODO(synk): ModelWrapper.get_features (intermediate-layer taps) is not part
    # of forward() and is not implemented here.
    print("KERNEL_OK")
</pallas_src>

<mosaic_0001>
module attributes {stable_mosaic.version = 11 : i64} {
  func.func @_fused_forward_kernel(%arg0: i32, %arg1: memref<1x4x256xf32, #tpu.memory_space<vmem>>, %arg2: memref<4x1xf32, #tpu.memory_space<vmem>>, %arg3: memref<4x1xf32, #tpu.memory_space<vmem>>, %arg4: memref<9x1x256xf32, #tpu.memory_space<vmem>>, %arg5: memref<9x8x4xf32, #tpu.memory_space<vmem>>, %arg6: memref<8x1xf32, #tpu.memory_space<vmem>>, %arg7: memref<8x128xf32, #tpu.memory_space<vmem>>, %arg8: memref<1x128xf32, #tpu.memory_space<vmem>>, %arg9: memref<1x1x128xf32, #tpu.memory_space<vmem>>) attributes {dimension_semantics = [#tpu.dimension_semantics<parallel>], iteration_bounds = array<i64: 2>, scalar_prefetch = 0 : i64, scratch_operands = 0 : i64, tpu.core_type = #tpu.core_type<tc>, window_params = [{transform_indices = @transform_0, window_bounds = array<i64: 1, 4, 256>}, {pipeline_mode = #tpu.pipeline_mode<synchronous>, transform_indices = @transform_1, window_bounds = array<i64: 4, 1>}, {pipeline_mode = #tpu.pipeline_mode<synchronous>, transform_indices = @transform_2, window_bounds = array<i64: 4, 1>}, {pipeline_mode = #tpu.pipeline_mode<synchronous>, transform_indices = @transform_3, window_bounds = array<i64: 9, 1, 256>}, {pipeline_mode = #tpu.pipeline_mode<synchronous>, transform_indices = @transform_4, window_bounds = array<i64: 9, 8, 4>}, {pipeline_mode = #tpu.pipeline_mode<synchronous>, transform_indices = @transform_5, window_bounds = array<i64: 8, 1>}, {pipeline_mode = #tpu.pipeline_mode<synchronous>, transform_indices = @transform_6, window_bounds = array<i64: 8, 128>}, {pipeline_mode = #tpu.pipeline_mode<synchronous>, transform_indices = @transform_7, window_bounds = array<i64: 1, 128>}, {transform_indices = @transform_8, window_bounds = array<i64: 1, 1, 128>}]} {
    %c0 = arith.constant 0 : index
    %c0_0 = arith.constant 0 : index
    %c0_1 = arith.constant 0 : index
    %0 = vector.load %arg1[%c0, %c0_0, %c0_1] : memref<1x4x256xf32, #tpu.memory_space<vmem>>, vector<1x4x256xf32>
    %1 = vector.shape_cast %0 : vector<1x4x256xf32> to vector<4x256xf32>
    %c0_2 = arith.constant 0 : index
    %c0_3 = arith.constant 0 : index
    %2 = vector.load %arg2[%c0_2, %c0_3] : memref<4x1xf32, #tpu.memory_space<vmem>>, vector<4x1xf32>
    %3 = vector.broadcast %2 : vector<4x1xf32> to vector<4x256xf32>
    %4 = arith.subf %1, %3 : vector<4x256xf32>
    %c0_4 = arith.constant 0 : index
    %c0_5 = arith.constant 0 : index
    %5 = vector.load %arg3[%c0_4, %c0_5] : memref<4x1xf32, #tpu.memory_space<vmem>>, vector<4x1xf32>
    %6 = vector.broadcast %5 : vector<4x1xf32> to vector<4x256xf32>
    %7 = arith.mulf %4, %6 : vector<4x256xf32>
    %cst = arith.constant 0.000000e+00 : f32
    %8 = vector.broadcast %cst : f32 to vector<8x256xf32>
    %9 = vector.extract_strided_slice %7 {offsets = [0, 239], sizes = [4, 17], strides = [1, 1]} : vector<4x256xf32> to vector<4x17xf32>
    %10 = vector.extract_strided_slice %7 {offsets = [0, 0], sizes = [4, 239], strides = [1, 1]} : vector<4x256xf32> to vector<4x239xf32>
    %11 = tpu.concatenate %9, %10 in 1 : vector<4x17xf32>, vector<4x239xf32> -> vector<4x256xf32>
    %c0_6 = arith.constant 0 : index
    %c0_7 = arith.constant 0 : index
    %c0_8 = arith.constant 0 : index
    %12 = vector.load %arg4[%c0_6, %c0_7, %c0_8] : memref<9x1x256xf32, #tpu.memory_space<vmem>>, vector<1x1x256xf32>
    %13 = vector.shape_cast %12 : vector<1x1x256xf32> to vector<1x256xf32>
    %14 = vector.broadcast %13 : vector<1x256xf32> to vector<4x256xf32>
    %15 = arith.mulf %11, %14 : vector<4x256xf32>
    %c0_9 = arith.constant 0 : index
    %c0_10 = arith.constant 0 : index
    %c0_11 = arith.constant 0 : index
    %16 = vector.load %arg5[%c0_9, %c0_10, %c0_11] : memref<9x8x4xf32, #tpu.memory_space<vmem>>, vector<1x8x4xf32>
    %17 = vector.shape_cast %16 : vector<1x8x4xf32> to vector<8x4xf32>
    %cst_12 = arith.constant dense<0.000000e+00> : vector<8x256xf32>
    %18 = tpu.matmul %17, %15, %cst_12 {dimension_numbers = #tpu.dot_dimension_numbers<[1], [0], [0], [1], [0, 0, 1, 1], [], []>, precision = #tpu.contract_precision<fp32>} : vector<8x4xf32>, vector<4x256xf32>, vector<8x256xf32> -> vector<8x256xf32>
    %19 = arith.addf %8, %18 : vector<8x256xf32>
    %20 = vector.extract_strided_slice %7 {offsets = [0, 240], sizes = [4, 16], strides = [1, 1]} : vector<4x256xf32> to vector<4x16xf32>
    %21 = vector.extract_strided_slice %7 {offsets = [0, 0], sizes = [4, 240], strides = [1, 1]} : vector<4x256xf32> to vector<4x240xf32>
    %22 = tpu.concatenate %20, %21 in 1 : vector<4x16xf32>, vector<4x240xf32> -> vector<4x256xf32>
    %c1 = arith.constant 1 : index
    %c0_13 = arith.constant 0 : index
    %c0_14 = arith.constant 0 : index
    %23 = vector.load %arg4[%c1, %c0_13, %c0_14] : memref<9x1x256xf32, #tpu.memory_space<vmem>>, vector<1x1x256xf32>
    %24 = vector.shape_cast %23 : vector<1x1x256xf32> to vector<1x256xf32>
    %25 = vector.broadcast %24 : vector<1x256xf32> to vector<4x256xf32>
    %26 = arith.mulf %22, %25 : vector<4x256xf32>
    %c1_15 = arith.constant 1 : index
    %c0_16 = arith.constant 0 : index
    %c0_17 = arith.constant 0 : index
    %27 = vector.load %arg5[%c1_15, %c0_16, %c0_17] : memref<9x8x4xf32, #tpu.memory_space<vmem>>, vector<1x8x4xf32>
    %28 = vector.shape_cast %27 : vector<1x8x4xf32> to vector<8x4xf32>
    %cst_18 = arith.constant dense<0.000000e+00> : vector<8x256xf32>
    %29 = tpu.matmul %28, %26, %cst_18 {dimension_numbers = #tpu.dot_dimension_numbers<[1], [0], [0], [1], [0, 0, 1, 1], [], []>, precision = #tpu.contract_precision<fp32>} : vector<8x4xf32>, vector<4x256xf32>, vector<8x256xf32> -> vector<8x256xf32>
    %30 = arith.addf %19, %29 : vector<8x256xf32>
    %31 = vector.extract_strided_slice %7 {offsets = [0, 241], sizes = [4, 15], strides = [1, 1]} : vector<4x256xf32> to vector<4x15xf32>
    %32 = vector.extract_strided_slice %7 {offsets = [0, 0], sizes = [4, 241], strides = [1, 1]} : vector<4x256xf32> to vector<4x241xf32>
    %33 = tpu.concatenate %31, %32 in 1 : vector<4x15xf32>, vector<4x241xf32> -> vector<4x256xf32>
    %c2 = arith.constant 2 : index
    %c0_19 = arith.constant 0 : index
    %c0_20 = arith.constant 0 : index
    %34 = vector.load %arg4[%c2, %c0_19, %c0_20] : memref<9x1x256xf32, #tpu.memory_space<vmem>>, vector<1x1x256xf32>
    %35 = vector.shape_cast %34 : vector<1x1x256xf32> to vector<1x256xf32>
    %36 = vector.broadcast %35 : vector<1x256xf32> to vector<4x256xf32>
    %37 = arith.mulf %33, %36 : vector<4x256xf32>
    %c2_21 = arith.constant 2 : index
    %c0_22 = arith.constant 0 : index
    %c0_23 = arith.constant 0 : index
    %38 = vector.load %arg5[%c2_21, %c0_22, %c0_23] : memref<9x8x4xf32, #tpu.memory_space<vmem>>, vector<1x8x4xf32>
    %39 = vector.shape_cast %38 : vector<1x8x4xf32> to vector<8x4xf32>
    %cst_24 = arith.constant dense<0.000000e+00> : vector<8x256xf32>
    %40 = tpu.matmul %39, %37, %cst_24 {dimension_numbers = #tpu.dot_dimension_numbers<[1], [0], [0], [1], [0, 0, 1, 1], [], []>, precision = #tpu.contract_precision<fp32>} : vector<8x4xf32>, vector<4x256xf32>, vector<8x256xf32> -> vector<8x256xf32>
    %41 = arith.addf %30, %40 : vector<8x256xf32>
    %42 = vector.extract_strided_slice %7 {offsets = [0, 255], sizes = [4, 1], strides = [1, 1]} : vector<4x256xf32> to vector<4x1xf32>
    %43 = vector.extract_strided_slice %7 {offsets = [0, 0], sizes = [4, 255], strides = [1, 1]} : vector<4x256xf32> to vector<4x255xf32>
    %44 = tpu.concatenate %42, %43 in 1 : vector<4x1xf32>, vector<4x255xf32> -> vector<4x256xf32>
    %c3 = arith.constant 3 : index
    %c0_25 = arith.constant 0 : index
    %c0_26 = arith.constant 0 : index
    %45 = vector.load %arg4[%c3, %c0_25, %c0_26] : memref<9x1x256xf32, #tpu.memory_space<vmem>>, vector<1x1x256xf32>
    %46 = vector.shape_cast %45 : vector<1x1x256xf32> to vector<1x256xf32>
    %47 = vector.broadcast %46 : vector<1x256xf32> to vector<4x256xf32>
    %48 = arith.mulf %44, %47 : vector<4x256xf32>
    %c3_27 = arith.constant 3 : index
    %c0_28 = arith.constant 0 : index
    %c0_29 = arith.constant 0 : index
    %49 = vector.load %arg5[%c3_27, %c0_28, %c0_29] : memref<9x8x4xf32, #tpu.memory_space<vmem>>, vector<1x8x4xf32>
    %50 = vector.shape_cast %49 : vector<1x8x4xf32> to vector<8x4xf32>
    %cst_30 = arith.constant dense<0.000000e+00> : vector<8x256xf32>
    %51 = tpu.matmul %50, %48, %cst_30 {dimension_numbers = #tpu.dot_dimension_numbers<[1], [0], [0], [1], [0, 0, 1, 1], [], []>, precision = #tpu.contract_precision<fp32>} : vector<8x4xf32>, vector<4x256xf32>, vector<8x256xf32> -> vector<8x256xf32>
    %52 = arith.addf %41, %51 : vector<8x256xf32>
    %c4 = arith.constant 4 : index
    %c0_31 = arith.constant 0 : index
    %c0_32 = arith.constant 0 : index
    %53 = vector.load %arg4[%c4, %c0_31, %c0_32] : memref<9x1x256xf32, #tpu.memory_space<vmem>>, vector<1x1x256xf32>
    %54 = vector.shape_cast %53 : vector<1x1x256xf32> to vector<1x256xf32>
    %55 = vector.broadcast %54 : vector<1x256xf32> to vector<4x256xf32>
    %56 = arith.mulf %7, %55 : vector<4x256xf32>
    %c4_33 = arith.constant 4 : index
    %c0_34 = arith.constant 0 : index
    %c0_35 = arith.constant 0 : index
    %57 = vector.load %arg5[%c4_33, %c0_34, %c0_35] : memref<9x8x4xf32, #tpu.memory_space<vmem>>, vector<1x8x4xf32>
    %58 = vector.shape_cast %57 : vector<1x8x4xf32> to vector<8x4xf32>
    %cst_36 = arith.constant dense<0.000000e+00> : vector<8x256xf32>
    %59 = tpu.matmul %58, %56, %cst_36 {dimension_numbers = #tpu.dot_dimension_numbers<[1], [0], [0], [1], [0, 0, 1, 1], [], []>, precision = #tpu.contract_precision<fp32>} : vector<8x4xf32>, vector<4x256xf32>, vector<8x256xf32> -> vector<8x256xf32>
    %60 = arith.addf %52, %59 : vector<8x256xf32>
    %61 = vector.extract_strided_slice %7 {offsets = [0, 1], sizes = [4, 255], strides = [1, 1]} : vector<4x256xf32> to vector<4x255xf32>
    %62 = vector.extract_strided_slice %7 {offsets = [0, 0], sizes = [4, 1], strides = [1, 1]} : vector<4x256xf32> to vector<4x1xf32>
    %63 = tpu.concatenate %61, %62 in 1 : vector<4x255xf32>, vector<4x1xf32> -> vector<4x256xf32>
    %c5 = arith.constant 5 : index
    %c0_37 = arith.constant 0 : index
    %c0_38 = arith.constant 0 : index
    %64 = vector.load %arg4[%c5, %c0_37, %c0_38] : memref<9x1x256xf32, #tpu.memory_space<vmem>>, vector<1x1x256xf32>
    %65 = vector.shape_cast %64 : vector<1x1x256xf32> to vector<1x256xf32>
    %66 = vector.broadcast %65 : vector<1x256xf32> to vector<4x256xf32>
    %67 = arith.mulf %63, %66 : vector<4x256xf32>
    %c5_39 = arith.constant 5 : index
    %c0_40 = arith.constant 0 : index
    %c0_41 = arith.constant 0 : index
    %68 = vector.load %arg5[%c5_39, %c0_40, %c0_41] : memref<9x8x4xf32, #tpu.memory_space<vmem>>, vector<1x8x4xf32>
    %69 = vector.shape_cast %68 : vector<1x8x4xf32> to vector<8x4xf32>
    %cst_42 = arith.constant dense<0.000000e+00> : vector<8x256xf32>
    %70 = tpu.matmul %69, %67, %cst_42 {dimension_numbers = #tpu.dot_dimension_numbers<[1], [0], [0], [1], [0, 0, 1, 1], [], []>, precision = #tpu.contract_precision<fp32>} : vector<8x4xf32>, vector<4x256xf32>, vector<8x256xf32> -> vector<8x256xf32>
    %71 = arith.addf %60, %70 : vector<8x256xf32>
    %72 = vector.extract_strided_slice %7 {offsets = [0, 15], sizes = [4, 241], strides = [1, 1]} : vector<4x256xf32> to vector<4x241xf32>
    %73 = vector.extract_strided_slice %7 {offsets = [0, 0], sizes = [4, 15], strides = [1, 1]} : vector<4x256xf32> to vector<4x15xf32>
    %74 = tpu.concatenate %72, %73 in 1 : vector<4x241xf32>, vector<4x15xf32> -> vector<4x256xf32>
    %c6 = arith.constant 6 : index
    %c0_43 = arith.constant 0 : index
    %c0_44 = arith.constant 0 : index
    %75 = vector.load %arg4[%c6, %c0_43, %c0_44] : memref<9x1x256xf32, #tpu.memory_space<vmem>>, vector<1x1x256xf32>
    %76 = vector.shape_cast %75 : vector<1x1x256xf32> to vector<1x256xf32>
    %77 = vector.broadcast %76 : vector<1x256xf32> to vector<4x256xf32>
    %78 = arith.mulf %74, %77 : vector<4x256xf32>
    %c6_45 = arith.constant 6 : index
    %c0_46 = arith.constant 0 : index
    %c0_47 = arith.constant 0 : index
    %79 = vector.load %arg5[%c6_45, %c0_46, %c0_47] : memref<9x8x4xf32, #tpu.memory_space<vmem>>, vector<1x8x4xf32>
    %80 = vector.shape_cast %79 : vector<1x8x4xf32> to vector<8x4xf32>
    %cst_48 = arith.constant dense<0.000000e+00> : vector<8x256xf32>
    %81 = tpu.matmul %80, %78, %cst_48 {dimension_numbers = #tpu.dot_dimension_numbers<[1], [0], [0], [1], [0, 0, 1, 1], [], []>, precision = #tpu.contract_precision<fp32>} : vector<8x4xf32>, vector<4x256xf32>, vector<8x256xf32> -> vector<8x256xf32>
    %82 = arith.addf %71, %81 : vector<8x256xf32>
    %83 = vector.extract_strided_slice %7 {offsets = [0, 16], sizes = [4, 240], strides = [1, 1]} : vector<4x256xf32> to vector<4x240xf32>
    %84 = vector.extract_strided_slice %7 {offsets = [0, 0], sizes = [4, 16], strides = [1, 1]} : vector<4x256xf32> to vector<4x16xf32>
    %85 = tpu.concatenate %83, %84 in 1 : vector<4x240xf32>, vector<4x16xf32> -> vector<4x256xf32>
    %c7 = arith.constant 7 : index
    %c0_49 = arith.constant 0 : index
    %c0_50 = arith.constant 0 : index
    %86 = vector.load %arg4[%c7, %c0_49, %c0_50] : memref<9x1x256xf32, #tpu.memory_space<vmem>>, vector<1x1x256xf32>
    %87 = vector.shape_cast %86 : vector<1x1x256xf32> to vector<1x256xf32>
    %88 = vector.broadcast %87 : vector<1x256xf32> to vector<4x256xf32>
    %89 = arith.mulf %85, %88 : vector<4x256xf32>
    %c7_51 = arith.constant 7 : index
    %c0_52 = arith.constant 0 : index
    %c0_53 = arith.constant 0 : index
    %90 = vector.load %arg5[%c7_51, %c0_52, %c0_53] : memref<9x8x4xf32, #tpu.memory_space<vmem>>, vector<1x8x4xf32>
    %91 = vector.shape_cast %90 : vector<1x8x4xf32> to vector<8x4xf32>
    %cst_54 = arith.constant dense<0.000000e+00> : vector<8x256xf32>
    %92 = tpu.matmul %91, %89, %cst_54 {dimension_numbers = #tpu.dot_dimension_numbers<[1], [0], [0], [1], [0, 0, 1, 1], [], []>, precision = #tpu.contract_precision<fp32>} : vector<8x4xf32>, vector<4x256xf32>, vector<8x256xf32> -> vector<8x256xf32>
    %93 = arith.addf %82, %92 : vector<8x256xf32>
    %94 = vector.extract_strided_slice %7 {offsets = [0, 17], sizes = [4, 239], strides = [1, 1]} : vector<4x256xf32> to vector<4x239xf32>
    %95 = vector.extract_strided_slice %7 {offsets = [0, 0], sizes = [4, 17], strides = [1, 1]} : vector<4x256xf32> to vector<4x17xf32>
    %96 = tpu.concatenate %94, %95 in 1 : vector<4x239xf32>, vector<4x17xf32> -> vector<4x256xf32>
    %c8 = arith.constant 8 : index
    %c0_55 = arith.constant 0 : index
    %c0_56 = arith.constant 0 : index
    %97 = vector.load %arg4[%c8, %c0_55, %c0_56] : memref<9x1x256xf32, #tpu.memory_space<vmem>>, vector<1x1x256xf32>
    %98 = vector.shape_cast %97 : vector<1x1x256xf32> to vector<1x256xf32>
    %99 = vector.broadcast %98 : vector<1x256xf32> to vector<4x256xf32>
    %100 = arith.mulf %96, %99 : vector<4x256xf32>
    %c8_57 = arith.constant 8 : index
    %c0_58 = arith.constant 0 : index
    %c0_59 = arith.constant 0 : index
    %101 = vector.load %arg5[%c8_57, %c0_58, %c0_59] : memref<9x8x4xf32, #tpu.memory_space<vmem>>, vector<1x8x4xf32>
    %102 = vector.shape_cast %101 : vector<1x8x4xf32> to vector<8x4xf32>
    %cst_60 = arith.constant dense<0.000000e+00> : vector<8x256xf32>
    %103 = tpu.matmul %102, %100, %cst_60 {dimension_numbers = #tpu.dot_dimension_numbers<[1], [0], [0], [1], [0, 0, 1, 1], [], []>, precision = #tpu.contract_precision<fp32>} : vector<8x4xf32>, vector<4x256xf32>, vector<8x256xf32> -> vector<8x256xf32>
    %104 = arith.addf %93, %103 : vector<8x256xf32>
    %c0_61 = arith.constant 0 : index
    %c0_62 = arith.constant 0 : index
    %105 = vector.load %arg6[%c0_61, %c0_62] : memref<8x1xf32, #tpu.memory_space<vmem>>, vector<8x1xf32>
    %106 = vector.broadcast %105 : vector<8x1xf32> to vector<8x256xf32>
    %107 = arith.addf %104, %106 : vector<8x256xf32>
    %cst_63 = arith.constant 0.000000e+00 : f32
    %108 = vector.broadcast %cst_63 : f32 to vector<8x256xf32>
    %109 = arith.maximumf %107, %108 : vector<8x256xf32>
    %cst_64 = arith.constant dense<0.000000e+00> : vector<8xf32>
    %110 = vector.multi_reduction <add>, %109, %cst_64 [1] : vector<8x256xf32> to vector<8xf32>
    %111 = vector.shape_cast %110 : vector<8xf32> to vector<8x1xf32>
    %cst_65 = arith.constant 2.560000e+02 : f32
    %112 = vector.broadcast %cst_65 : f32 to vector<8x1xf32>
    %113 = arith.divf %111, %112 : vector<8x1xf32>
    %c0_66 = arith.constant 0 : index
    %c0_67 = arith.constant 0 : index
    %114 = vector.load %arg7[%c0_66, %c0_67] : memref<8x128xf32, #tpu.memory_space<vmem>>, vector<8x128xf32>
    %115 = vector.broadcast %113 : vector<8x1xf32> to vector<8x128xf32>
    %116 = arith.mulf %115, %114 : vector<8x128xf32>
    %cst_68 = arith.constant dense<0.000000e+00> : vector<128xf32>
    %117 = vector.multi_reduction <add>, %116, %cst_68 [0] : vector<8x128xf32> to vector<128xf32>
    %118 = vector.shape_cast %117 : vector<128xf32> to vector<1x128xf32>
    %c0_69 = arith.constant 0 : index
    %c0_70 = arith.constant 0 : index
    %119 = vector.load %arg8[%c0_69, %c0_70] : memref<1x128xf32, #tpu.memory_space<vmem>>, vector<1x128xf32>
    %120 = arith.addf %118, %119 : vector<1x128xf32>
    %c0_71 = arith.constant 0 : index
    %c0_72 = arith.constant 0 : index
    %c0_73 = arith.constant 0 : index
    %121 = vector.load %arg9[%c0_71, %c0_72, %c0_73] : memref<1x1x128xf32, #tpu.memory_space<vmem>>, vector<1x1x128xf32>
    %122 = vector.shape_cast %121 : vector<1x1x128xf32> to vector<1x128xf32>
    %123 = vector.shape_cast %120 : vector<1x128xf32> to vector<1x1x128xf32>
    tpu.vector_store %arg9[%c0_71, %c0_72, %c0_73], %123 {strides = array<i32>} : memref<1x1x128xf32, #tpu.memory_space<vmem>>, vector<1x1x128xf32>,
    return
  }
  func.func @transform_0(%arg0: i32) -> (i32, i32, i32) {
    %c0_i32 = arith.constant 0 : i32
    %c0_i32_0 = arith.constant 0 : i32
    %c0_i32_1 = arith.constant 0 : i32
    return %arg0, %c0_i32, %c0_i32_0 : i32, i32, i32
  }
  func.func @transform_1(%arg0: i32) -> (i32, i32) {
    %c0_i32 = arith.constant 0 : i32
    %c0_i32_0 = arith.constant 0 : i32
    %c0_i32_1 = arith.constant 0 : i32
    return %c0_i32, %c0_i32_0 : i32, i32
  }
  func.func @transform_2(%arg0: i32) -> (i32, i32) {
    %c0_i32 = arith.constant 0 : i32
    %c0_i32_0 = arith.constant 0 : i32
    %c0_i32_1 = arith.constant 0 : i32
    return %c0_i32, %c0_i32_0 : i32, i32
  }
  func.func @transform_3(%arg0: i32) -> (i32, i32, i32) {
    %c0_i32 = arith.constant 0 : i32
    %c0_i32_0 = arith.constant 0 : i32
    %c0_i32_1 = arith.constant 0 : i32
    %c0_i32_2 = arith.constant 0 : i32
    return %c0_i32, %c0_i32_0, %c0_i32_1 : i32, i32, i32
  }
  func.func @transform_4(%arg0: i32) -> (i32, i32, i32) {
    %c0_i32 = arith.constant 0 : i32
    %c0_i32_0 = arith.constant 0 : i32
    %c0_i32_1 = arith.constant 0 : i32
    %c0_i32_2 = arith.constant 0 : i32
    return %c0_i32, %c0_i32_0, %c0_i32_1 : i32, i32, i32
  }
  func.func @transform_5(%arg0: i32) -> (i32, i32) {
    %c0_i32 = arith.constant 0 : i32
    %c0_i32_0 = arith.constant 0 : i32
    %c0_i32_1 = arith.constant 0 : i32
    return %c0_i32, %c0_i32_0 : i32, i32
  }
  func.func @transform_6(%arg0: i32) -> (i32, i32) {
    %c0_i32 = arith.constant 0 : i32
    %c0_i32_0 = arith.constant 0 : i32
    %c0_i32_1 = arith.constant 0 : i32
    return %c0_i32, %c0_i32_0 : i32, i32
  }
  func.func @transform_7(%arg0: i32) -> (i32, i32) {
    %c0_i32 = arith.constant 0 : i32
    %c0_i32_0 = arith.constant 0 : i32
    %c0_i32_1 = arith.constant 0 : i32
    return %c0_i32, %c0_i32_0 : i32, i32
  }
  func.func @transform_8(%arg0: i32) -> (i32, i32, i32) {
    %c0_i32 = arith.constant 0 : i32
    %c0_i32_0 = arith.constant 0 : i32
    %c0_i32_1 = arith.constant 0 : i32
    return %arg0, %c0_i32, %c0_i32_0 : i32, i32, i32
  }
}

</mosaic_0001>

<llo_original>
// kernel: tpu_custom_call.1
$region0: #{tpu_custom_call.1}
  #allocation0 [shape = 'u32[]', space=smem, size = 0x4, offset = 0x4, fixed_abs, tag = 'smem constant byte address 0x4 - core index']
  #allocation1 [shape = 'u32[72,128]{1,0:T(1,128)}', space=vmem, size = 0x9000, scoped, tag = 'internal scratch']
  %s0 = inlined_call_operand.vmem [shape: f32[2,4,256], index: 0, kind: input, shape index: {}]
  %s1 = inlined_call_operand.vmem [shape: f32[4,1], index: 1, kind: input, shape index: {}]
  %s2 = inlined_call_operand.vmem [shape: f32[4,1], index: 2, kind: input, shape index: {}]
  %s3 = inlined_call_operand.vmem [shape: f32[9,1,256], index: 3, kind: input, shape index: {}]
  %s4 = inlined_call_operand.vmem [shape: f32[9,8,4], index: 4, kind: input, shape index: {}]
  %s5 = inlined_call_operand.vmem [shape: f32[8,1], index: 5, kind: input, shape index: {}]
  %s6 = inlined_call_operand.vmem [shape: f32[8,128], index: 6, kind: input, shape index: {}]
  %s7 = inlined_call_operand.vmem [shape: f32[1,128], index: 7, kind: input, shape index: {}]
  %s8 = inlined_call_operand.hbm [shape: f32[2,1,128], index: 8, kind: output, shape index: {}]
  %s9 = sld [smem:[#allocation0]]
  $region65: #{tpu_custom_call.1} parent=0
    _
  %s11 = ssub.s32 1, %s9
  %s12 = scalar_select 0, %s11, %s9
  $region1: #{tpu_custom_call.1} parent=0
    #allocation2 [shape = 'u8[1024]{0}', space=vmem, size = 0x400, scoped, tag = 'output window, operand 0']
    #allocation3 [shape = 's32[2]{0}', space=sflag, size = 0x8, scoped, tag = 'scoped memory for tpu_custom_call.1']
    %13 = vsyncpa [#allocation3], 0
    %s14 = scalar_lea.sflag [#allocation3], 1
    %15 = vsyncpa %s14, 0
    loop: start=0, step=1, limit=4
    $region2: #{tpu_custom_call.1} parent=1 // loop_pre_header
      _
    $region3: #{tpu_custom_call.1} parent=1 // loop_header
      %s17 = sphi 0, %s21
      %p18 = scmp.ge.s32.totalorder %s17, 4
      %s27 = sphi 0, %s29
      %s30 = sphi 0, %s27
      %s31 = sphi 0, %s30
      %s47 = sphi 0, %s31
      %s51 = sphi 0, %s51
      %s53 = sphi 0, %s51
      %s54 = sphi 0, %s53
      %s68 = sphi 0, %s54
      %s72 = sphi 0, %s72
      %s74 = sphi 0, %s72
      %s75 = sphi 0, %s74
      %s89 = sphi 0, %s75
      %s93 = sphi 0, %s93
      %s95 = sphi 0, %s93
      %s96 = sphi 0, %s95
      %s110 = sphi 0, %s96
      %s114 = sphi 0, %s114
      %s116 = sphi 0, %s114
      %s117 = sphi 0, %s116
      %s131 = sphi 0, %s117
      %s135 = sphi 0, %s135
      %s137 = sphi 0, %s135
      %s138 = sphi 0, %s137
      %s152 = sphi 0, %s138
      %s156 = sphi 0, %s156
      %s158 = sphi 0, %s156
      %s159 = sphi 0, %s158
      %s173 = sphi 0, %s159
      %s177 = sphi 0, %s177
      %s179 = sphi 0, %s177
      %s180 = sphi 0, %s179
      %s194 = sphi 0, %s180
      %s200 = sphi 0, %s202
      %s203 = sphi 0, %s200
      %s204 = sphi 0, %s203
      %s220 = sphi 0, %s204
    $region4: #{tpu_custom_call.1} parent=1 // loop_header_branch
      %20 = sbr.rel (%p18) target = $region8
    $region5: #{tpu_custom_call.1} parent=1 // loop_body
      %s22 = ssub.s32 %s17, 1
      %s23 = ssub.s32 %s17, 2
      %s24 = sadd.s32 %s17, 1
      %s25 = ssub.s32 %s17, %s24
      %p26 = scmp.eq.s32.totalorder %s25, 0
      %s28 = sadd.s32 %s27, 1
      %s29 = scalar_select %p26, %s27, %s28
      %p32 = pneg %p26
      %p33 = scmp.eq.s32.totalorder %s17, 1
      %p34 = por %p32, %p33
      %p35 = scmp.ne.s32.totalorder %s27, %s30
      %p36 = scmp.eq.s32.totalorder %s17, 0
      %p37 = por %p35, %p36
      %p38 = scmp.ne.s32.totalorder %s27, %s30
      %p39 = scmp.eq.s32.totalorder %s22, 1
      %p40 = por %p38, %p39
      %p41 = scmp.ne.s32.totalorder %s30, %s31
      %p42 = scmp.eq.s32.totalorder %s22, 0
      %p43 = por %p41, %p42
      %p44 = scmp.ne.s32.totalorder %s30, %s31
      %p45 = scmp.eq.s32.totalorder %s23, 1
      %p46 = por %p44, %p45
      %p48 = scmp.ne.s32.totalorder %s31, %s47
      %p49 = scmp.eq.s32.totalorder %s23, 0
      %p50 = por %p48, %p49
      %s52 = sadd.s32 %s51, 1
      %p55 = scmp.eq.s32.totalorder %s17, 1
      %p56 = scmp.ne.s32.totalorder %s51, %s53
      %p57 = scmp.eq.s32.totalorder %s17, 0
      %p58 = por %p56, %p57
      %p59 = scmp.ne.s32.totalorder %s51, %s53
      %p60 = scmp.eq.s32.totalorder %s22, 1
      %p61 = por %p59, %p60
      %p62 = scmp.ne.s32.totalorder %s53, %s54
      %p63 = scmp.eq.s32.totalorder %s22, 0
      %p64 = por %p62, %p63
      %p65 = scmp.ne.s32.totalorder %s53, %s54
      %p66 = scmp.eq.s32.totalorder %s23, 1
      %p67 = por %p65, %p66
      %p69 = scmp.ne.s32.totalorder %s54, %s68
      %p70 = scmp.eq.s32.totalorder %s23, 0
      %p71 = por %p69, %p70
      %s73 = sadd.s32 %s72, 1
      %p76 = scmp.eq.s32.totalorder %s17, 1
      %p77 = scmp.ne.s32.totalorder %s72, %s74
      %p78 = scmp.eq.s32.totalorder %s17, 0
      %p79 = por %p77, %p78
      %p80 = scmp.ne.s32.totalorder %s72, %s74
      %p81 = scmp.eq.s32.totalorder %s22, 1
      %p82 = por %p80, %p81
      %p83 = scmp.ne.s32.totalorder %s74, %s75
      %p84 = scmp.eq.s32.totalorder %s22, 0
      %p85 = por %p83, %p84
      %p86 = scmp.ne.s32.totalorder %s74, %s75
      %p87 = scmp.eq.s32.totalorder %s23, 1
      %p88 = por %p86, %p87
      %p90 = scmp.ne.s32.totalorder %s75, %s89
      %p91 = scmp.eq.s32.totalorder %s23, 0
      %p92 = por %p90, %p91
      %s94 = sadd.s32 %s93, 1
      %p97 = scmp.eq.s32.totalorder %s17, 1
      %p98 = scmp.ne.s32.totalorder %s93, %s95
      %p99 = scmp.eq.s32.totalorder %s17, 0
      %p100 = por %p98, %p99
      %p101 = scmp.ne.s32.totalorder %s93, %s95
      %p102 = scmp.eq.s32.totalorder %s22, 1
      %p103 = por %p101, %p102
      %p104 = scmp.ne.s32.totalorder %s95, %s96
      %p105 = scmp.eq.s32.totalorder %s22, 0
      %p106 = por %p104, %p105
      %p107 = scmp.ne.s32.totalorder %s95, %s96
      %p108 = scmp.eq.s32.totalorder %s23, 1
      %p109 = por %p107, %p108
      %p111 = scmp.ne.s32.totalorder %s96, %s110
      %p112 = scmp.eq.s32.totalorder %s23, 0
      %p113 = por %p111, %p112
      %s115 = sadd.s32 %s114, 1
      %p118 = scmp.eq.s32.totalorder %s17, 1
      %p119 = scmp.ne.s32.totalorder %s114, %s116
      %p120 = scmp.eq.s32.totalorder %s17, 0
      %p121 = por %p119, %p120
      %p122 = scmp.ne.s32.totalorder %s114, %s116
      %p123 = scmp.eq.s32.totalorder %s22, 1
      %p124 = por %p122, %p123
      %p125 = scmp.ne.s32.totalorder %s116, %s117
      %p126 = scmp.eq.s32.totalorder %s22, 0
      %p127 = por %p125, %p126
      %p128 = scmp.ne.s32.totalorder %s116, %s117
      %p129 = scmp.eq.s32.totalorder %s23, 1
      %p130 = por %p128, %p129
      %p132 = scmp.ne.s32.totalorder %s117, %s131
      %p133 = scmp.eq.s32.totalorder %s23, 0
      %p134 = por %p132, %p133
      %s136 = sadd.s32 %s135, 1
      %p139 = scmp.eq.s32.totalorder %s17, 1
      %p140 = scmp.ne.s32.totalorder %s135, %s137
      %p141 = scmp.eq.s32.totalorder %s17, 0
      %p142 = por %p140, %p141
      %p143 = scmp.ne.s32.totalorder %s135, %s137
      %p144 = scmp.eq.s32.totalorder %s22, 1
      %p145 = por %p143, %p144
      %p146 = scmp.ne.s32.totalorder %s137, %s138
      %p147 = scmp.eq.s32.totalorder %s22, 0
      %p148 = por %p146, %p147
      %p149 = scmp.ne.s32.totalorder %s137, %s138
      %p150 = scmp.eq.s32.totalorder %s23, 1
      %p151 = por %p149, %p150
      %p153 = scmp.ne.s32.totalorder %s138, %s152
      %p154 = scmp.eq.s32.totalorder %s23, 0
      %p155 = por %p153, %p154
      %s157 = sadd.s32 %s156, 1
      %p160 = scmp.eq.s32.totalorder %s17, 1
      %p161 = scmp.ne.s32.totalorder %s156, %s158
      %p162 = scmp.eq.s32.totalorder %s17, 0
      %p163 = por %p161, %p162
      %p164 = scmp.ne.s32.totalorder %s156, %s158
      %p165 = scmp.eq.s32.totalorder %s22, 1
      %p166 = por %p164, %p165
      %p167 = scmp.ne.s32.totalorder %s158, %s159
      %p168 = scmp.eq.s32.totalorder %s22, 0
      %p169 = por %p167, %p168
      %p170 = scmp.ne.s32.totalorder %s158, %s159
      %p171 = scmp.eq.s32.totalorder %s23, 1
      %p172 = por %p170, %p171
      %p174 = scmp.ne.s32.totalorder %s159, %s173
      %p175 = scmp.eq.s32.totalorder %s23, 0
      %p176 = por %p174, %p175
      %s178 = sadd.s32 %s177, 1
      %p181 = scmp.eq.s32.totalorder %s17, 1
      %p182 = scmp.ne.s32.totalorder %s177, %s179
      %p183 = scmp.eq.s32.totalorder %s17, 0
      %p184 = por %p182, %p183
      %p185 = scmp.ne.s32.totalorder %s177, %s179
      %p186 = scmp.eq.s32.totalorder %s22, 1
      %p187 = por %p185, %p186
      %p188 = scmp.ne.s32.totalorder %s179, %s180
      %p189 = scmp.eq.s32.totalorder %s22, 0
      %p190 = por %p188, %p189
      %p191 = scmp.ne.s32.totalorder %s179, %s180
      %p192 = scmp.eq.s32.totalorder %s23, 1
      %p193 = por %p191, %p192
      %p195 = scmp.ne.s32.totalorder %s180, %s194
      %p196 = scmp.eq.s32.totalorder %s23, 0
      %p197 = por %p195, %p196
      %s198 = ssub.s32 %s17, %s24
      %p199 = scmp.eq.s32.totalorder %s198, 0
      %s201 = sadd.s32 %s200, 1
      %s202 = scalar_select %p199, %s200, %s201
      %p205 = pneg %p199
      %p206 = scmp.eq.s32.totalorder %s17, 1
      %p207 = por %p205, %p206
      %p208 = scmp.ne.s32.totalorder %s200, %s203
      %p209 = scmp.eq.s32.totalorder %s17, 0
      %p210 = por %p208, %p209
      %p211 = scmp.ne.s32.totalorder %s200, %s203
      %p212 = scmp.eq.s32.totalorder %s22, 1
      %p213 = por %p211, %p212
      %p214 = scmp.ne.s32.totalorder %s203, %s204
      %p215 = scmp.eq.s32.totalorder %s22, 0
      %p216 = por %p214, %p215
      %p217 = scmp.ne.s32.totalorder %s203, %s204
      %p218 = scmp.eq.s32.totalorder %s23, 1
      %p219 = por %p217, %p218
      %p221 = scmp.ne.s32.totalorder %s204, %s220
      %p222 = scmp.eq.s32.totalorder %s23, 0
      %p223 = por %p221, %p222
      %p224 = scmp.le.s32.totalorder 1, %s17
      %p225 = scmp.lt.s32.totalorder %s17, 3
      %p226 = pnand %p224, %p225
      %p227 = pneg %p226
      // Predicated region
      $region9: #{tpu_custom_call.1} parent=5 // pred_check
        _
      $region10: #{tpu_custom_call.1} parent=5 // pred_check_branch
        %229 = sbr.rel (%p226) target = $region12
      $region11: #{tpu_custom_call.1} parent=5 // pred_region
        %s230 = ssub.s32 %s17, 1
        // Predicated region
        $region13: #{tpu_custom_call.1} parent=11 // pred_check
          %p231 = pneg %p64
        $region14: #{tpu_custom_call.1} parent=11 // pred_check_branch
          %233 = sbr.rel (%p231) target = $region16
        $region15: #{tpu_custom_call.1} parent=11 // pred_region
          _
        $region16: #{tpu_custom_call.1} parent=11 // pred_fallthru
          _
        // Predicated region
        $region17: #{tpu_custom_call.1} parent=11 // pred_check
          %p234 = pneg %p85
        $region18: #{tpu_custom_call.1} parent=11 // pred_check_branch
          %236 = sbr.rel (%p234) target = $region20
        $region19: #{tpu_custom_call.1} parent=11 // pred_region
          _
        $region20: #{tpu_custom_call.1} parent=11 // pred_fallthru
          _
        // Predicated region
        $region21: #{tpu_custom_call.1} parent=11 // pred_check
          %p237 = pneg %p106
        $region22: #{tpu_custom_call.1} parent=11 // pred_check_branch
          %239 = sbr.rel (%p237) target = $region24
        $region23: #{tpu_custom_call.1} parent=11 // pred_region
          _
        $region24: #{tpu_custom_call.1} parent=11 // pred_fallthru
          _
        // Predicated region
        $region25: #{tpu_custom_call.1} parent=11 // pred_check
          %p240 = pneg %p127
        $region26: #{tpu_custom_call.1} parent=11 // pred_check_branch
          %242 = sbr.rel (%p240) target = $region28
        $region27: #{tpu_custom_call.1} parent=11 // pred_region
          _
        $region28: #{tpu_custom_call.1} parent=11 // pred_fallthru
          _
        // Predicated region
        $region29: #{tpu_custom_call.1} parent=11 // pred_check
          %p243 = pneg %p148
        $region30: #{tpu_custom_call.1} parent=11 // pred_check_branch
          %245 = sbr.rel (%p243) target = $region32
        $region31: #{tpu_custom_call.1} parent=11 // pred_region
          _
        $region32: #{tpu_custom_call.1} parent=11 // pred_fallthru
          _
        // Predicated region
        $region33: #{tpu_custom_call.1} parent=11 // pred_check
          %p246 = pneg %p169
        $region34: #{tpu_custom_call.1} parent=11 // pred_check_branch
          %248 = sbr.rel (%p246) target = $region36
        $region35: #{tpu_custom_call.1} parent=11 // pred_region
          _
        $region36: #{tpu_custom_call.1} parent=11 // pred_fallthru
          _
        // Predicated region
        $region37: #{tpu_custom_call.1} parent=11 // pred_check
          %p249 = pneg %p190
        $region38: #{tpu_custom_call.1} parent=11 // pred_check_branch
          %251 = sbr.rel (%p249) target = $region40
        $region39: #{tpu_custom_call.1} parent=11 // pred_region
          _
        $region40: #{tpu_custom_call.1} parent=11 // pred_fallthru
          _
      $region12: #{tpu_custom_call.1} parent=5 // pred_fallthru
        _
      %p252 = scmp.lt.s32.totalorder %s17, 2
      // Predicated region
      $region41: #{tpu_custom_call.1} parent=5 // pred_check
        %p253 = pneg %p252
      $region42: #{tpu_custom_call.1} parent=5 // pred_check_branch
        %255 = sbr.rel (%p253) target = $region44
      $region43: #{tpu_custom_call.1} parent=5 // pred_region
        // Predicated region
        $region45: #{tpu_custom_call.1} parent=43 // pred_check
          %p256 = pneg %p37
        $region46: #{tpu_custom_call.1} parent=43 // pred_check_branch
          %258 = sbr.rel (%p256) target = $region48
        $region47: #{tpu_custom_call.1} parent=43 // pred_region
          %p259 = scmp.lt.s32.totalorder %s17, 1
          %s260 = scalar_select %p259, %s17, 1
          %s261 = smul.addr %s260, 2
          %s262 = smul.addr %s261, 4
          %s263 = scalar_lea.vmem %s0, %s262
        $region48: #{tpu_custom_call.1} parent=43 // pred_fallthru
          _
      $region44: #{tpu_custom_call.1} parent=5 // pred_fallthru
        _
      %p264 = scmp.le.s32.totalorder 1, %s17
      %p265 = scmp.lt.s32.totalorder %s17, 3
      %p266 = pnand %p264, %p265
      %p267 = pneg %p266
      // Predicated region
      $region49: #{tpu_custom_call.1} parent=5 // pred_check
        _
      $region50: #{tpu_custom_call.1} parent=5 // pred_check_branch
        %269 = sbr.rel (%p266) target = $region52
      $region51: #{tpu_custom_call.1} parent=5 // pred_region
        %s270 = ssub.s32 %s17, 1
        %p271 = scmp.lt.s32.totalorder %s22, 1
        %s272 = scalar_select %p271, %s22, 1
        %s273 = smul.addr %s272, 2
        %s274 = smul.addr %s273, 4
        %s275 = scalar_lea.vmem %s0, %s274
        %p276 = pneg %p43
        %p277 = pneg %p40
        %p278 = pneg %p64
        %p279 = pneg %p61
        %p280 = pneg %p85
        %p281 = pneg %p82
        %p282 = pneg %p106
        %p283 = pneg %p103
        %p284 = pneg %p127
        %p285 = pneg %p124
        %p286 = pneg %p148
        %p287 = pneg %p145
        %p288 = pneg %p169
        %p289 = pneg %p166
        %p290 = pneg %p190
        %p291 = pneg %p187
        %p292 = pneg %p216
        %p293 = pneg %p213
        %s294 = sand.u32 %s203, 1
        %s295 = scalar_lea.sflag [#allocation3], %s294
        %s296 = sand.u32 %s203, 1
        %s297 = scalar_lea.vmem [#allocation2], %s296
        %p298 = scmp.lt.s32.totalorder %s22, 1
        %s299 = scalar_select %p298, %s22, 1
        %s300 = smul.addr %s299, 2
        %s301 = smul.addr %s300, 4
        %s302 = scalar_lea.vmem %s0, %s301
        %v303 = vld [vmem:[%s302] sm:$0xff]
        %v304 = vld [vmem:[%s1] sm:$0xf]
        %306 = vset.pattern.permute.xlu0 0
        %307 = vperm.xlu0 %306, %v304
        %v308 = vpop.permute.xlu0 %307
        %v310 = vunpack.c.l.s4 839922192
        %v311 = vunpack.c.0.s8 %v310
        %v312 = vperm.slane %v308, %v311
        %v314 = vsub.f32 %v303, %v312
        %v315 = vld [vmem:[%s2] sm:$0xf]
        %317 = vset.pattern.permute.xlu0 0
        %318 = vperm.xlu0 %317, %v315
        %v319 = vpop.permute.xlu0 %318
        %v321 = vunpack.c.l.s4 839922192
        %v322 = vunpack.c.0.s8 %v321
        %v323 = vperm.slane %v319, %v322
        %v325 = vmul.f32 %v314, %v323
        %327 = vst [vmem:[#allocation1] ss:$2 sm:$0xff] %v325
        %v328 = vld.sshfl [vmem:[#allocation1 + $0x8] sm:$0xff pattern:$0x75316420]
        %329 = vrot.lane.b32.xlu0 %v328, 17
        %v330 = vpop.permute.xlu0 %329
        %332 = vst [vmem:[#allocation1] ss:$2 sm:$0xff] %v325
        %v333 = vld.sshfl [vmem:[#allocation1] sm:$0xff pattern:$0x75316420]
        %v334 = vld.sshfl [vmem:[#allocation1 + $0x8] sm:$0xff pattern:$0x75316420]
        %335 = vrot.lane.b32.xlu0 %v333, 17
        %v336 = vpop.permute.xlu0 %335
        %337 = vrot.lane.b32.xlu0 %v334, 17
        %v338 = vpop.permute.xlu0 %337
        %vm339 = vcmask 138240
        %v340 = vsel %vm339, %v336, %v338
        %v343 = vsel %vm339, %v330, %v336
        %v344 = vld [vmem:[%s3] sm:$0x3]
        %v346 = vperm.slane %v344, 0
        %v347 = vperm.slane %v344, 1
        %v350 = vmul.f32 %v343, %v346
        %v351 = vmul.f32 %v340, %v347
        %v352 = vld [vmem:[%s4] sm:$0xff]
        %353 = vst [vmem:[#allocation1] ss:$2 sm:$0xff] %v325
        %v354 = vld.sshfl [vmem:[#allocation1 + $0x8] sm:$0xff pattern:$0x75316420]
        %355 = vrot.lane.b32.xlu0 %v354, 16
        %v356 = vpop.permute.xlu0 %355
        %358 = vst [vmem:[#allocation1] ss:$2 sm:$0xff] %v325
        %v359 = vld.sshfl [vmem:[#allocation1] sm:$0xff pattern:$0x75316420]
        %v360 = vld.sshfl [vmem:[#allocation1 + $0x8] sm:$0xff pattern:$0x75316420]
        %361 = vrot.lane.b32.xlu0 %v359, 16
        %v362 = vpop.permute.xlu0 %361
        %363 = vrot.lane.b32.xlu0 %v360, 16
        %v364 = vpop.permute.xlu0 %363
        %vm365 = vcmask 130048
        %v366 = vsel %vm365, %v362, %v364
        %v369 = vsel %vm365, %v356, %v362
        %s370 = scalar_lea.vmem %s3, 2
        %v371 = vld [vmem:[%s370] sm:$0x3]
        %v373 = vperm.slane %v371, 0
        %v374 = vperm.slane %v371, 1
        %v377 = vmul.f32 %v369, %v373
        %v378 = vmul.f32 %v366, %v374
        %s379 = scalar_lea.vmem %s4, 8
        %v380 = vld [vmem:[%s379] sm:$0xff]
        %vm381 = vcmask 31744
        %v383 = vsel %vm381, %v380, 0
        %vm385 = vcmask 1043456
        %v387 = vsel %vm385, %v377, 0
        %v390 = vsel %vm385, %v378, 0
        %392 = vmatpush.msra.mxu0 0.0
        %393 = vmatpush.msra.mxu0 0.0
        %394 = vmatpush.msra.mxu0 0.0
        %395 = vmatpush.msra.mxu0 0.0
        %396 = vmatpush.msra.mxu0 0.0
        %397 = vmatpush.msra.mxu0 0.0
        %398 = vmatpush.msra.mxu0 0.0
        %399 = vmatpush.msra.mxu0 0.0
        %400 = vmatpush.msra.mxu0 0.0
        %401 = vmatpush.msra.mxu0 0.0
        %402 = vmatpush.msra.mxu0 0.0
        %403 = vmatpush.msra.mxu0 0.0
        %404 = vmatpush.msra.mxu0 0.0
        %405 = vmatpush.msra.mxu0 0.0
        %406 = vmatpush.msra.mxu0 0.0
        %v407 = vand.u32 %v387, 4294901760
        %408 = vmatpush.msra.mxu0 %v407
        %v409 = vand.u32 %v383, 4294901760
        %v410 = vsub.f32 %v383, %v409
        %v411 = vand.u32 %v410, 4294901760
        %v412 = vsub.f32 %v410, %v411
        %v413 = vand.u32 %v412, 4294901760
        %414 = vmatmul.f32.gmra.mxu0 %v413
        %v415 = vpop.f32.mrf.mxu0
        %v416 = vadd.f32 0.0, %v415
        %417 = vdwg.mxu0
        %418 = vmatpush.msra.mxu0 0.0
        %419 = vmatpush.msra.mxu0 0.0
        %420 = vmatpush.msra.mxu0 0.0
        %421 = vmatpush.msra.mxu0 0.0
        %422 = vmatpush.msra.mxu0 0.0
        %423 = vmatpush.msra.mxu0 0.0
        %424 = vmatpush.msra.mxu0 0.0
        %425 = vmatpush.msra.mxu0 0.0
        %426 = vmatpush.msra.mxu0 0.0
        %427 = vmatpush.msra.mxu0 0.0
        %428 = vmatpush.msra.mxu0 0.0
        %429 = vmatpush.msra.mxu0 0.0
        %430 = vmatpush.msra.mxu0 0.0
        %431 = vmatpush.msra.mxu0 0.0
        %432 = vmatpush.msra.mxu0 0.0
        %v433 = vand.u32 %v387, 4294901760
        %v434 = vsub.f32 %v387, %v433
        %v435 = vand.u32 %v434, 4294901760
        %v436 = vsub.f32 %v434, %v435
        %v437 = vand.u32 %v436, 4294901760
        %438 = vmatpush.msra.mxu0 %v437
        %v439 = vand.u32 %v383, 4294901760
        %440 = vmatmul.f32.gmra.mxu0 %v439
        %v441 = vpop.f32.mrf.mxu0
        %v442 = vadd.f32 %v416, %v441
        %443 = vdwg.mxu0
        %444 = vmatpush.msra.mxu0 0.0
        %445 = vmatpush.msra.mxu0 0.0
        %446 = vmatpush.msra.mxu0 0.0
        %447 = vmatpush.msra.mxu0 0.0
        %448 = vmatpush.msra.mxu0 0.0
        %449 = vmatpush.msra.mxu0 0.0
        %450 = vmatpush.msra.mxu0 0.0
        %451 = vmatpush.msra.mxu0 0.0
        %452 = vmatpush.msra.mxu0 0.0
        %453 = vmatpush.msra.mxu0 0.0
        %454 = vmatpush.msra.mxu0 0.0
        %455 = vmatpush.msra.mxu0 0.0
        %456 = vmatpush.msra.mxu0 0.0
        %457 = vmatpush.msra.mxu0 0.0
        %458 = vmatpush.msra.mxu0 0.0
        %v459 = vand.u32 %v387, 4294901760
        %v460 = vsub.f32 %v387, %v459
        %461 = vmatpush.msra.mxu0 %v460
        %v462 = vand.u32 %v383, 4294901760
        %v463 = vsub.f32 %v383, %v462
        %464 = vmatmul.f32.gmra.mxu0 %v463
        %v465 = vpop.f32.mrf.mxu0
        %v466 = vadd.f32 %v442, %v465
        %467 = vdwg.mxu0
        %468 = vmatpush.msra.mxu0 0.0
        %469 = vmatpush.msra.mxu0 0.0
        %470 = vmatpush.msra.mxu0 0.0
        %471 = vmatpush.msra.mxu0 0.0
        %472 = vmatpush.msra.mxu0 0.0
        %473 = vmatpush.msra.mxu0 0.0
        %474 = vmatpush.msra.mxu0 0.0
        %475 = vmatpush.msra.mxu0 0.0
        %476 = vmatpush.msra.mxu0 0.0
        %477 = vmatpush.msra.mxu0 0.0
        %478 = vmatpush.msra.mxu0 0.0
        %479 = vmatpush.msra.mxu0 0.0
        %480 = vmatpush.msra.mxu0 0.0
        %481 = vmatpush.msra.mxu0 0.0
        %482 = vmatpush.msra.mxu0 0.0
        %v483 = vand.u32 %v387, 4294901760
        %484 = vmatpush.msra.mxu0 %v483
        %v485 = vand.u32 %v383, 4294901760
        %v486 = vsub.f32 %v383, %v485
        %v487 = vand.u32 %v486, 4294901760
        %488 = vmatmul.f32.gmra.mxu0 %v487
        %v489 = vpop.f32.mrf.mxu0
        %v490 = vadd.f32 %v466, %v489
        %491 = vdwg.mxu0
        %492 = vmatpush.msra.mxu0 0.0
        %493 = vmatpush.msra.mxu0 0.0
        %494 = vmatpush.msra.mxu0 0.0
        %495 = vmatpush.msra.mxu0 0.0
        %496 = vmatpush.msra.mxu0 0.0
        %497 = vmatpush.msra.mxu0 0.0
        %498 = vmatpush.msra.mxu0 0.0
        %499 = vmatpush.msra.mxu0 0.0
        %500 = vmatpush.msra.mxu0 0.0
        %501 = vmatpush.msra.mxu0 0.0
        %502 = vmatpush.msra.mxu0 0.0
        %503 = vmatpush.msra.mxu0 0.0
        %504 = vmatpush.msra.mxu0 0.0
        %505 = vmatpush.msra.mxu0 0.0
        %506 = vmatpush.msra.mxu0 0.0
        %v507 = vand.u32 %v387, 4294901760
        %v508 = vsub.f32 %v387, %v507
        %v509 = vand.u32 %v508, 4294901760
        %510 = vmatpush.msra.mxu0 %v509
        %v511 = vand.u32 %v383, 4294901760
        %512 = vmatmul.f32.gmra.mxu0 %v511
        %v513 = vpop.f32.mrf.mxu0
        %v514 = vadd.f32 %v490, %v513
        %515 = vdwg.mxu0
        %516 = vmatpush.msra.mxu0 0.0
        %517 = vmatpush.msra.mxu0 0.0
        %518 = vmatpush.msra.mxu0 0.0
        %519 = vmatpush.msra.mxu0 0.0
        %520 = vmatpush.msra.mxu0 0.0
        %521 = vmatpush.msra.mxu0 0.0
        %522 = vmatpush.msra.mxu0 0.0
        %523 = vmatpush.msra.mxu0 0.0
        %524 = vmatpush.msra.mxu0 0.0
        %525 = vmatpush.msra.mxu0 0.0
        %526 = vmatpush.msra.mxu0 0.0
        %527 = vmatpush.msra.mxu0 0.0
        %528 = vmatpush.msra.mxu0 0.0
        %529 = vmatpush.msra.mxu0 0.0
        %530 = vmatpush.msra.mxu0 0.0
        %v531 = vand.u32 %v387, 4294901760
        %532 = vmatpush.msra.mxu0 %v531
        %v533 = vand.u32 %v383, 4294901760
        %534 = vmatmul.f32.gmra.mxu0 %v533
        %v535 = vpop.f32.mrf.mxu0
        %v536 = vadd.f32 %v514, %v535
        %537 = vdwg.mxu0
        %538 = vmatpush.msra.mxu0 0.0
        %539 = vmatpush.msra.mxu0 0.0
        %540 = vmatpush.msra.mxu0 0.0
        %541 = vmatpush.msra.mxu0 0.0
        %542 = vmatpush.msra.mxu0 0.0
        %543 = vmatpush.msra.mxu0 0.0
        %544 = vmatpush.msra.mxu0 0.0
        %545 = vmatpush.msra.mxu0 0.0
        %546 = vmatpush.msra.mxu0 0.0
        %547 = vmatpush.msra.mxu0 0.0
        %548 = vmatpush.msra.mxu0 0.0
        %549 = vmatpush.msra.mxu0 0.0
        %550 = vmatpush.msra.mxu0 0.0
        %551 = vmatpush.msra.mxu0 0.0
        %552 = vmatpush.msra.mxu0 0.0
        %v553 = vand.u32 %v390, 4294901760
        %554 = vmatpush.msra.mxu0 %v553
        %v555 = vand.u32 %v383, 4294901760
        %v556 = vsub.f32 %v383, %v555
        %v557 = vand.u32 %v556, 4294901760
        %v558 = vsub.f32 %v556, %v557
        %v559 = vand.u32 %v558, 4294901760
        %560 = vmatmul.f32.gmra.mxu0 %v559
        %v561 = vpop.f32.mrf.mxu0
        %v562 = vadd.f32 0.0, %v561
        %563 = vdwg.mxu0
        %564 = vmatpush.msra.mxu0 0.0
        %565 = vmatpush.msra.mxu0 0.0
        %566 = vmatpush.msra.mxu0 0.0
        %567 = vmatpush.msra.mxu0 0.0
        %568 = vmatpush.msra.mxu0 0.0
        %569 = vmatpush.msra.mxu0 0.0
        %570 = vmatpush.msra.mxu0 0.0
        %571 = vmatpush.msra.mxu0 0.0
        %572 = vmatpush.msra.mxu0 0.0
        %573 = vmatpush.msra.mxu0 0.0
        %574 = vmatpush.msra.mxu0 0.0
        %575 = vmatpush.msra.mxu0 0.0
        %576 = vmatpush.msra.mxu0 0.0
        %577 = vmatpush.msra.mxu0 0.0
        %578 = vmatpush.msra.mxu0 0.0
        %v579 = vand.u32 %v390, 4294901760
        %v580 = vsub.f32 %v390, %v579
        %v581 = vand.u32 %v580, 4294901760
        %v582 = vsub.f32 %v580, %v581
        %v583 = vand.u32 %v582, 4294901760
        %584 = vmatpush.msra.mxu0 %v583
        %v585 = vand.u32 %v383, 4294901760
        %586 = vmatmul.f32.gmra.mxu0 %v585
        %v587 = vpop.f32.mrf.mxu0
        %v588 = vadd.f32 %v562, %v587
        %589 = vdwg.mxu0
        %590 = vmatpush.msra.mxu0 0.0
        %591 = vmatpush.msra.mxu0 0.0
        %592 = vmatpush.msra.mxu0 0.0
        %593 = vmatpush.msra.mxu0 0.0
        %594 = vmatpush.msra.mxu0 0.0
        %595 = vmatpush.msra.mxu0 0.0
        %596 = vmatpush.msra.mxu0 0.0
        %597 = vmatpush.msra.mxu0 0.0
        %598 = vmatpush.msra.mxu0 0.0
        %599 = vmatpush.msra.mxu0 0.0
        %600 = vmatpush.msra.mxu0 0.0
        %601 = vmatpush.msra.mxu0 0.0
        %602 = vmatpush.msra.mxu0 0.0
        %603 = vmatpush.msra.mxu0 0.0
        %604 = vmatpush.msra.mxu0 0.0
        %v605 = vand.u32 %v390, 4294901760
        %v606 = vsub.f32 %v390, %v605
        %607 = vmatpush.msra.mxu0 %v606
        %v608 = vand.u32 %v383, 4294901760
        %v609 = vsub.f32 %v383, %v608
        %610 = vmatmul.f32.gmra.mxu0 %v609
        %v611 = vpop.f32.mrf.mxu0
        %v612 = vadd.f32 %v588, %v611
        %613 = vdwg.mxu0
        %614 = vmatpush.msra.mxu0 0.0
        %615 = vmatpush.msra.mxu0 0.0
        %616 = vmatpush.msra.mxu0 0.0
        %617 = vmatpush.msra.mxu0 0.0
        %618 = vmatpush.msra.mxu0 0.0
        %619 = vmatpush.msra.mxu0 0.0
        %620 = vmatpush.msra.mxu0 0.0
        %621 = vmatpush.msra.mxu0 0.0
        %622 = vmatpush.msra.mxu0 0.0
        %623 = vmatpush.msra.mxu0 0.0
        %624 = vmatpush.msra.mxu0 0.0
        %625 = vmatpush.msra.mxu0 0.0
        %626 = vmatpush.msra.mxu0 0.0
        %627 = vmatpush.msra.mxu0 0.0
        %628 = vmatpush.msra.mxu0 0.0
        %v629 = vand.u32 %v390, 4294901760
        %630 = vmatpush.msra.mxu0 %v629
        %v631 = vand.u32 %v383, 4294901760
        %v632 = vsub.f32 %v383, %v631
        %v633 = vand.u32 %v632, 4294901760
        %634 = vmatmul.f32.gmra.mxu0 %v633
        %v635 = vpop.f32.mrf.mxu0
        %v636 = vadd.f32 %v612, %v635
        %637 = vdwg.mxu0
        %638 = vmatpush.msra.mxu0 0.0
        %639 = vmatpush.msra.mxu0 0.0
        %640 = vmatpush.msra.mxu0 0.0
        %641 = vmatpush.msra.mxu0 0.0
        %642 = vmatpush.msra.mxu0 0.0
        %643 = vmatpush.msra.mxu0 0.0
        %644 = vmatpush.msra.mxu0 0.0
        %645 = vmatpush.msra.mxu0 0.0
        %646 = vmatpush.msra.mxu0 0.0
        %647 = vmatpush.msra.mxu0 0.0
        %648 = vmatpush.msra.mxu0 0.0
        %649 = vmatpush.msra.mxu0 0.0
        %650 = vmatpush.msra.mxu0 0.0
        %651 = vmatpush.msra.mxu0 0.0
        %652 = vmatpush.msra.mxu0 0.0
        %v653 = vand.u32 %v390, 4294901760
        %v654 = vsub.f32 %v390, %v653
        %v655 = vand.u32 %v654, 4294901760
        %656 = vmatpush.msra.mxu0 %v655
        %v657 = vand.u32 %v383, 4294901760
        %658 = vmatmul.f32.gmra.mxu0 %v657
        %v659 = vpop.f32.mrf.mxu0
        %v660 = vadd.f32 %v636, %v659
        %661 = vdwg.mxu0
        %662 = vmatpush.msra.mxu0 0.0
        %663 = vmatpush.msra.mxu0 0.0
        %664 = vmatpush.msra.mxu0 0.0
        %665 = vmatpush.msra.mxu0 0.0
        %666 = vmatpush.msra.mxu0 0.0
        %667 = vmatpush.msra.mxu0 0.0
        %668 = vmatpush.msra.mxu0 0.0
        %669 = vmatpush.msra.mxu0 0.0
        %670 = vmatpush.msra.mxu0 0.0
        %671 = vmatpush.msra.mxu0 0.0
        %672 = vmatpush.msra.mxu0 0.0
        %673 = vmatpush.msra.mxu0 0.0
        %674 = vmatpush.msra.mxu0 0.0
        %675 = vmatpush.msra.mxu0 0.0
        %676 = vmatpush.msra.mxu0 0.0
        %v677 = vand.u32 %v390, 4294901760
        %678 = vmatpush.msra.mxu0 %v677
        %v679 = vand.u32 %v383, 4294901760
        %680 = vmatmul.f32.gmra.mxu0 %v679
        %v681 = vpop.f32.mrf.mxu0
        %v682 = vadd.f32 %v660, %v681
        %683 = vdwg.mxu0
        %v685 = vsel %vm381, %v352, 0
        %v688 = vsel %vm385, %v350, 0
        %v691 = vsel %vm385, %v351, 0
        %693 = vmatpush.msra.mxu0 0.0
        %694 = vmatpush.msra.mxu0 0.0
        %695 = vmatpush.msra.mxu0 0.0
        %696 = vmatpush.msra.mxu0 0.0
        %697 = vmatpush.msra.mxu0 0.0
        %698 = vmatpush.msra.mxu0 0.0
        %699 = vmatpush.msra.mxu0 0.0
        %700 = vmatpush.msra.mxu0 0.0
        %701 = vmatpush.msra.mxu0 0.0
        %702 = vmatpush.msra.mxu0 0.0
        %703 = vmatpush.msra.mxu0 0.0
        %704 = vmatpush.msra.mxu0 0.0
        %705 = vmatpush.msra.mxu0 0.0
        %706 = vmatpush.msra.mxu0 0.0
        %707 = vmatpush.msra.mxu0 0.0
        %v708 = vand.u32 %v688, 4294901760
        %709 = vmatpush.msra.mxu0 %v708
        %v710 = vand.u32 %v685, 4294901760
        %v711 = vsub.f32 %v685, %v710
        %v712 = vand.u32 %v711, 4294901760
        %v713 = vsub.f32 %v711, %v712
        %v714 = vand.u32 %v713, 4294901760
        %715 = vmatmul.f32.gmra.mxu0 %v714
        %v716 = vpop.f32.mrf.mxu0
        %v717 = vadd.f32 %v536, %v716
        %718 = vdwg.mxu0
        %719 = vmatpush.msra.mxu0 0.0
        %720 = vmatpush.msra.mxu0 0.0
        %721 = vmatpush.msra.mxu0 0.0
        %722 = vmatpush.msra.mxu0 0.0
        %723 = vmatpush.msra.mxu0 0.0
        %724 = vmatpush.msra.mxu0 0.0
        %725 = vmatpush.msra.mxu0 0.0
        %726 = vmatpush.msra.mxu0 0.0
        %727 = vmatpush.msra.mxu0 0.0
        %728 = vmatpush.msra.mxu0 0.0
        %729 = vmatpush.msra.mxu0 0.0
        %730 = vmatpush.msra.mxu0 0.0
        %731 = vmatpush.msra.mxu0 0.0
        %732 = vmatpush.msra.mxu0 0.0
        %733 = vmatpush.msra.mxu0 0.0
        %v734 = vand.u32 %v688, 4294901760
        %v735 = vsub.f32 %v688, %v734
        %v736 = vand.u32 %v735, 4294901760
        %v737 = vsub.f32 %v735, %v736
        %v738 = vand.u32 %v737, 4294901760
        %739 = vmatpush.msra.mxu0 %v738
        %v740 = vand.u32 %v685, 4294901760
        %741 = vmatmul.f32.gmra.mxu0 %v740
        %v742 = vpop.f32.mrf.mxu0
        %v743 = vadd.f32 %v717, %v742
        %744 = vdwg.mxu0
        %745 = vmatpush.msra.mxu0 0.0
        %746 = vmatpush.msra.mxu0 0.0
        %747 = vmatpush.msra.mxu0 0.0
        %748 = vmatpush.msra.mxu0 0.0
        %749 = vmatpush.msra.mxu0 0.0
        %750 = vmatpush.msra.mxu0 0.0
        %751 = vmatpush.msra.mxu0 0.0
        %752 = vmatpush.msra.mxu0 0.0
        %753 = vmatpush.msra.mxu0 0.0
        %754 = vmatpush.msra.mxu0 0.0
        %755 = vmatpush.msra.mxu0 0.0
        %756 = vmatpush.msra.mxu0 0.0
        %757 = vmatpush.msra.mxu0 0.0
        %758 = vmatpush.msra.mxu0 0.0
        %759 = vmatpush.msra.mxu0 0.0
        %v760 = vand.u32 %v688, 4294901760
        %v761 = vsub.f32 %v688, %v760
        %762 = vmatpush.msra.mxu0 %v761
        %v763 = vand.u32 %v685, 4294901760
        %v764 = vsub.f32 %v685, %v763
        %765 = vmatmul.f32.gmra.mxu0 %v764
        %v766 = vpop.f32.mrf.mxu0
        %v767 = vadd.f32 %v743, %v766
        %768 = vdwg.mxu0
        %769 = vmatpush.msra.mxu0 0.0
        %770 = vmatpush.msra.mxu0 0.0
        %771 = vmatpush.msra.mxu0 0.0
        %772 = vmatpush.msra.mxu0 0.0
        %773 = vmatpush.msra.mxu0 0.0
        %774 = vmatpush.msra.mxu0 0.0
        %775 = vmatpush.msra.mxu0 0.0
        %776 = vmatpush.msra.mxu0 0.0
        %777 = vmatpush.msra.mxu0 0.0
        %778 = vmatpush.msra.mxu0 0.0
        %779 = vmatpush.msra.mxu0 0.0
        %780 = vmatpush.msra.mxu0 0.0
        %781 = vmatpush.msra.mxu0 0.0
        %782 = vmatpush.msra.mxu0 0.0
        %783 = vmatpush.msra.mxu0 0.0
        %v784 = vand.u32 %v688, 4294901760
        %785 = vmatpush.msra.mxu0 %v784
        %v786 = vand.u32 %v685, 4294901760
        %v787 = vsub.f32 %v685, %v786
        %v788 = vand.u32 %v787, 4294901760
        %789 = vmatmul.f32.gmra.mxu0 %v788
        %v790 = vpop.f32.mrf.mxu0
        %v791 = vadd.f32 %v767, %v790
        %792 = vdwg.mxu0
        %793 = vmatpush.msra.mxu0 0.0
        %794 = vmatpush.msra.mxu0 0.0
        %795 = vmatpush.msra.mxu0 0.0
        %796 = vmatpush.msra.mxu0 0.0
        %797 = vmatpush.msra.mxu0 0.0
        %798 = vmatpush.msra.mxu0 0.0
        %799 = vmatpush.msra.mxu0 0.0
        %800 = vmatpush.msra.mxu0 0.0
        %801 = vmatpush.msra.mxu0 0.0
        %802 = vmatpush.msra.mxu0 0.0
        %803 = vmatpush.msra.mxu0 0.0
        %804 = vmatpush.msra.mxu0 0.0
        %805 = vmatpush.msra.mxu0 0.0
        %806 = vmatpush.msra.mxu0 0.0
        %807 = vmatpush.msra.mxu0 0.0
        %v808 = vand.u32 %v688, 4294901760
        %v809 = vsub.f32 %v688, %v808
        %v810 = vand.u32 %v809, 4294901760
        %811 = vmatpush.msra.mxu0 %v810
        %v812 = vand.u32 %v685, 4294901760
        %813 = vmatmul.f32.gmra.mxu0 %v812
        %v814 = vpop.f32.mrf.mxu0
        %v815 = vadd.f32 %v791, %v814
        %816 = vdwg.mxu0
        %817 = vmatpush.msra.mxu0 0.0
        %818 = vmatpush.msra.mxu0 0.0
        %819 = vmatpush.msra.mxu0 0.0
        %820 = vmatpush.msra.mxu0 0.0
        %821 = vmatpush.msra.mxu0 0.0
        %822 = vmatpush.msra.mxu0 0.0
        %823 = vmatpush.msra.mxu0 0.0
        %824 = vmatpush.msra.mxu0 0.0
        %825 = vmatpush.msra.mxu0 0.0
        %826 = vmatpush.msra.mxu0 0.0
        %827 = vmatpush.msra.mxu0 0.0
        %828 = vmatpush.msra.mxu0 0.0
        %829 = vmatpush.msra.mxu0 0.0
        %830 = vmatpush.msra.mxu0 0.0
        %831 = vmatpush.msra.mxu0 0.0
        %v832 = vand.u32 %v688, 4294901760
        %833 = vmatpush.msra.mxu0 %v832
        %v834 = vand.u32 %v685, 4294901760
        %835 = vmatmul.f32.gmra.mxu0 %v834
        %v836 = vpop.f32.mrf.mxu0
        %v837 = vadd.f32 %v815, %v836
        %838 = vdwg.mxu0
        %839 = vmatpush.msra.mxu0 0.0
        %840 = vmatpush.msra.mxu0 0.0
        %841 = vmatpush.msra.mxu0 0.0
        %842 = vmatpush.msra.mxu0 0.0
        %843 = vmatpush.msra.mxu0 0.0
        %844 = vmatpush.msra.mxu0 0.0
        %845 = vmatpush.msra.mxu0 0.0
        %846 = vmatpush.msra.mxu0 0.0
        %847 = vmatpush.msra.mxu0 0.0
        %848 = vmatpush.msra.mxu0 0.0
        %849 = vmatpush.msra.mxu0 0.0
        %850 = vmatpush.msra.mxu0 0.0
        %851 = vmatpush.msra.mxu0 0.0
        %852 = vmatpush.msra.mxu0 0.0
        %853 = vmatpush.msra.mxu0 0.0
        %v854 = vand.u32 %v691, 4294901760
        %855 = vmatpush.msra.mxu0 %v854
        %v856 = vand.u32 %v685, 4294901760
        %v857 = vsub.f32 %v685, %v856
        %v858 = vand.u32 %v857, 4294901760
        %v859 = vsub.f32 %v857, %v858
        %v860 = vand.u32 %v859, 4294901760
        %861 = vmatmul.f32.gmra.mxu0 %v860
        %v862 = vpop.f32.mrf.mxu0
        %v863 = vadd.f32 %v682, %v862
        %864 = vdwg.mxu0
        %865 = vmatpush.msra.mxu0 0.0
        %866 = vmatpush.msra.mxu0 0.0
        %867 = vmatpush.msra.mxu0 0.0
        %868 = vmatpush.msra.mxu0 0.0
        %869 = vmatpush.msra.mxu0 0.0
        %870 = vmatpush.msra.mxu0 0.0
        %871 = vmatpush.msra.mxu0 0.0
        %872 = vmatpush.msra.mxu0 0.0
        %873 = vmatpush.msra.mxu0 0.0
        %874 = vmatpush.msra.mxu0 0.0
        %875 = vmatpush.msra.mxu0 0.0
        %876 = vmatpush.msra.mxu0 0.0
        %877 = vmatpush.msra.mxu0 0.0
        %878 = vmatpush.msra.mxu0 0.0
        %879 = vmatpush.msra.mxu0 0.0
        %v880 = vand.u32 %v691, 4294901760
        %v881 = vsub.f32 %v691, %v880
        %v882 = vand.u32 %v881, 4294901760
        %v883 = vsub.f32 %v881, %v882
        %v884 = vand.u32 %v883, 4294901760
        %885 = vmatpush.msra.mxu0 %v884
        %v886 = vand.u32 %v685, 4294901760
        %887 = vmatmul.f32.gmra.mxu0 %v886
        %v888 = vpop.f32.mrf.mxu0
        %v889 = vadd.f32 %v863, %v888
        %890 = vdwg.mxu0
        %891 = vmatpush.msra.mxu0 0.0
        %892 = vmatpush.msra.mxu0 0.0
        %893 = vmatpush.msra.mxu0 0.0
        %894 = vmatpush.msra.mxu0 0.0
        %895 = vmatpush.msra.mxu0 0.0
        %896 = vmatpush.msra.mxu0 0.0
        %897 = vmatpush.msra.mxu0 0.0
        %898 = vmatpush.msra.mxu0 0.0
        %899 = vmatpush.msra.mxu0 0.0
        %900 = vmatpush.msra.mxu0 0.0
        %901 = vmatpush.msra.mxu0 0.0
        %902 = vmatpush.msra.mxu0 0.0
        %903 = vmatpush.msra.mxu0 0.0
        %904 = vmatpush.msra.mxu0 0.0
        %905 = vmatpush.msra.mxu0 0.0
        %v906 = vand.u32 %v691, 4294901760
        %v907 = vsub.f32 %v691, %v906
        %908 = vmatpush.msra.mxu0 %v907
        %v909 = vand.u32 %v685, 4294901760
        %v910 = vsub.f32 %v685, %v909
        %911 = vmatmul.f32.gmra.mxu0 %v910
        %v912 = vpop.f32.mrf.mxu0
        %v913 = vadd.f32 %v889, %v912
        %914 = vdwg.mxu0
        %915 = vmatpush.msra.mxu0 0.0
        %916 = vmatpush.msra.mxu0 0.0
        %917 = vmatpush.msra.mxu0 0.0
        %918 = vmatpush.msra.mxu0 0.0
        %919 = vmatpush.msra.mxu0 0.0
        %920 = vmatpush.msra.mxu0 0.0
        %921 = vmatpush.msra.mxu0 0.0
        %922 = vmatpush.msra.mxu0 0.0
        %923 = vmatpush.msra.mxu0 0.0
        %924 = vmatpush.msra.mxu0 0.0
        %925 = vmatpush.msra.mxu0 0.0
        %926 = vmatpush.msra.mxu0 0.0
        %927 = vmatpush.msra.mxu0 0.0
        %928 = vmatpush.msra.mxu0 0.0
        %929 = vmatpush.msra.mxu0 0.0
        %v930 = vand.u32 %v691, 4294901760
        %931 = vmatpush.msra.mxu0 %v930
        %v932 = vand.u32 %v685, 4294901760
        %v933 = vsub.f32 %v685, %v932
        %v934 = vand.u32 %v933, 4294901760
        %935 = vmatmul.f32.gmra.mxu0 %v934
        %v936 = vpop.f32.mrf.mxu0
        %v937 = vadd.f32 %v913, %v936
        %938 = vdwg.mxu0
        %939 = vmatpush.msra.mxu0 0.0
        %940 = vmatpush.msra.mxu0 0.0
        %941 = vmatpush.msra.mxu0 0.0
        %942 = vmatpush.msra.mxu0 0.0
        %943 = vmatpush.msra.mxu0 0.0
        %944 = vmatpush.msra.mxu0 0.0
        %945 = vmatpush.msra.mxu0 0.0
        %946 = vmatpush.msra.mxu0 0.0
        %947 = vmatpush.msra.mxu0 0.0
        %948 = vmatpush.msra.mxu0 0.0
        %949 = vmatpush.msra.mxu0 0.0
        %950 = vmatpush.msra.mxu0 0.0
        %951 = vmatpush.msra.mxu0 0.0
        %952 = vmatpush.msra.mxu0 0.0
        %953 = vmatpush.msra.mxu0 0.0
        %v954 = vand.u32 %v691, 4294901760
        %v955 = vsub.f32 %v691, %v954
        %v956 = vand.u32 %v955, 4294901760
        %957 = vmatpush.msra.mxu0 %v956
        %v958 = vand.u32 %v685, 4294901760
        %959 = vmatmul.f32.gmra.mxu0 %v958
        %v960 = vpop.f32.mrf.mxu0
        %v961 = vadd.f32 %v937, %v960
        %962 = vdwg.mxu0
        %963 = vmatpush.msra.mxu0 0.0
        %964 = vmatpush.msra.mxu0 0.0
        %965 = vmatpush.msra.mxu0 0.0
        %966 = vmatpush.msra.mxu0 0.0
        %967 = vmatpush.msra.mxu0 0.0
        %968 = vmatpush.msra.mxu0 0.0
        %969 = vmatpush.msra.mxu0 0.0
        %970 = vmatpush.msra.mxu0 0.0
        %971 = vmatpush.msra.mxu0 0.0
        %972 = vmatpush.msra.mxu0 0.0
        %973 = vmatpush.msra.mxu0 0.0
        %974 = vmatpush.msra.mxu0 0.0
        %975 = vmatpush.msra.mxu0 0.0
        %976 = vmatpush.msra.mxu0 0.0
        %977 = vmatpush.msra.mxu0 0.0
        %v978 = vand.u32 %v691, 4294901760
        %979 = vmatpush.msra.mxu0 %v978
        %v980 = vand.u32 %v685, 4294901760
        %981 = vmatmul.f32.gmra.mxu0 %v980
        %v982 = vpop.f32.mrf.mxu0
        %v983 = vadd.f32 %v961, %v982
        %984 = vdwg.mxu0
        %985 = vst [vmem:[#allocation1] ss:$2 sm:$0xff] %v325
        %v986 = vld.sshfl [vmem:[#allocation1 + $0x8] sm:$0xff pattern:$0x75316420]
        %987 = vrot.lane.b32.xlu0 %v986, 15
        %v988 = vpop.permute.xlu0 %987
        %990 = vst [vmem:[#allocation1] ss:$2 sm:$0xff] %v325
        %v991 = vld.sshfl [vmem:[#allocation1] sm:$0xff pattern:$0x75316420]
        %v992 = vld.sshfl [vmem:[#allocation1 + $0x8] sm:$0xff pattern:$0x75316420]
        %993 = vrot.lane.b32.xlu0 %v991, 15
        %v994 = vpop.permute.xlu0 %993
        %995 = vrot.lane.b32.xlu0 %v992, 15
        %v996 = vpop.permute.xlu0 %995
        %vm997 = vcmask 121856
        %v998 = vsel %vm997, %v994, %v996
        %v1001 = vsel %vm997, %v988, %v994
        %s1002 = scalar_lea.vmem %s3, 4
        %v1003 = vld [vmem:[%s1002] sm:$0x3]
        %v1005 = vperm.slane %v1003, 0
        %v1006 = vperm.slane %v1003, 1
        %v1009 = vmul.f32 %v1001, %v1005
        %v1010 = vmul.f32 %v998, %v1006
        %s1011 = scalar_lea.vmem %s4, 16
        %v1012 = vld [vmem:[%s1011] sm:$0xff]
        %v1014 = vsel %vm381, %v1012, 0
        %v1017 = vsel %vm385, %v1009, 0
        %v1020 = vsel %vm385, %v1010, 0
        %1022 = vmatpush.msra.mxu0 0.0
        %1023 = vmatpush.msra.mxu0 0.0
        %1024 = vmatpush.msra.mxu0 0.0
        %1025 = vmatpush.msra.mxu0 0.0
        %1026 = vmatpush.msra.mxu0 0.0
        %1027 = vmatpush.msra.mxu0 0.0
        %1028 = vmatpush.msra.mxu0 0.0
        %1029 = vmatpush.msra.mxu0 0.0
        %1030 = vmatpush.msra.mxu0 0.0
        %1031 = vmatpush.msra.mxu0 0.0
        %1032 = vmatpush.msra.mxu0 0.0
        %1033 = vmatpush.msra.mxu0 0.0
        %1034 = vmatpush.msra.mxu0 0.0
        %1035 = vmatpush.msra.mxu0 0.0
        %1036 = vmatpush.msra.mxu0 0.0
        %v1037 = vand.u32 %v1017, 4294901760
        %1038 = vmatpush.msra.mxu0 %v1037
        %v1039 = vand.u32 %v1014, 4294901760
        %v1040 = vsub.f32 %v1014, %v1039
        %v1041 = vand.u32 %v1040, 4294901760
        %v1042 = vsub.f32 %v1040, %v1041
        %v1043 = vand.u32 %v1042, 4294901760
        %1044 = vmatmul.f32.gmra.mxu0 %v1043
        %v1045 = vpop.f32.mrf.mxu0
        %v1046 = vadd.f32 0.0, %v1045
        %1047 = vdwg.mxu0
        %1048 = vmatpush.msra.mxu0 0.0
        %1049 = vmatpush.msra.mxu0 0.0
        %1050 = vmatpush.msra.mxu0 0.0
        %1051 = vmatpush.msra.mxu0 0.0
        %1052 = vmatpush.msra.mxu0 0.0
        %1053 = vmatpush.msra.mxu0 0.0
        %1054 = vmatpush.msra.mxu0 0.0
        %1055 = vmatpush.msra.mxu0 0.0
        %1056 = vmatpush.msra.mxu0 0.0
        %1057 = vmatpush.msra.mxu0 0.0
        %1058 = vmatpush.msra.mxu0 0.0
        %1059 = vmatpush.msra.mxu0 0.0
        %1060 = vmatpush.msra.mxu0 0.0
        %1061 = vmatpush.msra.mxu0 0.0
        %1062 = vmatpush.msra.mxu0 0.0
        %v1063 = vand.u32 %v1017, 4294901760
        %v1064 = vsub.f32 %v1017, %v1063
        %v1065 = vand.u32 %v1064, 4294901760
        %v1066 = vsub.f32 %v1064, %v1065
        %v1067 = vand.u32 %v1066, 4294901760
        %1068 = vmatpush.msra.mxu0 %v1067
        %v1069 = vand.u32 %v1014, 4294901760
        %1070 = vmatmul.f32.gmra.mxu0 %v1069
        %v1071 = vpop.f32.mrf.mxu0
        %v1072 = vadd.f32 %v1046, %v1071
        %1073 = vdwg.mxu0
        %1074 = vmatpush.msra.mxu0 0.0
        %1075 = vmatpush.msra.mxu0 0.0
        %1076 = vmatpush.msra.mxu0 0.0
        %1077 = vmatpush.msra.mxu0 0.0
        %1078 = vmatpush.msra.mxu0 0.0
        %1079 = vmatpush.msra.mxu0 0.0
        %1080 = vmatpush.msra.mxu0 0.0
        %1081 = vmatpush.msra.mxu0 0.0
        %1082 = vmatpush.msra.mxu0 0.0
        %1083 = vmatpush.msra.mxu0 0.0
        %1084 = vmatpush.msra.mxu0 0.0
        %1085 = vmatpush.msra.mxu0 0.0
        %1086 = vmatpush.msra.mxu0 0.0
        %1087 = vmatpush.msra.mxu0 0.0
        %1088 = vmatpush.msra.mxu0 0.0
        %v1089 = vand.u32 %v1017, 4294901760
        %v1090 = vsub.f32 %v1017, %v1089
        %1091 = vmatpush.msra.mxu0 %v1090
        %v1092 = vand.u32 %v1014, 4294901760
        %v1093 = vsub.f32 %v1014, %v1092
        %1094 = vmatmul.f32.gmra.mxu0 %v1093
        %v1095 = vpop.f32.mrf.mxu0
        %v1096 = vadd.f32 %v1072, %v1095
        %1097 = vdwg.mxu0
        %1098 = vmatpush.msra.mxu0 0.0
        %1099 = vmatpush.msra.mxu0 0.0
        %1100 = vmatpush.msra.mxu0 0.0
        %1101 = vmatpush.msra.mxu0 0.0
        %1102 = vmatpush.msra.mxu0 0.0
        %1103 = vmatpush.msra.mxu0 0.0
        %1104 = vmatpush.msra.mxu0 0.0
        %1105 = vmatpush.msra.mxu0 0.0
        %1106 = vmatpush.msra.mxu0 0.0
        %1107 = vmatpush.msra.mxu0 0.0
        %1108 = vmatpush.msra.mxu0 0.0
        %1109 = vmatpush.msra.mxu0 0.0
        %1110 = vmatpush.msra.mxu0 0.0
        %1111 = vmatpush.msra.mxu0 0.0
        %1112 = vmatpush.msra.mxu0 0.0
        %v1113 = vand.u32 %v1017, 4294901760
        %1114 = vmatpush.msra.mxu0 %v1113
        %v1115 = vand.u32 %v1014, 4294901760
        %v1116 = vsub.f32 %v1014, %v1115
        %v1117 = vand.u32 %v1116, 4294901760
        %1118 = vmatmul.f32.gmra.mxu0 %v1117
        %v1119 = vpop.f32.mrf.mxu0
        %v1120 = vadd.f32 %v1096, %v1119
        %1121 = vdwg.mxu0
        %1122 = vmatpush.msra.mxu0 0.0
        %1123 = vmatpush.msra.mxu0 0.0
        %1124 = vmatpush.msra.mxu0 0.0
        %1125 = vmatpush.msra.mxu0 0.0
        %1126 = vmatpush.msra.mxu0 0.0
        %1127 = vmatpush.msra.mxu0 0.0
        %1128 = vmatpush.msra.mxu0 0.0
        %1129 = vmatpush.msra.mxu0 0.0
        %1130 = vmatpush.msra.mxu0 0.0
        %1131 = vmatpush.msra.mxu0 0.0
        %1132 = vmatpush.msra.mxu0 0.0
        %1133 = vmatpush.msra.mxu0 0.0
        %1134 = vmatpush.msra.mxu0 0.0
        %1135 = vmatpush.msra.mxu0 0.0
        %1136 = vmatpush.msra.mxu0 0.0
        %v1137 = vand.u32 %v1017, 4294901760
        %v1138 = vsub.f32 %v1017, %v1137
        %v1139 = vand.u32 %v1138, 4294901760
        %1140 = vmatpush.msra.mxu0 %v1139
        %v1141 = vand.u32 %v1014, 4294901760
        %1142 = vmatmul.f32.gmra.mxu0 %v1141
        %v1143 = vpop.f32.mrf.mxu0
        %v1144 = vadd.f32 %v1120, %v1143
        %1145 = vdwg.mxu0
        %1146 = vmatpush.msra.mxu0 0.0
        %1147 = vmatpush.msra.mxu0 0.0
        %1148 = vmatpush.msra.mxu0 0.0
        %1149 = vmatpush.msra.mxu0 0.0
        %1150 = vmatpush.msra.mxu0 0.0
        %1151 = vmatpush.msra.mxu0 0.0
        %1152 = vmatpush.msra.mxu0 0.0
        %1153 = vmatpush.msra.mxu0 0.0
        %1154 = vmatpush.msra.mxu0 0.0
        %1155 = vmatpush.msra.mxu0 0.0
        %1156 = vmatpush.msra.mxu0 0.0
        %1157 = vmatpush.msra.mxu0 0.0
        %1158 = vmatpush.msra.mxu0 0.0
        %1159 = vmatpush.msra.mxu0 0.0
        %1160 = vmatpush.msra.mxu0 0.0
        %v1161 = vand.u32 %v1017, 4294901760
        %1162 = vmatpush.msra.mxu0 %v1161
        %v1163 = vand.u32 %v1014, 4294901760
        %1164 = vmatmul.f32.gmra.mxu0 %v1163
        %v1165 = vpop.f32.mrf.mxu0
        %v1166 = vadd.f32 %v1144, %v1165
        %1167 = vdwg.mxu0
        %1168 = vmatpush.msra.mxu0 0.0
        %1169 = vmatpush.msra.mxu0 0.0
        %1170 = vmatpush.msra.mxu0 0.0
        %1171 = vmatpush.msra.mxu0 0.0
        %1172 = vmatpush.msra.mxu0 0.0
        %1173 = vmatpush.msra.mxu0 0.0
        %1174 = vmatpush.msra.mxu0 0.0
        %1175 = vmatpush.msra.mxu0 0.0
        %1176 = vmatpush.msra.mxu0 0.0
        %1177 = vmatpush.msra.mxu0 0.0
        %1178 = vmatpush.msra.mxu0 0.0
        %1179 = vmatpush.msra.mxu0 0.0
        %1180 = vmatpush.msra.mxu0 0.0
        %1181 = vmatpush.msra.mxu0 0.0
        %1182 = vmatpush.msra.mxu0 0.0
        %v1183 = vand.u32 %v1020, 4294901760
        %1184 = vmatpush.msra.mxu0 %v1183
        %v1185 = vand.u32 %v1014, 4294901760
        %v1186 = vsub.f32 %v1014, %v1185
        %v1187 = vand.u32 %v1186, 4294901760
        %v1188 = vsub.f32 %v1186, %v1187
        %v1189 = vand.u32 %v1188, 4294901760
        %1190 = vmatmul.f32.gmra.mxu0 %v1189
        %v1191 = vpop.f32.mrf.mxu0
        %v1192 = vadd.f32 0.0, %v1191
        %1193 = vdwg.mxu0
        %1194 = vmatpush.msra.mxu0 0.0
        %1195 = vmatpush.msra.mxu0 0.0
        %1196 = vmatpush.msra.mxu0 0.0
        %1197 = vmatpush.msra.mxu0 0.0
        %1198 = vmatpush.msra.mxu0 0.0
        %1199 = vmatpush.msra.mxu0 0.0
        %1200 = vmatpush.msra.mxu0 0.0
        %1201 = vmatpush.msra.mxu0 0.0
        %1202 = vmatpush.msra.mxu0 0.0
        %1203 = vmatpush.msra.mxu0 0.0
        %1204 = vmatpush.msra.mxu0 0.0
        %1205 = vmatpush.msra.mxu0 0.0
        %1206 = vmatpush.msra.mxu0 0.0
        %1207 = vmatpush.msra.mxu0 0.0
        %1208 = vmatpush.msra.mxu0 0.0
        %v1209 = vand.u32 %v1020, 4294901760
        %v1210 = vsub.f32 %v1020, %v1209
        %v1211 = vand.u32 %v1210, 4294901760
        %v1212 = vsub.f32 %v1210, %v1211
        %v1213 = vand.u32 %v1212, 4294901760
        %1214 = vmatpush.msra.mxu0 %v1213
        %v1215 = vand.u32 %v1014, 4294901760
        %1216 = vmatmul.f32.gmra.mxu0 %v1215
        %v1217 = vpop.f32.mrf.mxu0
        %v1218 = vadd.f32 %v1192, %v1217
        %1219 = vdwg.mxu0
        %1220 = vmatpush.msra.mxu0 0.0
        %1221 = vmatpush.msra.mxu0 0.0
        %1222 = vmatpush.msra.mxu0 0.0
        %1223 = vmatpush.msra.mxu0 0.0
        %1224 = vmatpush.msra.mxu0 0.0
        %1225 = vmatpush.msra.mxu0 0.0
        %1226 = vmatpush.msra.mxu0 0.0
        %1227 = vmatpush.msra.mxu0 0.0
        %1228 = vmatpush.msra.mxu0 0.0
        %1229 = vmatpush.msra.mxu0 0.0
        %1230 = vmatpush.msra.mxu0 0.0
        %1231 = vmatpush.msra.mxu0 0.0
        %1232 = vmatpush.msra.mxu0 0.0
        %1233 = vmatpush.msra.mxu0 0.0
        %1234 = vmatpush.msra.mxu0 0.0
        %v1235 = vand.u32 %v1020, 4294901760
        %v1236 = vsub.f32 %v1020, %v1235
        %1237 = vmatpush.msra.mxu0 %v1236
        %v1238 = vand.u32 %v1014, 4294901760
        %v1239 = vsub.f32 %v1014, %v1238
        %1240 = vmatmul.f32.gmra.mxu0 %v1239
        %v1241 = vpop.f32.mrf.mxu0
        %v1242 = vadd.f32 %v1218, %v1241
        %1243 = vdwg.mxu0
        %1244 = vmatpush.msra.mxu0 0.0
        %1245 = vmatpush.msra.mxu0 0.0
        %1246 = vmatpush.msra.mxu0 0.0
        %1247 = vmatpush.msra.mxu0 0.0
        %1248 = vmatpush.msra.mxu0 0.0
        %1249 = vmatpush.msra.mxu0 0.0
        %1250 = vmatpush.msra.mxu0 0.0
        %1251 = vmatpush.msra.mxu0 0.0
        %1252 = vmatpush.msra.mxu0 0.0
        %1253 = vmatpush.msra.mxu0 0.0
        %1254 = vmatpush.msra.mxu0 0.0
        %1255 = vmatpush.msra.mxu0 0.0
        %1256 = vmatpush.msra.mxu0 0.0
        %1257 = vmatpush.msra.mxu0 0.0
        %1258 = vmatpush.msra.mxu0 0.0
        %v1259 = vand.u32 %v1020, 4294901760
        %1260 = vmatpush.msra.mxu0 %v1259
        %v1261 = vand.u32 %v1014, 4294901760
        %v1262 = vsub.f32 %v1014, %v1261
        %v1263 = vand.u32 %v1262, 4294901760
        %1264 = vmatmul.f32.gmra.mxu0 %v1263
        %v1265 = vpop.f32.mrf.mxu0
        %v1266 = vadd.f32 %v1242, %v1265
        %1267 = vdwg.mxu0
        %1268 = vmatpush.msra.mxu0 0.0
        %1269 = vmatpush.msra.mxu0 0.0
        %1270 = vmatpush.msra.mxu0 0.0
        %1271 = vmatpush.msra.mxu0 0.0
        %1272 = vmatpush.msra.mxu0 0.0
        %1273 = vmatpush.msra.mxu0 0.0
        %1274 = vmatpush.msra.mxu0 0.0
        %1275 = vmatpush.msra.mxu0 0.0
        %1276 = vmatpush.msra.mxu0 0.0
        %1277 = vmatpush.msra.mxu0 0.0
        %1278 = vmatpush.msra.mxu0 0.0
        %1279 = vmatpush.msra.mxu0 0.0
        %1280 = vmatpush.msra.mxu0 0.0
        %1281 = vmatpush.msra.mxu0 0.0
        %1282 = vmatpush.msra.mxu0 0.0
        %v1283 = vand.u32 %v1020, 4294901760
        %v1284 = vsub.f32 %v1020, %v1283
        %v1285 = vand.u32 %v1284, 4294901760
        %1286 = vmatpush.msra.mxu0 %v1285
        %v1287 = vand.u32 %v1014, 4294901760
        %1288 = vmatmul.f32.gmra.mxu0 %v1287
        %v1289 = vpop.f32.mrf.mxu0
        %v1290 = vadd.f32 %v1266, %v1289
        %1291 = vdwg.mxu0
        %1292 = vmatpush.msra.mxu0 0.0
        %1293 = vmatpush.msra.mxu0 0.0
        %1294 = vmatpush.msra.mxu0 0.0
        %1295 = vmatpush.msra.mxu0 0.0
        %1296 = vmatpush.msra.mxu0 0.0
        %1297 = vmatpush.msra.mxu0 0.0
        %1298 = vmatpush.msra.mxu0 0.0
        %1299 = vmatpush.msra.mxu0 0.0
        %1300 = vmatpush.msra.mxu0 0.0
        %1301 = vmatpush.msra.mxu0 0.0
        %1302 = vmatpush.msra.mxu0 0.0
        %1303 = vmatpush.msra.mxu0 0.0
        %1304 = vmatpush.msra.mxu0 0.0
        %1305 = vmatpush.msra.mxu0 0.0
        %1306 = vmatpush.msra.mxu0 0.0
        %v1307 = vand.u32 %v1020, 4294901760
        %1308 = vmatpush.msra.mxu0 %v1307
        %v1309 = vand.u32 %v1014, 4294901760
        %1310 = vmatmul.f32.gmra.mxu0 %v1309
        %v1311 = vpop.f32.mrf.mxu0
        %v1312 = vadd.f32 %v1290, %v1311
        %1313 = vdwg.mxu0
        %v1314 = vadd.f32 %v837, %v1166
        %v1315 = vadd.f32 %v983, %v1312
        %1316 = vst [vmem:[#allocation1] ss:$2 sm:$0xff] %v325
        %v1317 = vld.sshfl [vmem:[#allocation1 + $0x8] sm:$0xff pattern:$0x75316420]
        %1318 = vrot.lane.b32.xlu0 %v1317, 1
        %v1319 = vpop.permute.xlu0 %1318
        %1321 = vst [vmem:[#allocation1] ss:$2 sm:$0xff] %v325
        %v1322 = vld.sshfl [vmem:[#allocation1] sm:$0xff pattern:$0x75316420]
        %v1323 = vld.sshfl [vmem:[#allocation1 + $0x8] sm:$0xff pattern:$0x75316420]
        %1324 = vrot.lane.b32.xlu0 %v1322, 1
        %v1325 = vpop.permute.xlu0 %1324
        %1326 = vrot.lane.b32.xlu0 %v1323, 1
        %v1327 = vpop.permute.xlu0 %1326
        %vm1328 = vcmask 7168
        %v1329 = vsel %vm1328, %v1325, %v1327
        %v1332 = vsel %vm1328, %v1319, %v1325
        %s1333 = scalar_lea.vmem %s3, 6
        %v1334 = vld [vmem:[%s1333] sm:$0x3]
        %v1336 = vperm.slane %v1334, 0
        %v1337 = vperm.slane %v1334, 1
        %v1340 = vmul.f32 %v1332, %v1336
        %v1341 = vmul.f32 %v1329, %v1337
        %s1342 = scalar_lea.vmem %s4, 24
        %v1343 = vld [vmem:[%s1342] sm:$0xff]
        %v1345 = vsel %vm381, %v1343, 0
        %v1348 = vsel %vm385, %v1340, 0
        %v1351 = vsel %vm385, %v1341, 0
        %1353 = vmatpush.msra.mxu0 0.0
        %1354 = vmatpush.msra.mxu0 0.0
        %1355 = vmatpush.msra.mxu0 0.0
        %1356 = vmatpush.msra.mxu0 0.0
        %1357 = vmatpush.msra.mxu0 0.0
        %1358 = vmatpush.msra.mxu0 0.0
        %1359 = vmatpush.msra.mxu0 0.0
        %1360 = vmatpush.msra.mxu0 0.0
        %1361 = vmatpush.msra.mxu0 0.0
        %1362 = vmatpush.msra.mxu0 0.0
        %1363 = vmatpush.msra.mxu0 0.0
        %1364 = vmatpush.msra.mxu0 0.0
        %1365 = vmatpush.msra.mxu0 0.0
        %1366 = vmatpush.msra.mxu0 0.0
        %1367 = vmatpush.msra.mxu0 0.0
        %v1368 = vand.u32 %v1348, 4294901760
        %1369 = vmatpush.msra.mxu0 %v1368
        %v1370 = vand.u32 %v1345, 4294901760
        %v1371 = vsub.f32 %v1345, %v1370
        %v1372 = vand.u32 %v1371, 4294901760
        %v1373 = vsub.f32 %v1371, %v1372
        %v1374 = vand.u32 %v1373, 4294901760
        %1375 = vmatmul.f32.gmra.mxu0 %v1374
        %v1376 = vpop.f32.mrf.mxu0
        %v1377 = vadd.f32 0.0, %v1376
        %1378 = vdwg.mxu0
        %1379 = vmatpush.msra.mxu0 0.0
        %1380 = vmatpush.msra.mxu0 0.0
        %1381 = vmatpush.msra.mxu0 0.0
        %1382 = vmatpush.msra.mxu0 0.0
        %1383 = vmatpush.msra.mxu0 0.0
        %1384 = vmatpush.msra.mxu0 0.0
        %1385 = vmatpush.msra.mxu0 0.0
        %1386 = vmatpush.msra.mxu0 0.0
        %1387 = vmatpush.msra.mxu0 0.0
        %1388 = vmatpush.msra.mxu0 0.0
        %1389 = vmatpush.msra.mxu0 0.0
        %1390 = vmatpush.msra.mxu0 0.0
        %1391 = vmatpush.msra.mxu0 0.0
        %1392 = vmatpush.msra.mxu0 0.0
        %1393 = vmatpush.msra.mxu0 0.0
        %v1394 = vand.u32 %v1348, 4294901760
        %v1395 = vsub.f32 %v1348, %v1394
        %v1396 = vand.u32 %v1395, 4294901760
        %v1397 = vsub.f32 %v1395, %v1396
        %v1398 = vand.u32 %v1397, 4294901760
        %1399 = vmatpush.msra.mxu0 %v1398
        %v1400 = vand.u32 %v1345, 4294901760
        %1401 = vmatmul.f32.gmra.mxu0 %v1400
        %v1402 = vpop.f32.mrf.mxu0
        %v1403 = vadd.f32 %v1377, %v1402
        %1404 = vdwg.mxu0
        %1405 = vmatpush.msra.mxu0 0.0
        %1406 = vmatpush.msra.mxu0 0.0
        %1407 = vmatpush.msra.mxu0 0.0
        %1408 = vmatpush.msra.mxu0 0.0
        %1409 = vmatpush.msra.mxu0 0.0
        %1410 = vmatpush.msra.mxu0 0.0
        %1411 = vmatpush.msra.mxu0 0.0
        %1412 = vmatpush.msra.mxu0 0.0
        %1413 = vmatpush.msra.mxu0 0.0
        %1414 = vmatpush.msra.mxu0 0.0
        %1415 = vmatpush.msra.mxu0 0.0
        %1416 = vmatpush.msra.mxu0 0.0
        %1417 = vmatpush.msra.mxu0 0.0
        %1418 = vmatpush.msra.mxu0 0.0
        %1419 = vmatpush.msra.mxu0 0.0
        %v1420 = vand.u32 %v1348, 4294901760
        %v1421 = vsub.f32 %v1348, %v1420
        %1422 = vmatpush.msra.mxu0 %v1421
        %v1423 = vand.u32 %v1345, 4294901760
        %v1424 = vsub.f32 %v1345, %v1423
        %1425 = vmatmul.f32.gmra.mxu0 %v1424
        %v1426 = vpop.f32.mrf.mxu0
        %v1427 = vadd.f32 %v1403, %v1426
        %1428 = vdwg.mxu0
        %1429 = vmatpush.msra.mxu0 0.0
        %1430 = vmatpush.msra.mxu0 0.0
        %1431 = vmatpush.msra.mxu0 0.0
        %1432 = vmatpush.msra.mxu0 0.0
        %1433 = vmatpush.msra.mxu0 0.0
        %1434 = vmatpush.msra.mxu0 0.0
        %1435 = vmatpush.msra.mxu0 0.0
        %1436 = vmatpush.msra.mxu0 0.0
        %1437 = vmatpush.msra.mxu0 0.0
        %1438 = vmatpush.msra.mxu0 0.0
        %1439 = vmatpush.msra.mxu0 0.0
        %1440 = vmatpush.msra.mxu0 0.0
        %1441 = vmatpush.msra.mxu0 0.0
        %1442 = vmatpush.msra.mxu0 0.0
        %1443 = vmatpush.msra.mxu0 0.0
        %v1444 = vand.u32 %v1348, 4294901760
        %1445 = vmatpush.msra.mxu0 %v1444
        %v1446 = vand.u32 %v1345, 4294901760
        %v1447 = vsub.f32 %v1345, %v1446
        %v1448 = vand.u32 %v1447, 4294901760
        %1449 = vmatmul.f32.gmra.mxu0 %v1448
        %v1450 = vpop.f32.mrf.mxu0
        %v1451 = vadd.f32 %v1427, %v1450
        %1452 = vdwg.mxu0
        %1453 = vmatpush.msra.mxu0 0.0
        %1454 = vmatpush.msra.mxu0 0.0
        %1455 = vmatpush.msra.mxu0 0.0
        %1456 = vmatpush.msra.mxu0 0.0
        %1457 = vmatpush.msra.mxu0 0.0
        %1458 = vmatpush.msra.mxu0 0.0
        %1459 = vmatpush.msra.mxu0 0.0
        %1460 = vmatpush.msra.mxu0 0.0
        %1461 = vmatpush.msra.mxu0 0.0
        %1462 = vmatpush.msra.mxu0 0.0
        %1463 = vmatpush.msra.mxu0 0.0
        %1464 = vmatpush.msra.mxu0 0.0
        %1465 = vmatpush.msra.mxu0 0.0
        %1466 = vmatpush.msra.mxu0 0.0
        %1467 = vmatpush.msra.mxu0 0.0
        %v1468 = vand.u32 %v1348, 4294901760
        %v1469 = vsub.f32 %v1348, %v1468
        %v1470 = vand.u32 %v1469, 4294901760
        %1471 = vmatpush.msra.mxu0 %v1470
        %v1472 = vand.u32 %v1345, 4294901760
        %1473 = vmatmul.f32.gmra.mxu0 %v1472
        %v1474 = vpop.f32.mrf.mxu0
        %v1475 = vadd.f32 %v1451, %v1474
        %1476 = vdwg.mxu0
        %1477 = vmatpush.msra.mxu0 0.0
        %1478 = vmatpush.msra.mxu0 0.0
        %1479 = vmatpush.msra.mxu0 0.0
        %1480 = vmatpush.msra.mxu0 0.0
        %1481 = vmatpush.msra.mxu0 0.0
        %1482 = vmatpush.msra.mxu0 0.0
        %1483 = vmatpush.msra.mxu0 0.0
        %1484 = vmatpush.msra.mxu0 0.0
        %1485 = vmatpush.msra.mxu0 0.0
        %1486 = vmatpush.msra.mxu0 0.0
        %1487 = vmatpush.msra.mxu0 0.0
        %1488 = vmatpush.msra.mxu0 0.0
        %1489 = vmatpush.msra.mxu0 0.0
        %1490 = vmatpush.msra.mxu0 0.0
        %1491 = vmatpush.msra.mxu0 0.0
        %v1492 = vand.u32 %v1348, 4294901760
        %1493 = vmatpush.msra.mxu0 %v1492
        %v1494 = vand.u32 %v1345, 4294901760
        %1495 = vmatmul.f32.gmra.mxu0 %v1494
        %v1496 = vpop.f32.mrf.mxu0
        %v1497 = vadd.f32 %v1475, %v1496
        %1498 = vdwg.mxu0
        %1499 = vmatpush.msra.mxu0 0.0
        %1500 = vmatpush.msra.mxu0 0.0
        %1501 = vmatpush.msra.mxu0 0.0
        %1502 = vmatpush.msra.mxu0 0.0
        %1503 = vmatpush.msra.mxu0 0.0
        %1504 = vmatpush.msra.mxu0 0.0
        %1505 = vmatpush.msra.mxu0 0.0
        %1506 = vmatpush.msra.mxu0 0.0
        %1507 = vmatpush.msra.mxu0 0.0
        %1508 = vmatpush.msra.mxu0 0.0
        %1509 = vmatpush.msra.mxu0 0.0
        %1510 = vmatpush.msra.mxu0 0.0
        %1511 = vmatpush.msra.mxu0 0.0
        %1512 = vmatpush.msra.mxu0 0.0
        %1513 = vmatpush.msra.mxu0 0.0
        %v1514 = vand.u32 %v1351, 4294901760
        %1515 = vmatpush.msra.mxu0 %v1514
        %v1516 = vand.u32 %v1345, 4294901760
        %v1517 = vsub.f32 %v1345, %v1516
        %v1518 = vand.u32 %v1517, 4294901760
        %v1519 = vsub.f32 %v1517, %v1518
        %v1520 = vand.u32 %v1519, 4294901760
        %1521 = vmatmul.f32.gmra.mxu0 %v1520
        %v1522 = vpop.f32.mrf.mxu0
        %v1523 = vadd.f32 0.0, %v1522
        %1524 = vdwg.mxu0
        %1525 = vmatpush.msra.mxu0 0.0
        %1526 = vmatpush.msra.mxu0 0.0
        %1527 = vmatpush.msra.mxu0 0.0
        %1528 = vmatpush.msra.mxu0 0.0
        %1529 = vmatpush.msra.mxu0 0.0
        %1530 = vmatpush.msra.mxu0 0.0
        %1531 = vmatpush.msra.mxu0 0.0
        %1532 = vmatpush.msra.mxu0 0.0
        %1533 = vmatpush.msra.mxu0 0.0
        %1534 = vmatpush.msra.mxu0 0.0
        %1535 = vmatpush.msra.mxu0 0.0
        %1536 = vmatpush.msra.mxu0 0.0
        %1537 = vmatpush.msra.mxu0 0.0
        %1538 = vmatpush.msra.mxu0 0.0
        %1539 = vmatpush.msra.mxu0 0.0
        %v1540 = vand.u32 %v1351, 4294901760
        %v1541 = vsub.f32 %v1351, %v1540
        %v1542 = vand.u32 %v1541, 4294901760
        %v1543 = vsub.f32 %v1541, %v1542
        %v1544 = vand.u32 %v1543, 4294901760
        %1545 = vmatpush.msra.mxu0 %v1544
        %v1546 = vand.u32 %v1345, 4294901760
        %1547 = vmatmul.f32.gmra.mxu0 %v1546
        %v1548 = vpop.f32.mrf.mxu0
        %v1549 = vadd.f32 %v1523, %v1548
        %1550 = vdwg.mxu0
        %1551 = vmatpush.msra.mxu0 0.0
        %1552 = vmatpush.msra.mxu0 0.0
        %1553 = vmatpush.msra.mxu0 0.0
        %1554 = vmatpush.msra.mxu0 0.0
        %1555 = vmatpush.msra.mxu0 0.0
        %1556 = vmatpush.msra.mxu0 0.0
        %1557 = vmatpush.msra.mxu0 0.0
        %1558 = vmatpush.msra.mxu0 0.0
        %1559 = vmatpush.msra.mxu0 0.0
        %1560 = vmatpush.msra.mxu0 0.0
        %1561 = vmatpush.msra.mxu0 0.0
        %1562 = vmatpush.msra.mxu0 0.0
        %1563 = vmatpush.msra.mxu0 0.0
        %1564 = vmatpush.msra.mxu0 0.0
        %1565 = vmatpush.msra.mxu0 0.0
        %v1566 = vand.u32 %v1351, 4294901760
        %v1567 = vsub.f32 %v1351, %v1566
        %1568 = vmatpush.msra.mxu0 %v1567
        %v1569 = vand.u32 %v1345, 4294901760
        %v1570 = vsub.f32 %v1345, %v1569
        %1571 = vmatmul.f32.gmra.mxu0 %v1570
        %v1572 = vpop.f32.mrf.mxu0
        %v1573 = vadd.f32 %v1549, %v1572
        %1574 = vdwg.mxu0
        %1575 = vmatpush.msra.mxu0 0.0
        %1576 = vmatpush.msra.mxu0 0.0
        %1577 = vmatpush.msra.mxu0 0.0
        %1578 = vmatpush.msra.mxu0 0.0
        %1579 = vmatpush.msra.mxu0 0.0
        %1580 = vmatpush.msra.mxu0 0.0
        %1581 = vmatpush.msra.mxu0 0.0
        %1582 = vmatpush.msra.mxu0 0.0
        %1583 = vmatpush.msra.mxu0 0.0
        %1584 = vmatpush.msra.mxu0 0.0
        %1585 = vmatpush.msra.mxu0 0.0
        %1586 = vmatpush.msra.mxu0 0.0
        %1587 = vmatpush.msra.mxu0 0.0
        %1588 = vmatpush.msra.mxu0 0.0
        %1589 = vmatpush.msra.mxu0 0.0
        %v1590 = vand.u32 %v1351, 4294901760
        %1591 = vmatpush.msra.mxu0 %v1590
        %v1592 = vand.u32 %v1345, 4294901760
        %v1593 = vsub.f32 %v1345, %v1592
        %v1594 = vand.u32 %v1593, 4294901760
        %1595 = vmatmul.f32.gmra.mxu0 %v1594
        %v1596 = vpop.f32.mrf.mxu0
        %v1597 = vadd.f32 %v1573, %v1596
        %1598 = vdwg.mxu0
        %1599 = vmatpush.msra.mxu0 0.0
        %1600 = vmatpush.msra.mxu0 0.0
        %1601 = vmatpush.msra.mxu0 0.0
        %1602 = vmatpush.msra.mxu0 0.0
        %1603 = vmatpush.msra.mxu0 0.0
        %1604 = vmatpush.msra.mxu0 0.0
        %1605 = vmatpush.msra.mxu0 0.0
        %1606 = vmatpush.msra.mxu0 0.0
        %1607 = vmatpush.msra.mxu0 0.0
        %1608 = vmatpush.msra.mxu0 0.0
        %1609 = vmatpush.msra.mxu0 0.0
        %1610 = vmatpush.msra.mxu0 0.0
        %1611 = vmatpush.msra.mxu0 0.0
        %1612 = vmatpush.msra.mxu0 0.0
        %1613 = vmatpush.msra.mxu0 0.0
        %v1614 = vand.u32 %v1351, 4294901760
        %v1615 = vsub.f32 %v1351, %v1614
        %v1616 = vand.u32 %v1615, 4294901760
        %1617 = vmatpush.msra.mxu0 %v1616
        %v1618 = vand.u32 %v1345, 4294901760
        %1619 = vmatmul.f32.gmra.mxu0 %v1618
        %v1620 = vpop.f32.mrf.mxu0
        %v1621 = vadd.f32 %v1597, %v1620
        %1622 = vdwg.mxu0
        %1623 = vmatpush.msra.mxu0 0.0
        %1624 = vmatpush.msra.mxu0 0.0
        %1625 = vmatpush.msra.mxu0 0.0
        %1626 = vmatpush.msra.mxu0 0.0
        %1627 = vmatpush.msra.mxu0 0.0
        %1628 = vmatpush.msra.mxu0 0.0
        %1629 = vmatpush.msra.mxu0 0.0
        %1630 = vmatpush.msra.mxu0 0.0
        %1631 = vmatpush.msra.mxu0 0.0
        %1632 = vmatpush.msra.mxu0 0.0
        %1633 = vmatpush.msra.mxu0 0.0
        %1634 = vmatpush.msra.mxu0 0.0
        %1635 = vmatpush.msra.mxu0 0.0
        %1636 = vmatpush.msra.mxu0 0.0
        %1637 = vmatpush.msra.mxu0 0.0
        %v1638 = vand.u32 %v1351, 4294901760
        %1639 = vmatpush.msra.mxu0 %v1638
        %v1640 = vand.u32 %v1345, 4294901760
        %1641 = vmatmul.f32.gmra.mxu0 %v1640
        %v1642 = vpop.f32.mrf.mxu0
        %v1643 = vadd.f32 %v1621, %v1642
        %1644 = vdwg.mxu0
        %v1645 = vadd.f32 %v1314, %v1497
        %v1646 = vadd.f32 %v1315, %v1643
        %s1647 = scalar_lea.vmem %s3, 8
        %v1648 = vld [vmem:[%s1647] sm:$0x3]
        %v1650 = vperm.slane %v1648, 0
        %v1651 = vperm.slane %v1648, 1
        %v1652 = vrot.slane %v1651, 4
        %v1653 = vsel %vm385, %v1650, %v1652
        %v1655 = vmul.f32 %v325, %v1653
        %s1656 = scalar_lea.vmem %s4, 32
        %v1657 = vld [vmem:[%s1656] sm:$0xff]
        %1659 = vst [vmem:[#allocation1] ss:$2 sm:$0xff] %v1655
        %v1660 = vld.sshfl [vmem:[#allocation1] sm:$0xff pattern:$0x75316420]
        %v1661 = vld.sshfl [vmem:[#allocation1 + $0x8] sm:$0xff pattern:$0x75316420]
        %v1663 = vsel %vm381, %v1657, 0
        %v1665 = vsel %vm385, %v1660, 0
        %v1667 = vsel %vm385, %v1661, 0
        %1669 = vmatpush.msra.mxu0 0.0
        %1670 = vmatpush.msra.mxu0 0.0
        %1671 = vmatpush.msra.mxu0 0.0
        %1672 = vmatpush.msra.mxu0 0.0
        %1673 = vmatpush.msra.mxu0 0.0
        %1674 = vmatpush.msra.mxu0 0.0
        %1675 = vmatpush.msra.mxu0 0.0
        %1676 = vmatpush.msra.mxu0 0.0
        %1677 = vmatpush.msra.mxu0 0.0
        %1678 = vmatpush.msra.mxu0 0.0
        %1679 = vmatpush.msra.mxu0 0.0
        %1680 = vmatpush.msra.mxu0 0.0
        %1681 = vmatpush.msra.mxu0 0.0
        %1682 = vmatpush.msra.mxu0 0.0
        %1683 = vmatpush.msra.mxu0 0.0
        %v1684 = vand.u32 %v1665, 4294901760
        %1685 = vmatpush.msra.mxu0 %v1684
        %v1686 = vand.u32 %v1663, 4294901760
        %v1687 = vsub.f32 %v1663, %v1686
        %v1688 = vand.u32 %v1687, 4294901760
        %v1689 = vsub.f32 %v1687, %v1688
        %v1690 = vand.u32 %v1689, 4294901760
        %1691 = vmatmul.f32.gmra.mxu0 %v1690
        %v1692 = vpop.f32.mrf.mxu0
        %v1693 = vadd.f32 0.0, %v1692
        %1694 = vdwg.mxu0
        %1695 = vmatpush.msra.mxu0 0.0
        %1696 = vmatpush.msra.mxu0 0.0
        %1697 = vmatpush.msra.mxu0 0.0
        %1698 = vmatpush.msra.mxu0 0.0
        %1699 = vmatpush.msra.mxu0 0.0
        %1700 = vmatpush.msra.mxu0 0.0
        %1701 = vmatpush.msra.mxu0 0.0
        %1702 = vmatpush.msra.mxu0 0.0
        %1703 = vmatpush.msra.mxu0 0.0
        %1704 = vmatpush.msra.mxu0 0.0
        %1705 = vmatpush.msra.mxu0 0.0
        %1706 = vmatpush.msra.mxu0 0.0
        %1707 = vmatpush.msra.mxu0 0.0
        %1708 = vmatpush.msra.mxu0 0.0
        %1709 = vmatpush.msra.mxu0 0.0
        %v1710 = vand.u32 %v1665, 4294901760
        %v1711 = vsub.f32 %v1665, %v1710
        %v1712 = vand.u32 %v1711, 4294901760
        %v1713 = vsub.f32 %v1711, %v1712
        %v1714 = vand.u32 %v1713, 4294901760
        %1715 = vmatpush.msra.mxu0 %v1714
        %v1716 = vand.u32 %v1663, 4294901760
        %1717 = vmatmul.f32.gmra.mxu0 %v1716
        %v1718 = vpop.f32.mrf.mxu0
        %v1719 = vadd.f32 %v1693, %v1718
        %1720 = vdwg.mxu0
        %1721 = vmatpush.msra.mxu0 0.0
        %1722 = vmatpush.msra.mxu0 0.0
        %1723 = vmatpush.msra.mxu0 0.0
        %1724 = vmatpush.msra.mxu0 0.0
        %1725 = vmatpush.msra.mxu0 0.0
        %1726 = vmatpush.msra.mxu0 0.0
        %1727 = vmatpush.msra.mxu0 0.0
        %1728 = vmatpush.msra.mxu0 0.0
        %1729 = vmatpush.msra.mxu0 0.0
        %1730 = vmatpush.msra.mxu0 0.0
        %1731 = vmatpush.msra.mxu0 0.0
        %1732 = vmatpush.msra.mxu0 0.0
        %1733 = vmatpush.msra.mxu0 0.0
        %1734 = vmatpush.msra.mxu0 0.0
        %1735 = vmatpush.msra.mxu0 0.0
        %v1736 = vand.u32 %v1665, 4294901760
        %v1737 = vsub.f32 %v1665, %v1736
        %1738 = vmatpush.msra.mxu0 %v1737
        %v1739 = vand.u32 %v1663, 4294901760
        %v1740 = vsub.f32 %v1663, %v1739
        %1741 = vmatmul.f32.gmra.mxu0 %v1740
        %v1742 = vpop.f32.mrf.mxu0
        %v1743 = vadd.f32 %v1719, %v1742
        %1744 = vdwg.mxu0
        %1745 = vmatpush.msra.mxu0 0.0
        %1746 = vmatpush.msra.mxu0 0.0
        %1747 = vmatpush.msra.mxu0 0.0
        %1748 = vmatpush.msra.mxu0 0.0
        %1749 = vmatpush.msra.mxu0 0.0
        %1750 = vmatpush.msra.mxu0 0.0
        %1751 = vmatpush.msra.mxu0 0.0
        %1752 = vmatpush.msra.mxu0 0.0
        %1753 = vmatpush.msra.mxu0 0.0
        %1754 = vmatpush.msra.mxu0 0.0
        %1755 = vmatpush.msra.mxu0 0.0
        %1756 = vmatpush.msra.mxu0 0.0
        %1757 = vmatpush.msra.mxu0 0.0
        %1758 = vmatpush.msra.mxu0 0.0
        %1759 = vmatpush.msra.mxu0 0.0
        %v1760 = vand.u32 %v1665, 4294901760
        %1761 = vmatpush.msra.mxu0 %v1760
        %v1762 = vand.u32 %v1663, 4294901760
        %v1763 = vsub.f32 %v1663, %v1762
        %v1764 = vand.u32 %v1763, 4294901760
        %1765 = vmatmul.f32.gmra.mxu0 %v1764
        %v1766 = vpop.f32.mrf.mxu0
        %v1767 = vadd.f32 %v1743, %v1766
        %1768 = vdwg.mxu0
        %1769 = vmatpush.msra.mxu0 0.0
        %1770 = vmatpush.msra.mxu0 0.0
        %1771 = vmatpush.msra.mxu0 0.0
        %1772 = vmatpush.msra.mxu0 0.0
        %1773 = vmatpush.msra.mxu0 0.0
        %1774 = vmatpush.msra.mxu0 0.0
        %1775 = vmatpush.msra.mxu0 0.0
        %1776 = vmatpush.msra.mxu0 0.0
        %1777 = vmatpush.msra.mxu0 0.0
        %1778 = vmatpush.msra.mxu0 0.0
        %1779 = vmatpush.msra.mxu0 0.0
        %1780 = vmatpush.msra.mxu0 0.0
        %1781 = vmatpush.msra.mxu0 0.0
        %1782 = vmatpush.msra.mxu0 0.0
        %1783 = vmatpush.msra.mxu0 0.0
        %v1784 = vand.u32 %v1665, 4294901760
        %v1785 = vsub.f32 %v1665, %v1784
        %v1786 = vand.u32 %v1785, 4294901760
        %1787 = vmatpush.msra.mxu0 %v1786
        %v1788 = vand.u32 %v1663, 4294901760
        %1789 = vmatmul.f32.gmra.mxu0 %v1788
        %v1790 = vpop.f32.mrf.mxu0
        %v1791 = vadd.f32 %v1767, %v1790
        %1792 = vdwg.mxu0
        %1793 = vmatpush.msra.mxu0 0.0
        %1794 = vmatpush.msra.mxu0 0.0
        %1795 = vmatpush.msra.mxu0 0.0
        %1796 = vmatpush.msra.mxu0 0.0
        %1797 = vmatpush.msra.mxu0 0.0
        %1798 = vmatpush.msra.mxu0 0.0
        %1799 = vmatpush.msra.mxu0 0.0
        %1800 = vmatpush.msra.mxu0 0.0
        %1801 = vmatpush.msra.mxu0 0.0
        %1802 = vmatpush.msra.mxu0 0.0
        %1803 = vmatpush.msra.mxu0 0.0
        %1804 = vmatpush.msra.mxu0 0.0
        %1805 = vmatpush.msra.mxu0 0.0
        %1806 = vmatpush.msra.mxu0 0.0
        %1807 = vmatpush.msra.mxu0 0.0
        %v1808 = vand.u32 %v1665, 4294901760
        %1809 = vmatpush.msra.mxu0 %v1808
        %v1810 = vand.u32 %v1663, 4294901760
        %1811 = vmatmul.f32.gmra.mxu0 %v1810
        %v1812 = vpop.f32.mrf.mxu0
        %v1813 = vadd.f32 %v1791, %v1812
        %1814 = vdwg.mxu0
        %1815 = vmatpush.msra.mxu0 0.0
        %1816 = vmatpush.msra.mxu0 0.0
        %1817 = vmatpush.msra.mxu0 0.0
        %1818 = vmatpush.msra.mxu0 0.0
        %1819 = vmatpush.msra.mxu0 0.0
        %1820 = vmatpush.msra.mxu0 0.0
        %1821 = vmatpush.msra.mxu0 0.0
        %1822 = vmatpush.msra.mxu0 0.0
        %1823 = vmatpush.msra.mxu0 0.0
        %1824 = vmatpush.msra.mxu0 0.0
        %1825 = vmatpush.msra.mxu0 0.0
        %1826 = vmatpush.msra.mxu0 0.0
        %1827 = vmatpush.msra.mxu0 0.0
        %1828 = vmatpush.msra.mxu0 0.0
        %1829 = vmatpush.msra.mxu0 0.0
        %v1830 = vand.u32 %v1667, 4294901760
        %1831 = vmatpush.msra.mxu0 %v1830
        %v1832 = vand.u32 %v1663, 4294901760
        %v1833 = vsub.f32 %v1663, %v1832
        %v1834 = vand.u32 %v1833, 4294901760
        %v1835 = vsub.f32 %v1833, %v1834
        %v1836 = vand.u32 %v1835, 4294901760
        %1837 = vmatmul.f32.gmra.mxu0 %v1836
        %v1838 = vpop.f32.mrf.mxu0
        %v1839 = vadd.f32 0.0, %v1838
        %1840 = vdwg.mxu0
        %1841 = vmatpush.msra.mxu0 0.0
        %1842 = vmatpush.msra.mxu0 0.0
        %1843 = vmatpush.msra.mxu0 0.0
        %1844 = vmatpush.msra.mxu0 0.0
        %1845 = vmatpush.msra.mxu0 0.0
        %1846 = vmatpush.msra.mxu0 0.0
        %1847 = vmatpush.msra.mxu0 0.0
        %1848 = vmatpush.msra.mxu0 0.0
        %1849 = vmatpush.msra.mxu0 0.0
        %1850 = vmatpush.msra.mxu0 0.0
        %1851 = vmatpush.msra.mxu0 0.0
        %1852 = vmatpush.msra.mxu0 0.0
        %1853 = vmatpush.msra.mxu0 0.0
        %1854 = vmatpush.msra.mxu0 0.0
        %1855 = vmatpush.msra.mxu0 0.0
        %v1856 = vand.u32 %v1667, 4294901760
        %v1857 = vsub.f32 %v1667, %v1856
        %v1858 = vand.u32 %v1857, 4294901760
        %v1859 = vsub.f32 %v1857, %v1858
        %v1860 = vand.u32 %v1859, 4294901760
        %1861 = vmatpush.msra.mxu0 %v1860
        %v1862 = vand.u32 %v1663, 4294901760
        %1863 = vmatmul.f32.gmra.mxu0 %v1862
        %v1864 = vpop.f32.mrf.mxu0
        %v1865 = vadd.f32 %v1839, %v1864
        %1866 = vdwg.mxu0
        %1867 = vmatpush.msra.mxu0 0.0
        %1868 = vmatpush.msra.mxu0 0.0
        %1869 = vmatpush.msra.mxu0 0.0
        %1870 = vmatpush.msra.mxu0 0.0
        %1871 = vmatpush.msra.mxu0 0.0
        %1872 = vmatpush.msra.mxu0 0.0
        %1873 = vmatpush.msra.mxu0 0.0
        %1874 = vmatpush.msra.mxu0 0.0
        %1875 = vmatpush.msra.mxu0 0.0
        %1876 = vmatpush.msra.mxu0 0.0
        %1877 = vmatpush.msra.mxu0 0.0
        %1878 = vmatpush.msra.mxu0 0.0
        %1879 = vmatpush.msra.mxu0 0.0
        %1880 = vmatpush.msra.mxu0 0.0
        %1881 = vmatpush.msra.mxu0 0.0
        %v1882 = vand.u32 %v1667, 4294901760
        %v1883 = vsub.f32 %v1667, %v1882
        %1884 = vmatpush.msra.mxu0 %v1883
        %v1885 = vand.u32 %v1663, 4294901760
        %v1886 = vsub.f32 %v1663, %v1885
        %1887 = vmatmul.f32.gmra.mxu0 %v1886
        %v1888 = vpop.f32.mrf.mxu0
        %v1889 = vadd.f32 %v1865, %v1888
        %1890 = vdwg.mxu0
        %1891 = vmatpush.msra.mxu0 0.0
        %1892 = vmatpush.msra.mxu0 0.0
        %1893 = vmatpush.msra.mxu0 0.0
        %1894 = vmatpush.msra.mxu0 0.0
        %1895 = vmatpush.msra.mxu0 0.0
        %1896 = vmatpush.msra.mxu0 0.0
        %1897 = vmatpush.msra.mxu0 0.0
        %1898 = vmatpush.msra.mxu0 0.0
        %1899 = vmatpush.msra.mxu0 0.0
        %1900 = vmatpush.msra.mxu0 0.0
        %1901 = vmatpush.msra.mxu0 0.0
        %1902 = vmatpush.msra.mxu0 0.0
        %1903 = vmatpush.msra.mxu0 0.0
        %1904 = vmatpush.msra.mxu0 0.0
        %1905 = vmatpush.msra.mxu0 0.0
        %v1906 = vand.u32 %v1667, 4294901760
        %1907 = vmatpush.msra.mxu0 %v1906
        %v1908 = vand.u32 %v1663, 4294901760
        %v1909 = vsub.f32 %v1663, %v1908
        %v1910 = vand.u32 %v1909, 4294901760
        %1911 = vmatmul.f32.gmra.mxu0 %v1910
        %v1912 = vpop.f32.mrf.mxu0
        %v1913 = vadd.f32 %v1889, %v1912
        %1914 = vdwg.mxu0
        %1915 = vmatpush.msra.mxu0 0.0
        %1916 = vmatpush.msra.mxu0 0.0
        %1917 = vmatpush.msra.mxu0 0.0
        %1918 = vmatpush.msra.mxu0 0.0
        %1919 = vmatpush.msra.mxu0 0.0
        %1920 = vmatpush.msra.mxu0 0.0
        %1921 = vmatpush.msra.mxu0 0.0
        %1922 = vmatpush.msra.mxu0 0.0
        %1923 = vmatpush.msra.mxu0 0.0
        %1924 = vmatpush.msra.mxu0 0.0
        %1925 = vmatpush.msra.mxu0 0.0
        %1926 = vmatpush.msra.mxu0 0.0
        %1927 = vmatpush.msra.mxu0 0.0
        %1928 = vmatpush.msra.mxu0 0.0
        %1929 = vmatpush.msra.mxu0 0.0
        %v1930 = vand.u32 %v1667, 4294901760
        %v1931 = vsub.f32 %v1667, %v1930
        %v1932 = vand.u32 %v1931, 4294901760
        %1933 = vmatpush.msra.mxu0 %v1932
        %v1934 = vand.u32 %v1663, 4294901760
        %1935 = vmatmul.f32.gmra.mxu0 %v1934
        %v1936 = vpop.f32.mrf.mxu0
        %v1937 = vadd.f32 %v1913, %v1936
        %1938 = vdwg.mxu0
        %1939 = vmatpush.msra.mxu0 0.0
        %1940 = vmatpush.msra.mxu0 0.0
        %1941 = vmatpush.msra.mxu0 0.0
        %1942 = vmatpush.msra.mxu0 0.0
        %1943 = vmatpush.msra.mxu0 0.0
        %1944 = vmatpush.msra.mxu0 0.0
        %1945 = vmatpush.msra.mxu0 0.0
        %1946 = vmatpush.msra.mxu0 0.0
        %1947 = vmatpush.msra.mxu0 0.0
        %1948 = vmatpush.msra.mxu0 0.0
        %1949 = vmatpush.msra.mxu0 0.0
        %1950 = vmatpush.msra.mxu0 0.0
        %1951 = vmatpush.msra.mxu0 0.0
        %1952 = vmatpush.msra.mxu0 0.0
        %1953 = vmatpush.msra.mxu0 0.0
        %v1954 = vand.u32 %v1667, 4294901760
        %1955 = vmatpush.msra.mxu0 %v1954
        %v1956 = vand.u32 %v1663, 4294901760
        %1957 = vmatmul.f32.gmra.mxu0 %v1956
        %v1958 = vpop.f32.mrf.mxu0
        %v1959 = vadd.f32 %v1937, %v1958
        %1960 = vdwg.mxu0
        %v1961 = vadd.f32 %v1645, %v1813
        %v1962 = vadd.f32 %v1646, %v1959
        %1963 = vst [vmem:[#allocation1] ss:$2 sm:$0xff] %v325
        %v1964 = vld.sshfl [vmem:[#allocation1] sm:$0xff pattern:$0x75316420]
        %v1965 = vld.sshfl [vmem:[#allocation1 + $0x8] sm:$0xff pattern:$0x75316420]
        %1966 = vrot.lane.b32.xlu0 %v1964, 127
        %v1967 = vpop.permute.xlu0 %1966
        %1968 = vrot.lane.b32.xlu0 %v1965, 127
        %v1969 = vpop.permute.xlu0 %1968
        %vm1970 = vcmask 1039360
        %v1971 = vsel %vm1970, %v1967, %v1969
        %1974 = vst [vmem:[#allocation1] ss:$2 sm:$0xff] %v325
        %v1975 = vld.sshfl [vmem:[#allocation1] sm:$0xff pattern:$0x75316420]
        %1976 = vrot.lane.b32.xlu0 %v1975, 127
        %v1977 = vpop.permute.xlu0 %1976
        %v1979 = vsel %vm1970, %v1969, %v1977
        %s1980 = scalar_lea.vmem %s3, 10
        %v1981 = vld [vmem:[%s1980] sm:$0x3]
        %v1983 = vperm.slane %v1981, 0
        %v1984 = vperm.slane %v1981, 1
        %v1987 = vmul.f32 %v1971, %v1983
        %v1988 = vmul.f32 %v1979, %v1984
        %s1989 = scalar_lea.vmem %s4, 40
        %v1990 = vld [vmem:[%s1989] sm:$0xff]
        %v1992 = vsel %vm381, %v1990, 0
        %v1995 = vsel %vm385, %v1987, 0
        %v1998 = vsel %vm385, %v1988, 0
        %2000 = vmatpush.msra.mxu0 0.0
        %2001 = vmatpush.msra.mxu0 0.0
        %2002 = vmatpush.msra.mxu0 0.0
        %2003 = vmatpush.msra.mxu0 0.0
        %2004 = vmatpush.msra.mxu0 0.0
        %2005 = vmatpush.msra.mxu0 0.0
        %2006 = vmatpush.msra.mxu0 0.0
        %2007 = vmatpush.msra.mxu0 0.0
        %2008 = vmatpush.msra.mxu0 0.0
        %2009 = vmatpush.msra.mxu0 0.0
        %2010 = vmatpush.msra.mxu0 0.0
        %2011 = vmatpush.msra.mxu0 0.0
        %2012 = vmatpush.msra.mxu0 0.0
        %2013 = vmatpush.msra.mxu0 0.0
        %2014 = vmatpush.msra.mxu0 0.0
        %v2015 = vand.u32 %v1995, 4294901760
        %2016 = vmatpush.msra.mxu0 %v2015
        %v2017 = vand.u32 %v1992, 4294901760
        %v2018 = vsub.f32 %v1992, %v2017
        %v2019 = vand.u32 %v2018, 4294901760
        %v2020 = vsub.f32 %v2018, %v2019
        %v2021 = vand.u32 %v2020, 4294901760
        %2022 = vmatmul.f32.gmra.mxu0 %v2021
        %v2023 = vpop.f32.mrf.mxu0
        %v2024 = vadd.f32 0.0, %v2023
        %2025 = vdwg.mxu0
        %2026 = vmatpush.msra.mxu0 0.0
        %2027 = vmatpush.msra.mxu0 0.0
        %2028 = vmatpush.msra.mxu0 0.0
        %2029 = vmatpush.msra.mxu0 0.0
        %2030 = vmatpush.msra.mxu0 0.0
        %2031 = vmatpush.msra.mxu0 0.0
        %2032 = vmatpush.msra.mxu0 0.0
        %2033 = vmatpush.msra.mxu0 0.0
        %2034 = vmatpush.msra.mxu0 0.0
        %2035 = vmatpush.msra.mxu0 0.0
        %2036 = vmatpush.msra.mxu0 0.0
        %2037 = vmatpush.msra.mxu0 0.0
        %2038 = vmatpush.msra.mxu0 0.0
        %2039 = vmatpush.msra.mxu0 0.0
        %2040 = vmatpush.msra.mxu0 0.0
        %v2041 = vand.u32 %v1995, 4294901760
        %v2042 = vsub.f32 %v1995, %v2041
        %v2043 = vand.u32 %v2042, 4294901760
        %v2044 = vsub.f32 %v2042, %v2043
        %v2045 = vand.u32 %v2044, 4294901760
        %2046 = vmatpush.msra.mxu0 %v2045
        %v2047 = vand.u32 %v1992, 4294901760
        %2048 = vmatmul.f32.gmra.mxu0 %v2047
        %v2049 = vpop.f32.mrf.mxu0
        %v2050 = vadd.f32 %v2024, %v2049
        %2051 = vdwg.mxu0
        %2052 = vmatpush.msra.mxu0 0.0
        %2053 = vmatpush.msra.mxu0 0.0
        %2054 = vmatpush.msra.mxu0 0.0
        %2055 = vmatpush.msra.mxu0 0.0
        %2056 = vmatpush.msra.mxu0 0.0
        %2057 = vmatpush.msra.mxu0 0.0
        %2058 = vmatpush.msra.mxu0 0.0
        %2059 = vmatpush.msra.mxu0 0.0
        %2060 = vmatpush.msra.mxu0 0.0
        %2061 = vmatpush.msra.mxu0 0.0
        %2062 = vmatpush.msra.mxu0 0.0
        %2063 = vmatpush.msra.mxu0 0.0
        %2064 = vmatpush.msra.mxu0 0.0
        %2065 = vmatpush.msra.mxu0 0.0
        %2066 = vmatpush.msra.mxu0 0.0
        %v2067 = vand.u32 %v1995, 4294901760
        %v2068 = vsub.f32 %v1995, %v2067
        %2069 = vmatpush.msra.mxu0 %v2068
        %v2070 = vand.u32 %v1992, 4294901760
        %v2071 = vsub.f32 %v1992, %v2070
        %2072 = vmatmul.f32.gmra.mxu0 %v2071
        %v2073 = vpop.f32.mrf.mxu0
        %v2074 = vadd.f32 %v2050, %v2073
        %2075 = vdwg.mxu0
        %2076 = vmatpush.msra.mxu0 0.0
        %2077 = vmatpush.msra.mxu0 0.0
        %2078 = vmatpush.msra.mxu0 0.0
        %2079 = vmatpush.msra.mxu0 0.0
        %2080 = vmatpush.msra.mxu0 0.0
        %2081 = vmatpush.msra.mxu0 0.0
        %2082 = vmatpush.msra.mxu0 0.0
        %2083 = vmatpush.msra.mxu0 0.0
        %2084 = vmatpush.msra.mxu0 0.0
        %2085 = vmatpush.msra.mxu0 0.0
        %2086 = vmatpush.msra.mxu0 0.0
        %2087 = vmatpush.msra.mxu0 0.0
        %2088 = vmatpush.msra.mxu0 0.0
        %2089 = vmatpush.msra.mxu0 0.0
        %2090 = vmatpush.msra.mxu0 0.0
        %v2091 = vand.u32 %v1995, 4294901760
        %2092 = vmatpush.msra.mxu0 %v2091
        %v2093 = vand.u32 %v1992, 4294901760
        %v2094 = vsub.f32 %v1992, %v2093
        %v2095 = vand.u32 %v2094, 4294901760
        %2096 = vmatmul.f32.gmra.mxu0 %v2095
        %v2097 = vpop.f32.mrf.mxu0
        %v2098 = vadd.f32 %v2074, %v2097
        %2099 = vdwg.mxu0
        %2100 = vmatpush.msra.mxu0 0.0
        %2101 = vmatpush.msra.mxu0 0.0
        %2102 = vmatpush.msra.mxu0 0.0
        %2103 = vmatpush.msra.mxu0 0.0
        %2104 = vmatpush.msra.mxu0 0.0
        %2105 = vmatpush.msra.mxu0 0.0
        %2106 = vmatpush.msra.mxu0 0.0
        %2107 = vmatpush.msra.mxu0 0.0
        %2108 = vmatpush.msra.mxu0 0.0
        %2109 = vmatpush.msra.mxu0 0.0
        %2110 = vmatpush.msra.mxu0 0.0
        %2111 = vmatpush.msra.mxu0 0.0
        %2112 = vmatpush.msra.mxu0 0.0
        %2113 = vmatpush.msra.mxu0 0.0
        %2114 = vmatpush.msra.mxu0 0.0
        %v2115 = vand.u32 %v1995, 4294901760
        %v2116 = vsub.f32 %v1995, %v2115
        %v2117 = vand.u32 %v2116, 4294901760
        %2118 = vmatpush.msra.mxu0 %v2117
        %v2119 = vand.u32 %v1992, 4294901760
        %2120 = vmatmul.f32.gmra.mxu0 %v2119
        %v2121 = vpop.f32.mrf.mxu0
        %v2122 = vadd.f32 %v2098, %v2121
        %2123 = vdwg.mxu0
        %2124 = vmatpush.msra.mxu0 0.0
        %2125 = vmatpush.msra.mxu0 0.0
        %2126 = vmatpush.msra.mxu0 0.0
        %2127 = vmatpush.msra.mxu0 0.0
        %2128 = vmatpush.msra.mxu0 0.0
        %2129 = vmatpush.msra.mxu0 0.0
        %2130 = vmatpush.msra.mxu0 0.0
        %2131 = vmatpush.msra.mxu0 0.0
        %2132 = vmatpush.msra.mxu0 0.0
        %2133 = vmatpush.msra.mxu0 0.0
        %2134 = vmatpush.msra.mxu0 0.0
        %2135 = vmatpush.msra.mxu0 0.0
        %2136 = vmatpush.msra.mxu0 0.0
        %2137 = vmatpush.msra.mxu0 0.0
        %2138 = vmatpush.msra.mxu0 0.0
        %v2139 = vand.u32 %v1995, 4294901760
        %2140 = vmatpush.msra.mxu0 %v2139
        %v2141 = vand.u32 %v1992, 4294901760
        %2142 = vmatmul.f32.gmra.mxu0 %v2141
        %v2143 = vpop.f32.mrf.mxu0
        %v2144 = vadd.f32 %v2122, %v2143
        %2145 = vdwg.mxu0
        %2146 = vmatpush.msra.mxu0 0.0
        %2147 = vmatpush.msra.mxu0 0.0
        %2148 = vmatpush.msra.mxu0 0.0
        %2149 = vmatpush.msra.mxu0 0.0
        %2150 = vmatpush.msra.mxu0 0.0
        %2151 = vmatpush.msra.mxu0 0.0
        %2152 = vmatpush.msra.mxu0 0.0
        %2153 = vmatpush.msra.mxu0 0.0
        %2154 = vmatpush.msra.mxu0 0.0
        %2155 = vmatpush.msra.mxu0 0.0
        %2156 = vmatpush.msra.mxu0 0.0
        %2157 = vmatpush.msra.mxu0 0.0
        %2158 = vmatpush.msra.mxu0 0.0
        %2159 = vmatpush.msra.mxu0 0.0
        %2160 = vmatpush.msra.mxu0 0.0
        %v2161 = vand.u32 %v1998, 4294901760
        %2162 = vmatpush.msra.mxu0 %v2161
        %v2163 = vand.u32 %v1992, 4294901760
        %v2164 = vsub.f32 %v1992, %v2163
        %v2165 = vand.u32 %v2164, 4294901760
        %v2166 = vsub.f32 %v2164, %v2165
        %v2167 = vand.u32 %v2166, 4294901760
        %2168 = vmatmul.f32.gmra.mxu0 %v2167
        %v2169 = vpop.f32.mrf.mxu0
        %v2170 = vadd.f32 0.0, %v2169
        %2171 = vdwg.mxu0
        %2172 = vmatpush.msra.mxu0 0.0
        %2173 = vmatpush.msra.mxu0 0.0
        %2174 = vmatpush.msra.mxu0 0.0
        %2175 = vmatpush.msra.mxu0 0.0
        %2176 = vmatpush.msra.mxu0 0.0
        %2177 = vmatpush.msra.mxu0 0.0
        %2178 = vmatpush.msra.mxu0 0.0
        %2179 = vmatpush.msra.mxu0 0.0
        %2180 = vmatpush.msra.mxu0 0.0
        %2181 = vmatpush.msra.mxu0 0.0
        %2182 = vmatpush.msra.mxu0 0.0
        %2183 = vmatpush.msra.mxu0 0.0
        %2184 = vmatpush.msra.mxu0 0.0
        %2185 = vmatpush.msra.mxu0 0.0
        %2186 = vmatpush.msra.mxu0 0.0
        %v2187 = vand.u32 %v1998, 4294901760
        %v2188 = vsub.f32 %v1998, %v2187
        %v2189 = vand.u32 %v2188, 4294901760
        %v2190 = vsub.f32 %v2188, %v2189
        %v2191 = vand.u32 %v2190, 4294901760
        %2192 = vmatpush.msra.mxu0 %v2191
        %v2193 = vand.u32 %v1992, 4294901760
        %2194 = vmatmul.f32.gmra.mxu0 %v2193
        %v2195 = vpop.f32.mrf.mxu0
        %v2196 = vadd.f32 %v2170, %v2195
        %2197 = vdwg.mxu0
        %2198 = vmatpush.msra.mxu0 0.0
        %2199 = vmatpush.msra.mxu0 0.0
        %2200 = vmatpush.msra.mxu0 0.0
        %2201 = vmatpush.msra.mxu0 0.0
        %2202 = vmatpush.msra.mxu0 0.0
        %2203 = vmatpush.msra.mxu0 0.0
        %2204 = vmatpush.msra.mxu0 0.0
        %2205 = vmatpush.msra.mxu0 0.0
        %2206 = vmatpush.msra.mxu0 0.0
        %2207 = vmatpush.msra.mxu0 0.0
        %2208 = vmatpush.msra.mxu0 0.0
        %2209 = vmatpush.msra.mxu0 0.0
        %2210 = vmatpush.msra.mxu0 0.0
        %2211 = vmatpush.msra.mxu0 0.0
        %2212 = vmatpush.msra.mxu0 0.0
        %v2213 = vand.u32 %v1998, 4294901760
        %v2214 = vsub.f32 %v1998, %v2213
        %2215 = vmatpush.msra.mxu0 %v2214
        %v2216 = vand.u32 %v1992, 4294901760
        %v2217 = vsub.f32 %v1992, %v2216
        %2218 = vmatmul.f32.gmra.mxu0 %v2217
        %v2219 = vpop.f32.mrf.mxu0
        %v2220 = vadd.f32 %v2196, %v2219
        %2221 = vdwg.mxu0
        %2222 = vmatpush.msra.mxu0 0.0
        %2223 = vmatpush.msra.mxu0 0.0
        %2224 = vmatpush.msra.mxu0 0.0
        %2225 = vmatpush.msra.mxu0 0.0
        %2226 = vmatpush.msra.mxu0 0.0
        %2227 = vmatpush.msra.mxu0 0.0
        %2228 = vmatpush.msra.mxu0 0.0
        %2229 = vmatpush.msra.mxu0 0.0
        %2230 = vmatpush.msra.mxu0 0.0
        %2231 = vmatpush.msra.mxu0 0.0
        %2232 = vmatpush.msra.mxu0 0.0
        %2233 = vmatpush.msra.mxu0 0.0
        %2234 = vmatpush.msra.mxu0 0.0
        %2235 = vmatpush.msra.mxu0 0.0
        %2236 = vmatpush.msra.mxu0 0.0
        %v2237 = vand.u32 %v1998, 4294901760
        %2238 = vmatpush.msra.mxu0 %v2237
        %v2239 = vand.u32 %v1992, 4294901760
        %v2240 = vsub.f32 %v1992, %v2239
        %v2241 = vand.u32 %v2240, 4294901760
        %2242 = vmatmul.f32.gmra.mxu0 %v2241
        %v2243 = vpop.f32.mrf.mxu0
        %v2244 = vadd.f32 %v2220, %v2243
        %2245 = vdwg.mxu0
        %2246 = vmatpush.msra.mxu0 0.0
        %2247 = vmatpush.msra.mxu0 0.0
        %2248 = vmatpush.msra.mxu0 0.0
        %2249 = vmatpush.msra.mxu0 0.0
        %2250 = vmatpush.msra.mxu0 0.0
        %2251 = vmatpush.msra.mxu0 0.0
        %2252 = vmatpush.msra.mxu0 0.0
        %2253 = vmatpush.msra.mxu0 0.0
        %2254 = vmatpush.msra.mxu0 0.0
        %2255 = vmatpush.msra.mxu0 0.0
        %2256 = vmatpush.msra.mxu0 0.0
        %2257 = vmatpush.msra.mxu0 0.0
        %2258 = vmatpush.msra.mxu0 0.0
        %2259 = vmatpush.msra.mxu0 0.0
        %2260 = vmatpush.msra.mxu0 0.0
        %v2261 = vand.u32 %v1998, 4294901760
        %v2262 = vsub.f32 %v1998, %v2261
        %v2263 = vand.u32 %v2262, 4294901760
        %2264 = vmatpush.msra.mxu0 %v2263
        %v2265 = vand.u32 %v1992, 4294901760
        %2266 = vmatmul.f32.gmra.mxu0 %v2265
        %v2267 = vpop.f32.mrf.mxu0
        %v2268 = vadd.f32 %v2244, %v2267
        %2269 = vdwg.mxu0
        %2270 = vmatpush.msra.mxu0 0.0
        %2271 = vmatpush.msra.mxu0 0.0
        %2272 = vmatpush.msra.mxu0 0.0
        %2273 = vmatpush.msra.mxu0 0.0
        %2274 = vmatpush.msra.mxu0 0.0
        %2275 = vmatpush.msra.mxu0 0.0
        %2276 = vmatpush.msra.mxu0 0.0
        %2277 = vmatpush.msra.mxu0 0.0
        %2278 = vmatpush.msra.mxu0 0.0
        %2279 = vmatpush.msra.mxu0 0.0
        %2280 = vmatpush.msra.mxu0 0.0
        %2281 = vmatpush.msra.mxu0 0.0
        %2282 = vmatpush.msra.mxu0 0.0
        %2283 = vmatpush.msra.mxu0 0.0
        %2284 = vmatpush.msra.mxu0 0.0
        %v2285 = vand.u32 %v1998, 4294901760
        %2286 = vmatpush.msra.mxu0 %v2285
        %v2287 = vand.u32 %v1992, 4294901760
        %2288 = vmatmul.f32.gmra.mxu0 %v2287
        %v2289 = vpop.f32.mrf.mxu0
        %v2290 = vadd.f32 %v2268, %v2289
        %2291 = vdwg.mxu0
        %v2292 = vadd.f32 %v1961, %v2144
        %v2293 = vadd.f32 %v1962, %v2290
        %2294 = vst [vmem:[#allocation1] ss:$2 sm:$0xff] %v325
        %v2295 = vld.sshfl [vmem:[#allocation1] sm:$0xff pattern:$0x75316420]
        %v2296 = vld.sshfl [vmem:[#allocation1 + $0x8] sm:$0xff pattern:$0x75316420]
        %2297 = vrot.lane.b32.xlu0 %v2295, 113
        %v2298 = vpop.permute.xlu0 %2297
        %2299 = vrot.lane.b32.xlu0 %v2296, 113
        %v2300 = vpop.permute.xlu0 %2299
        %vm2301 = vcmask 924672
        %v2302 = vsel %vm2301, %v2298, %v2300
        %2305 = vst [vmem:[#allocation1] ss:$2 sm:$0xff] %v325
        %v2306 = vld.sshfl [vmem:[#allocation1] sm:$0xff pattern:$0x75316420]
        %2307 = vrot.lane.b32.xlu0 %v2306, 113
        %v2308 = vpop.permute.xlu0 %2307
        %v2310 = vsel %vm2301, %v2300, %v2308
        %s2311 = scalar_lea.vmem %s3, 12
        %v2312 = vld [vmem:[%s2311] sm:$0x3]
        %v2314 = vperm.slane %v2312, 0
        %v2315 = vperm.slane %v2312, 1
        %v2318 = vmul.f32 %v2302, %v2314
        %v2319 = vmul.f32 %v2310, %v2315
        %s2320 = scalar_lea.vmem %s4, 48
        %v2321 = vld [vmem:[%s2320] sm:$0xff]
        %v2323 = vsel %vm381, %v2321, 0
        %v2326 = vsel %vm385, %v2318, 0
        %v2329 = vsel %vm385, %v2319, 0
        %2331 = vmatpush.msra.mxu0 0.0
        %2332 = vmatpush.msra.mxu0 0.0
        %2333 = vmatpush.msra.mxu0 0.0
        %2334 = vmatpush.msra.mxu0 0.0
        %2335 = vmatpush.msra.mxu0 0.0
        %2336 = vmatpush.msra.mxu0 0.0
        %2337 = vmatpush.msra.mxu0 0.0
        %2338 = vmatpush.msra.mxu0 0.0
        %2339 = vmatpush.msra.mxu0 0.0
        %2340 = vmatpush.msra.mxu0 0.0
        %2341 = vmatpush.msra.mxu0 0.0
        %2342 = vmatpush.msra.mxu0 0.0
        %2343 = vmatpush.msra.mxu0 0.0
        %2344 = vmatpush.msra.mxu0 0.0
        %2345 = vmatpush.msra.mxu0 0.0
        %v2346 = vand.u32 %v2326, 4294901760
        %2347 = vmatpush.msra.mxu0 %v2346
        %v2348 = vand.u32 %v2323, 4294901760
        %v2349 = vsub.f32 %v2323, %v2348
        %v2350 = vand.u32 %v2349, 4294901760
        %v2351 = vsub.f32 %v2349, %v2350
        %v2352 = vand.u32 %v2351, 4294901760
        %2353 = vmatmul.f32.gmra.mxu0 %v2352
        %v2354 = vpop.f32.mrf.mxu0
        %v2355 = vadd.f32 0.0, %v2354
        %2356 = vdwg.mxu0
        %2357 = vmatpush.msra.mxu0 0.0
        %2358 = vmatpush.msra.mxu0 0.0
        %2359 = vmatpush.msra.mxu0 0.0
        %2360 = vmatpush.msra.mxu0 0.0
        %2361 = vmatpush.msra.mxu0 0.0
        %2362 = vmatpush.msra.mxu0 0.0
        %2363 = vmatpush.msra.mxu0 0.0
        %2364 = vmatpush.msra.mxu0 0.0
        %2365 = vmatpush.msra.mxu0 0.0
        %2366 = vmatpush.msra.mxu0 0.0
        %2367 = vmatpush.msra.mxu0 0.0
        %2368 = vmatpush.msra.mxu0 0.0
        %2369 = vmatpush.msra.mxu0 0.0
        %2370 = vmatpush.msra.mxu0 0.0
        %2371 = vmatpush.msra.mxu0 0.0
        %v2372 = vand.u32 %v2326, 4294901760
        %v2373 = vsub.f32 %v2326, %v2372
        %v2374 = vand.u32 %v2373, 4294901760
        %v2375 = vsub.f32 %v2373, %v2374
        %v2376 = vand.u32 %v2375, 4294901760
        %2377 = vmatpush.msra.mxu0 %v2376
        %v2378 = vand.u32 %v2323, 4294901760
        %2379 = vmatmul.f32.gmra.mxu0 %v2378
        %v2380 = vpop.f32.mrf.mxu0
        %v2381 = vadd.f32 %v2355, %v2380
        %2382 = vdwg.mxu0
        %2383 = vmatpush.msra.mxu0 0.0
        %2384 = vmatpush.msra.mxu0 0.0
        %2385 = vmatpush.msra.mxu0 0.0
        %2386 = vmatpush.msra.mxu0 0.0
        %2387 = vmatpush.msra.mxu0 0.0
        %2388 = vmatpush.msra.mxu0 0.0
        %2389 = vmatpush.msra.mxu0 0.0
        %2390 = vmatpush.msra.mxu0 0.0
        %2391 = vmatpush.msra.mxu0 0.0
        %2392 = vmatpush.msra.mxu0 0.0
        %2393 = vmatpush.msra.mxu0 0.0
        %2394 = vmatpush.msra.mxu0 0.0
        %2395 = vmatpush.msra.mxu0 0.0
        %2396 = vmatpush.msra.mxu0 0.0
        %2397 = vmatpush.msra.mxu0 0.0
        %v2398 = vand.u32 %v2326, 4294901760
        %v2399 = vsub.f32 %v2326, %v2398
        %2400 = vmatpush.msra.mxu0 %v2399
        %v2401 = vand.u32 %v2323, 4294901760
        %v2402 = vsub.f32 %v2323, %v2401
        %2403 = vmatmul.f32.gmra.mxu0 %v2402
        %v2404 = vpop.f32.mrf.mxu0
        %v2405 = vadd.f32 %v2381, %v2404
        %2406 = vdwg.mxu0
        %2407 = vmatpush.msra.mxu0 0.0
        %2408 = vmatpush.msra.mxu0 0.0
        %2409 = vmatpush.msra.mxu0 0.0
        %2410 = vmatpush.msra.mxu0 0.0
        %2411 = vmatpush.msra.mxu0 0.0
        %2412 = vmatpush.msra.mxu0 0.0
        %2413 = vmatpush.msra.mxu0 0.0
        %2414 = vmatpush.msra.mxu0 0.0
        %2415 = vmatpush.msra.mxu0 0.0
        %2416 = vmatpush.msra.mxu0 0.0
        %2417 = vmatpush.msra.mxu0 0.0
        %2418 = vmatpush.msra.mxu0 0.0
        %2419 = vmatpush.msra.mxu0 0.0
        %2420 = vmatpush.msra.mxu0 0.0
        %2421 = vmatpush.msra.mxu0 0.0
        %v2422 = vand.u32 %v2326, 4294901760
        %2423 = vmatpush.msra.mxu0 %v2422
        %v2424 = vand.u32 %v2323, 4294901760
        %v2425 = vsub.f32 %v2323, %v2424
        %v2426 = vand.u32 %v2425, 4294901760
        %2427 = vmatmul.f32.gmra.mxu0 %v2426
        %v2428 = vpop.f32.mrf.mxu0
        %v2429 = vadd.f32 %v2405, %v2428
        %2430 = vdwg.mxu0
        %2431 = vmatpush.msra.mxu0 0.0
        %2432 = vmatpush.msra.mxu0 0.0
        %2433 = vmatpush.msra.mxu0 0.0
        %2434 = vmatpush.msra.mxu0 0.0
        %2435 = vmatpush.msra.mxu0 0.0
        %2436 = vmatpush.msra.mxu0 0.0
        %2437 = vmatpush.msra.mxu0 0.0
        %2438 = vmatpush.msra.mxu0 0.0
        %2439 = vmatpush.msra.mxu0 0.0
        %2440 = vmatpush.msra.mxu0 0.0
        %2441 = vmatpush.msra.mxu0 0.0
        %2442 = vmatpush.msra.mxu0 0.0
        %2443 = vmatpush.msra.mxu0 0.0
        %2444 = vmatpush.msra.mxu0 0.0
        %2445 = vmatpush.msra.mxu0 0.0
        %v2446 = vand.u32 %v2326, 4294901760
        %v2447 = vsub.f32 %v2326, %v2446
        %v2448 = vand.u32 %v2447, 4294901760
        %2449 = vmatpush.msra.mxu0 %v2448
        %v2450 = vand.u32 %v2323, 4294901760
        %2451 = vmatmul.f32.gmra.mxu0 %v2450
        %v2452 = vpop.f32.mrf.mxu0
        %v2453 = vadd.f32 %v2429, %v2452
        %2454 = vdwg.mxu0
        %2455 = vmatpush.msra.mxu0 0.0
        %2456 = vmatpush.msra.mxu0 0.0
        %2457 = vmatpush.msra.mxu0 0.0
        %2458 = vmatpush.msra.mxu0 0.0
        %2459 = vmatpush.msra.mxu0 0.0
        %2460 = vmatpush.msra.mxu0 0.0
        %2461 = vmatpush.msra.mxu0 0.0
        %2462 = vmatpush.msra.mxu0 0.0
        %2463 = vmatpush.msra.mxu0 0.0
        %2464 = vmatpush.msra.mxu0 0.0
        %2465 = vmatpush.msra.mxu0 0.0
        %2466 = vmatpush.msra.mxu0 0.0
        %2467 = vmatpush.msra.mxu0 0.0
        %2468 = vmatpush.msra.mxu0 0.0
        %2469 = vmatpush.msra.mxu0 0.0
        %v2470 = vand.u32 %v2326, 4294901760
        %2471 = vmatpush.msra.mxu0 %v2470
        %v2472 = vand.u32 %v2323, 4294901760
        %2473 = vmatmul.f32.gmra.mxu0 %v2472
        %v2474 = vpop.f32.mrf.mxu0
        %v2475 = vadd.f32 %v2453, %v2474
        %2476 = vdwg.mxu0
        %2477 = vmatpush.msra.mxu0 0.0
        %2478 = vmatpush.msra.mxu0 0.0
        %2479 = vmatpush.msra.mxu0 0.0
        %2480 = vmatpush.msra.mxu0 0.0
        %2481 = vmatpush.msra.mxu0 0.0
        %2482 = vmatpush.msra.mxu0 0.0
        %2483 = vmatpush.msra.mxu0 0.0
        %2484 = vmatpush.msra.mxu0 0.0
        %2485 = vmatpush.msra.mxu0 0.0
        %2486 = vmatpush.msra.mxu0 0.0
        %2487 = vmatpush.msra.mxu0 0.0
        %2488 = vmatpush.msra.mxu0 0.0
        %2489 = vmatpush.msra.mxu0 0.0
        %2490 = vmatpush.msra.mxu0 0.0
        %2491 = vmatpush.msra.mxu0 0.0
        %v2492 = vand.u32 %v2329, 4294901760
        %2493 = vmatpush.msra.mxu0 %v2492
        %v2494 = vand.u32 %v2323, 4294901760
        %v2495 = vsub.f32 %v2323, %v2494
        %v2496 = vand.u32 %v2495, 4294901760
        %v2497 = vsub.f32 %v2495, %v2496
        %v2498 = vand.u32 %v2497, 4294901760
        %2499 = vmatmul.f32.gmra.mxu0 %v2498
        %v2500 = vpop.f32.mrf.mxu0
        %v2501 = vadd.f32 0.0, %v2500
        %2502 = vdwg.mxu0
        %2503 = vmatpush.msra.mxu0 0.0
        %2504 = vmatpush.msra.mxu0 0.0
        %2505 = vmatpush.msra.mxu0 0.0
        %2506 = vmatpush.msra.mxu0 0.0
        %2507 = vmatpush.msra.mxu0 0.0
        %2508 = vmatpush.msra.mxu0 0.0
        %2509 = vmatpush.msra.mxu0 0.0
        %2510 = vmatpush.msra.mxu0 0.0
        %2511 = vmatpush.msra.mxu0 0.0
        %2512 = vmatpush.msra.mxu0 0.0
        %2513 = vmatpush.msra.mxu0 0.0
        %2514 = vmatpush.msra.mxu0 0.0
        %2515 = vmatpush.msra.mxu0 0.0
        %2516 = vmatpush.msra.mxu0 0.0
        %2517 = vmatpush.msra.mxu0 0.0
        %v2518 = vand.u32 %v2329, 4294901760
        %v2519 = vsub.f32 %v2329, %v2518
        %v2520 = vand.u32 %v2519, 4294901760
        %v2521 = vsub.f32 %v2519, %v2520
        %v2522 = vand.u32 %v2521, 4294901760
        %2523 = vmatpush.msra.mxu0 %v2522
        %v2524 = vand.u32 %v2323, 4294901760
        %2525 = vmatmul.f32.gmra.mxu0 %v2524
        %v2526 = vpop.f32.mrf.mxu0
        %v2527 = vadd.f32 %v2501, %v2526
        %2528 = vdwg.mxu0
        %2529 = vmatpush.msra.mxu0 0.0
        %2530 = vmatpush.msra.mxu0 0.0
        %2531 = vmatpush.msra.mxu0 0.0
        %2532 = vmatpush.msra.mxu0 0.0
        %2533 = vmatpush.msra.mxu0 0.0
        %2534 = vmatpush.msra.mxu0 0.0
        %2535 = vmatpush.msra.mxu0 0.0
        %2536 = vmatpush.msra.mxu0 0.0
        %2537 = vmatpush.msra.mxu0 0.0
        %2538 = vmatpush.msra.mxu0 0.0
        %2539 = vmatpush.msra.mxu0 0.0
        %2540 = vmatpush.msra.mxu0 0.0
        %2541 = vmatpush.msra.mxu0 0.0
        %2542 = vmatpush.msra.mxu0 0.0
        %2543 = vmatpush.msra.mxu0 0.0
        %v2544 = vand.u32 %v2329, 4294901760
        %v2545 = vsub.f32 %v2329, %v2544
        %2546 = vmatpush.msra.mxu0 %v2545
        %v2547 = vand.u32 %v2323, 4294901760
        %v2548 = vsub.f32 %v2323, %v2547
        %2549 = vmatmul.f32.gmra.mxu0 %v2548
        %v2550 = vpop.f32.mrf.mxu0
        %v2551 = vadd.f32 %v2527, %v2550
        %2552 = vdwg.mxu0
        %2553 = vmatpush.msra.mxu0 0.0
        %2554 = vmatpush.msra.mxu0 0.0
        %2555 = vmatpush.msra.mxu0 0.0
        %2556 = vmatpush.msra.mxu0 0.0
        %2557 = vmatpush.msra.mxu0 0.0
        %2558 = vmatpush.msra.mxu0 0.0
        %2559 = vmatpush.msra.mxu0 0.0
        %2560 = vmatpush.msra.mxu0 0.0
        %2561 = vmatpush.msra.mxu0 0.0
        %2562 = vmatpush.msra.mxu0 0.0
        %2563 = vmatpush.msra.mxu0 0.0
        %2564 = vmatpush.msra.mxu0 0.0
        %2565 = vmatpush.msra.mxu0 0.0
        %2566 = vmatpush.msra.mxu0 0.0
        %2567 = vmatpush.msra.mxu0 0.0
        %v2568 = vand.u32 %v2329, 4294901760
        %2569 = vmatpush.msra.mxu0 %v2568
        %v2570 = vand.u32 %v2323, 4294901760
        %v2571 = vsub.f32 %v2323, %v2570
        %v2572 = vand.u32 %v2571, 4294901760
        %2573 = vmatmul.f32.gmra.mxu0 %v2572
        %v2574 = vpop.f32.mrf.mxu0
        %v2575 = vadd.f32 %v2551, %v2574
        %2576 = vdwg.mxu0
        %2577 = vmatpush.msra.mxu0 0.0
        %2578 = vmatpush.msra.mxu0 0.0
        %2579 = vmatpush.msra.mxu0 0.0
        %2580 = vmatpush.msra.mxu0 0.0
        %2581 = vmatpush.msra.mxu0 0.0
        %2582 = vmatpush.msra.mxu0 0.0
        %2583 = vmatpush.msra.mxu0 0.0
        %2584 = vmatpush.msra.mxu0 0.0
        %2585 = vmatpush.msra.mxu0 0.0
        %2586 = vmatpush.msra.mxu0 0.0
        %2587 = vmatpush.msra.mxu0 0.0
        %2588 = vmatpush.msra.mxu0 0.0
        %2589 = vmatpush.msra.mxu0 0.0
        %2590 = vmatpush.msra.mxu0 0.0
        %2591 = vmatpush.msra.mxu0 0.0
        %v2592 = vand.u32 %v2329, 4294901760
        %v2593 = vsub.f32 %v2329, %v2592
        %v2594 = vand.u32 %v2593, 4294901760
        %2595 = vmatpush.msra.mxu0 %v2594
        %v2596 = vand.u32 %v2323, 4294901760
        %2597 = vmatmul.f32.gmra.mxu0 %v2596
        %v2598 = vpop.f32.mrf.mxu0
        %v2599 = vadd.f32 %v2575, %v2598
        %2600 = vdwg.mxu0
        %2601 = vmatpush.msra.mxu0 0.0
        %2602 = vmatpush.msra.mxu0 0.0
        %2603 = vmatpush.msra.mxu0 0.0
        %2604 = vmatpush.msra.mxu0 0.0
        %2605 = vmatpush.msra.mxu0 0.0
        %2606 = vmatpush.msra.mxu0 0.0
        %2607 = vmatpush.msra.mxu0 0.0
        %2608 = vmatpush.msra.mxu0 0.0
        %2609 = vmatpush.msra.mxu0 0.0
        %2610 = vmatpush.msra.mxu0 0.0
        %2611 = vmatpush.msra.mxu0 0.0
        %2612 = vmatpush.msra.mxu0 0.0
        %2613 = vmatpush.msra.mxu0 0.0
        %2614 = vmatpush.msra.mxu0 0.0
        %2615 = vmatpush.msra.mxu0 0.0
        %v2616 = vand.u32 %v2329, 4294901760
        %2617 = vmatpush.msra.mxu0 %v2616
        %v2618 = vand.u32 %v2323, 4294901760
        %2619 = vmatmul.f32.gmra.mxu0 %v2618
        %v2620 = vpop.f32.mrf.mxu0
        %v2621 = vadd.f32 %v2599, %v2620
        %2622 = vdwg.mxu0
        %v2623 = vadd.f32 %v2292, %v2475
        %v2624 = vadd.f32 %v2293, %v2621
        %2625 = vst [vmem:[#allocation1] ss:$2 sm:$0xff] %v325
        %v2626 = vld.sshfl [vmem:[#allocation1] sm:$0xff pattern:$0x75316420]
        %v2627 = vld.sshfl [vmem:[#allocation1 + $0x8] sm:$0xff pattern:$0x75316420]
        %2628 = vrot.lane.b32.xlu0 %v2626, 112
        %v2629 = vpop.permute.xlu0 %2628
        %2630 = vrot.lane.b32.xlu0 %v2627, 112
        %v2631 = vpop.permute.xlu0 %2630
        %vm2632 = vcmask 916480
        %v2633 = vsel %vm2632, %v2629, %v2631
        %2636 = vst [vmem:[#allocation1] ss:$2 sm:$0xff] %v325
        %v2637 = vld.sshfl [vmem:[#allocation1] sm:$0xff pattern:$0x75316420]
        %2638 = vrot.lane.b32.xlu0 %v2637, 112
        %v2639 = vpop.permute.xlu0 %2638
        %v2641 = vsel %vm2632, %v2631, %v2639
        %s2642 = scalar_lea.vmem %s3, 14
        %v2643 = vld [vmem:[%s2642] sm:$0x3]
        %v2645 = vperm.slane %v2643, 0
        %v2646 = vperm.slane %v2643, 1
        %v2649 = vmul.f32 %v2633, %v2645
        %v2650 = vmul.f32 %v2641, %v2646
        %s2651 = scalar_lea.vmem %s4, 56
        %v2652 = vld [vmem:[%s2651] sm:$0xff]
        %v2654 = vsel %vm381, %v2652, 0
        %v2657 = vsel %vm385, %v2649, 0
        %v2660 = vsel %vm385, %v2650, 0
        %2662 = vmatpush.msra.mxu0 0.0
        %2663 = vmatpush.msra.mxu0 0.0
        %2664 = vmatpush.msra.mxu0 0.0
        %2665 = vmatpush.msra.mxu0 0.0
        %2666 = vmatpush.msra.mxu0 0.0
        %2667 = vmatpush.msra.mxu0 0.0
        %2668 = vmatpush.msra.mxu0 0.0
        %2669 = vmatpush.msra.mxu0 0.0
        %2670 = vmatpush.msra.mxu0 0.0
        %2671 = vmatpush.msra.mxu0 0.0
        %2672 = vmatpush.msra.mxu0 0.0
        %2673 = vmatpush.msra.mxu0 0.0
        %2674 = vmatpush.msra.mxu0 0.0
        %2675 = vmatpush.msra.mxu0 0.0
        %2676 = vmatpush.msra.mxu0 0.0
        %v2677 = vand.u32 %v2657, 4294901760
        %2678 = vmatpush.msra.mxu0 %v2677
        %v2679 = vand.u32 %v2654, 4294901760
        %v2680 = vsub.f32 %v2654, %v2679
        %v2681 = vand.u32 %v2680, 4294901760
        %v2682 = vsub.f32 %v2680, %v2681
        %v2683 = vand.u32 %v2682, 4294901760
        %2684 = vmatmul.f32.gmra.mxu0 %v2683
        %v2685 = vpop.f32.mrf.mxu0
        %v2686 = vadd.f32 0.0, %v2685
        %2687 = vdwg.mxu0
        %2688 = vmatpush.msra.mxu0 0.0
        %2689 = vmatpush.msra.mxu0 0.0
        %2690 = vmatpush.msra.mxu0 0.0
        %2691 = vmatpush.msra.mxu0 0.0
        %2692 = vmatpush.msra.mxu0 0.0
        %2693 = vmatpush.msra.mxu0 0.0
        %2694 = vmatpush.msra.mxu0 0.0
        %2695 = vmatpush.msra.mxu0 0.0
        %2696 = vmatpush.msra.mxu0 0.0
        %2697 = vmatpush.msra.mxu0 0.0
        %2698 = vmatpush.msra.mxu0 0.0
        %2699 = vmatpush.msra.mxu0 0.0
        %2700 = vmatpush.msra.mxu0 0.0
        %2701 = vmatpush.msra.mxu0 0.0
        %2702 = vmatpush.msra.mxu0 0.0
        %v2703 = vand.u32 %v2657, 4294901760
        %v2704 = vsub.f32 %v2657, %v2703
        %v2705 = vand.u32 %v2704, 4294901760
        %v2706 = vsub.f32 %v2704, %v2705
        %v2707 = vand.u32 %v2706, 4294901760
        %2708 = vmatpush.msra.mxu0 %v2707
        %v2709 = vand.u32 %v2654, 4294901760
        %2710 = vmatmul.f32.gmra.mxu0 %v2709
        %v2711 = vpop.f32.mrf.mxu0
        %v2712 = vadd.f32 %v2686, %v2711
        %2713 = vdwg.mxu0
        %2714 = vmatpush.msra.mxu0 0.0
        %2715 = vmatpush.msra.mxu0 0.0
        %2716 = vmatpush.msra.mxu0 0.0
        %2717 = vmatpush.msra.mxu0 0.0
        %2718 = vmatpush.msra.mxu0 0.0
        %2719 = vmatpush.msra.mxu0 0.0
        %2720 = vmatpush.msra.mxu0 0.0
        %2721 = vmatpush.msra.mxu0 0.0
        %2722 = vmatpush.msra.mxu0 0.0
        %2723 = vmatpush.msra.mxu0 0.0
        %2724 = vmatpush.msra.mxu0 0.0
        %2725 = vmatpush.msra.mxu0 0.0
        %2726 = vmatpush.msra.mxu0 0.0
        %2727 = vmatpush.msra.mxu0 0.0
        %2728 = vmatpush.msra.mxu0 0.0
        %v2729 = vand.u32 %v2657, 4294901760
        %v2730 = vsub.f32 %v2657, %v2729
        %2731 = vmatpush.msra.mxu0 %v2730
        %v2732 = vand.u32 %v2654, 4294901760
        %v2733 = vsub.f32 %v2654, %v2732
        %2734 = vmatmul.f32.gmra.mxu0 %v2733
        %v2735 = vpop.f32.mrf.mxu0
        %v2736 = vadd.f32 %v2712, %v2735
        %2737 = vdwg.mxu0
        %2738 = vmatpush.msra.mxu0 0.0
        %2739 = vmatpush.msra.mxu0 0.0
        %2740 = vmatpush.msra.mxu0 0.0
        %2741 = vmatpush.msra.mxu0 0.0
        %2742 = vmatpush.msra.mxu0 0.0
        %2743 = vmatpush.msra.mxu0 0.0
        %2744 = vmatpush.msra.mxu0 0.0
        %2745 = vmatpush.msra.mxu0 0.0
        %2746 = vmatpush.msra.mxu0 0.0
        %2747 = vmatpush.msra.mxu0 0.0
        %2748 = vmatpush.msra.mxu0 0.0
        %2749 = vmatpush.msra.mxu0 0.0
        %2750 = vmatpush.msra.mxu0 0.0
        %2751 = vmatpush.msra.mxu0 0.0
        %2752 = vmatpush.msra.mxu0 0.0
        %v2753 = vand.u32 %v2657, 4294901760
        %2754 = vmatpush.msra.mxu0 %v2753
        %v2755 = vand.u32 %v2654, 4294901760
        %v2756 = vsub.f32 %v2654, %v2755
        %v2757 = vand.u32 %v2756, 4294901760
        %2758 = vmatmul.f32.gmra.mxu0 %v2757
        %v2759 = vpop.f32.mrf.mxu0
        %v2760 = vadd.f32 %v2736, %v2759
        %2761 = vdwg.mxu0
        %2762 = vmatpush.msra.mxu0 0.0
        %2763 = vmatpush.msra.mxu0 0.0
        %2764 = vmatpush.msra.mxu0 0.0
        %2765 = vmatpush.msra.mxu0 0.0
        %2766 = vmatpush.msra.mxu0 0.0
        %2767 = vmatpush.msra.mxu0 0.0
        %2768 = vmatpush.msra.mxu0 0.0
        %2769 = vmatpush.msra.mxu0 0.0
        %2770 = vmatpush.msra.mxu0 0.0
        %2771 = vmatpush.msra.mxu0 0.0
        %2772 = vmatpush.msra.mxu0 0.0
        %2773 = vmatpush.msra.mxu0 0.0
        %2774 = vmatpush.msra.mxu0 0.0
        %2775 = vmatpush.msra.mxu0 0.0
        %2776 = vmatpush.msra.mxu0 0.0
        %v2777 = vand.u32 %v2657, 4294901760
        %v2778 = vsub.f32 %v2657, %v2777
        %v2779 = vand.u32 %v2778, 4294901760
        %2780 = vmatpush.msra.mxu0 %v2779
        %v2781 = vand.u32 %v2654, 4294901760
        %2782 = vmatmul.f32.gmra.mxu0 %v2781
        %v2783 = vpop.f32.mrf.mxu0
        %v2784 = vadd.f32 %v2760, %v2783
        %2785 = vdwg.mxu0
        %2786 = vmatpush.msra.mxu0 0.0
        %2787 = vmatpush.msra.mxu0 0.0
        %2788 = vmatpush.msra.mxu0 0.0
        %2789 = vmatpush.msra.mxu0 0.0
        %2790 = vmatpush.msra.mxu0 0.0
        %2791 = vmatpush.msra.mxu0 0.0
        %2792 = vmatpush.msra.mxu0 0.0
        %2793 = vmatpush.msra.mxu0 0.0
        %2794 = vmatpush.msra.mxu0 0.0
        %2795 = vmatpush.msra.mxu0 0.0
        %2796 = vmatpush.msra.mxu0 0.0
        %2797 = vmatpush.msra.mxu0 0.0
        %2798 = vmatpush.msra.mxu0 0.0
        %2799 = vmatpush.msra.mxu0 0.0
        %2800 = vmatpush.msra.mxu0 0.0
        %v2801 = vand.u32 %v2657, 4294901760
        %2802 = vmatpush.msra.mxu0 %v2801
        %v2803 = vand.u32 %v2654, 4294901760
        %2804 = vmatmul.f32.gmra.mxu0 %v2803
        %v2805 = vpop.f32.mrf.mxu0
        %v2806 = vadd.f32 %v2784, %v2805
        %2807 = vdwg.mxu0
        %2808 = vmatpush.msra.mxu0 0.0
        %2809 = vmatpush.msra.mxu0 0.0
        %2810 = vmatpush.msra.mxu0 0.0
        %2811 = vmatpush.msra.mxu0 0.0
        %2812 = vmatpush.msra.mxu0 0.0
        %2813 = vmatpush.msra.mxu0 0.0
        %2814 = vmatpush.msra.mxu0 0.0
        %2815 = vmatpush.msra.mxu0 0.0
        %2816 = vmatpush.msra.mxu0 0.0
        %2817 = vmatpush.msra.mxu0 0.0
        %2818 = vmatpush.msra.mxu0 0.0
        %2819 = vmatpush.msra.mxu0 0.0
        %2820 = vmatpush.msra.mxu0 0.0
        %2821 = vmatpush.msra.mxu0 0.0
        %2822 = vmatpush.msra.mxu0 0.0
        %v2823 = vand.u32 %v2660, 4294901760
        %2824 = vmatpush.msra.mxu0 %v2823
        %v2825 = vand.u32 %v2654, 4294901760
        %v2826 = vsub.f32 %v2654, %v2825
        %v2827 = vand.u32 %v2826, 4294901760
        %v2828 = vsub.f32 %v2826, %v2827
        %v2829 = vand.u32 %v2828, 4294901760
        %2830 = vmatmul.f32.gmra.mxu0 %v2829
        %v2831 = vpop.f32.mrf.mxu0
        %v2832 = vadd.f32 0.0, %v2831
        %2833 = vdwg.mxu0
        %2834 = vmatpush.msra.mxu0 0.0
        %2835 = vmatpush.msra.mxu0 0.0
        %2836 = vmatpush.msra.mxu0 0.0
        %2837 = vmatpush.msra.mxu0 0.0
        %2838 = vmatpush.msra.mxu0 0.0
        %2839 = vmatpush.msra.mxu0 0.0
        %2840 = vmatpush.msra.mxu0 0.0
        %2841 = vmatpush.msra.mxu0 0.0
        %2842 = vmatpush.msra.mxu0 0.0
        %2843 = vmatpush.msra.mxu0 0.0
        %2844 = vmatpush.msra.mxu0 0.0
        %2845 = vmatpush.msra.mxu0 0.0
        %2846 = vmatpush.msra.mxu0 0.0
        %2847 = vmatpush.msra.mxu0 0.0
        %2848 = vmatpush.msra.mxu0 0.0
        %v2849 = vand.u32 %v2660, 4294901760
        %v2850 = vsub.f32 %v2660, %v2849
        %v2851 = vand.u32 %v2850, 4294901760
        %v2852 = vsub.f32 %v2850, %v2851
        %v2853 = vand.u32 %v2852, 4294901760
        %2854 = vmatpush.msra.mxu0 %v2853
        %v2855 = vand.u32 %v2654, 4294901760
        %2856 = vmatmul.f32.gmra.mxu0 %v2855
        %v2857 = vpop.f32.mrf.mxu0
        %v2858 = vadd.f32 %v2832, %v2857
        %2859 = vdwg.mxu0
        %2860 = vmatpush.msra.mxu0 0.0
        %2861 = vmatpush.msra.mxu0 0.0
        %2862 = vmatpush.msra.mxu0 0.0
        %2863 = vmatpush.msra.mxu0 0.0
        %2864 = vmatpush.msra.mxu0 0.0
        %2865 = vmatpush.msra.mxu0 0.0
        %2866 = vmatpush.msra.mxu0 0.0
        %2867 = vmatpush.msra.mxu0 0.0
        %2868 = vmatpush.msra.mxu0 0.0
        %2869 = vmatpush.msra.mxu0 0.0
        %2870 = vmatpush.msra.mxu0 0.0
        %2871 = vmatpush.msra.mxu0 0.0
        %2872 = vmatpush.msra.mxu0 0.0
        %2873 = vmatpush.msra.mxu0 0.0
        %2874 = vmatpush.msra.mxu0 0.0
        %v2875 = vand.u32 %v2660, 4294901760
        %v2876 = vsub.f32 %v2660, %v2875
        %2877 = vmatpush.msra.mxu0 %v2876
        %v2878 = vand.u32 %v2654, 4294901760
        %v2879 = vsub.f32 %v2654, %v2878
        %2880 = vmatmul.f32.gmra.mxu0 %v2879
        %v2881 = vpop.f32.mrf.mxu0
        %v2882 = vadd.f32 %v2858, %v2881
        %2883 = vdwg.mxu0
        %2884 = vmatpush.msra.mxu0 0.0
        %2885 = vmatpush.msra.mxu0 0.0
        %2886 = vmatpush.msra.mxu0 0.0
        %2887 = vmatpush.msra.mxu0 0.0
        %2888 = vmatpush.msra.mxu0 0.0
        %2889 = vmatpush.msra.mxu0 0.0
        %2890 = vmatpush.msra.mxu0 0.0
        %2891 = vmatpush.msra.mxu0 0.0
        %2892 = vmatpush.msra.mxu0 0.0
        %2893 = vmatpush.msra.mxu0 0.0
        %2894 = vmatpush.msra.mxu0 0.0
        %2895 = vmatpush.msra.mxu0 0.0
        %2896 = vmatpush.msra.mxu0 0.0
        %2897 = vmatpush.msra.mxu0 0.0
        %2898 = vmatpush.msra.mxu0 0.0
        %v2899 = vand.u32 %v2660, 4294901760
        %2900 = vmatpush.msra.mxu0 %v2899
        %v2901 = vand.u32 %v2654, 4294901760
        %v2902 = vsub.f32 %v2654, %v2901
        %v2903 = vand.u32 %v2902, 4294901760
        %2904 = vmatmul.f32.gmra.mxu0 %v2903
        %v2905 = vpop.f32.mrf.mxu0
        %v2906 = vadd.f32 %v2882, %v2905
        %2907 = vdwg.mxu0
        %2908 = vmatpush.msra.mxu0 0.0
        %2909 = vmatpush.msra.mxu0 0.0
        %2910 = vmatpush.msra.mxu0 0.0
        %2911 = vmatpush.msra.mxu0 0.0
        %2912 = vmatpush.msra.mxu0 0.0
        %2913 = vmatpush.msra.mxu0 0.0
        %2914 = vmatpush.msra.mxu0 0.0
        %2915 = vmatpush.msra.mxu0 0.0
        %2916 = vmatpush.msra.mxu0 0.0
        %2917 = vmatpush.msra.mxu0 0.0
        %2918 = vmatpush.msra.mxu0 0.0
        %2919 = vmatpush.msra.mxu0 0.0
        %2920 = vmatpush.msra.mxu0 0.0
        %2921 = vmatpush.msra.mxu0 0.0
        %2922 = vmatpush.msra.mxu0 0.0
        %v2923 = vand.u32 %v2660, 4294901760
        %v2924 = vsub.f32 %v2660, %v2923
        %v2925 = vand.u32 %v2924, 4294901760
        %2926 = vmatpush.msra.mxu0 %v2925
        %v2927 = vand.u32 %v2654, 4294901760
        %2928 = vmatmul.f32.gmra.mxu0 %v2927
        %v2929 = vpop.f32.mrf.mxu0
        %v2930 = vadd.f32 %v2906, %v2929
        %2931 = vdwg.mxu0
        %2932 = vmatpush.msra.mxu0 0.0
        %2933 = vmatpush.msra.mxu0 0.0
        %2934 = vmatpush.msra.mxu0 0.0
        %2935 = vmatpush.msra.mxu0 0.0
        %2936 = vmatpush.msra.mxu0 0.0
        %2937 = vmatpush.msra.mxu0 0.0
        %2938 = vmatpush.msra.mxu0 0.0
        %2939 = vmatpush.msra.mxu0 0.0
        %2940 = vmatpush.msra.mxu0 0.0
        %2941 = vmatpush.msra.mxu0 0.0
        %2942 = vmatpush.msra.mxu0 0.0
        %2943 = vmatpush.msra.mxu0 0.0
        %2944 = vmatpush.msra.mxu0 0.0
        %2945 = vmatpush.msra.mxu0 0.0
        %2946 = vmatpush.msra.mxu0 0.0
        %v2947 = vand.u32 %v2660, 4294901760
        %2948 = vmatpush.msra.mxu0 %v2947
        %v2949 = vand.u32 %v2654, 4294901760
        %2950 = vmatmul.f32.gmra.mxu0 %v2949
        %v2951 = vpop.f32.mrf.mxu0
        %v2952 = vadd.f32 %v2930, %v2951
        %2953 = vdwg.mxu0
        %v2954 = vadd.f32 %v2623, %v2806
        %v2955 = vadd.f32 %v2624, %v2952
        %2956 = vst [vmem:[#allocation1] ss:$2 sm:$0xff] %v325
        %v2957 = vld.sshfl [vmem:[#allocation1] sm:$0xff pattern:$0x75316420]
        %v2958 = vld.sshfl [vmem:[#allocation1 + $0x8] sm:$0xff pattern:$0x75316420]
        %2959 = vrot.lane.b32.xlu0 %v2957, 111
        %v2960 = vpop.permute.xlu0 %2959
        %2961 = vrot.lane.b32.xlu0 %v2958, 111
        %v2962 = vpop.permute.xlu0 %2961
        %vm2963 = vcmask 908288
        %v2964 = vsel %vm2963, %v2960, %v2962
        %2967 = vst [vmem:[#allocation1] ss:$2 sm:$0xff] %v325
        %v2968 = vld.sshfl [vmem:[#allocation1] sm:$0xff pattern:$0x75316420]
        %2969 = vrot.lane.b32.xlu0 %v2968, 111
        %v2970 = vpop.permute.xlu0 %2969
        %v2972 = vsel %vm2963, %v2962, %v2970
        %s2973 = scalar_lea.vmem %s3, 16
        %v2974 = vld [vmem:[%s2973] sm:$0x3]
        %v2976 = vperm.slane %v2974, 0
        %v2977 = vperm.slane %v2974, 1
        %v2980 = vmul.f32 %v2964, %v2976
        %v2981 = vmul.f32 %v2972, %v2977
        %s2982 = scalar_lea.vmem %s4, 64
        %v2983 = vld [vmem:[%s2982] sm:$0xff]
        %v2985 = vsel %vm381, %v2983, 0
        %v2988 = vsel %vm385, %v2980, 0
        %v2991 = vsel %vm385, %v2981, 0
        %2993 = vmatpush.msra.mxu0 0.0
        %2994 = vmatpush.msra.mxu0 0.0
        %2995 = vmatpush.msra.mxu0 0.0
        %2996 = vmatpush.msra.mxu0 0.0
        %2997 = vmatpush.msra.mxu0 0.0
        %2998 = vmatpush.msra.mxu0 0.0
        %2999 = vmatpush.msra.mxu0 0.0
        %3000 = vmatpush.msra.mxu0 0.0
        %3001 = vmatpush.msra.mxu0 0.0
        %3002 = vmatpush.msra.mxu0 0.0
        %3003 = vmatpush.msra.mxu0 0.0
        %3004 = vmatpush.msra.mxu0 0.0
        %3005 = vmatpush.msra.mxu0 0.0
        %3006 = vmatpush.msra.mxu0 0.0
        %3007 = vmatpush.msra.mxu0 0.0
        %v3008 = vand.u32 %v2988, 4294901760
        %3009 = vmatpush.msra.mxu0 %v3008
        %v3010 = vand.u32 %v2985, 4294901760
        %v3011 = vsub.f32 %v2985, %v3010
        %v3012 = vand.u32 %v3011, 4294901760
        %v3013 = vsub.f32 %v3011, %v3012
        %v3014 = vand.u32 %v3013, 4294901760
        %3015 = vmatmul.f32.gmra.mxu0 %v3014
        %v3016 = vpop.f32.mrf.mxu0
        %v3017 = vadd.f32 0.0, %v3016
        %3018 = vdwg.mxu0
        %3019 = vmatpush.msra.mxu0 0.0
        %3020 = vmatpush.msra.mxu0 0.0
        %3021 = vmatpush.msra.mxu0 0.0
        %3022 = vmatpush.msra.mxu0 0.0
        %3023 = vmatpush.msra.mxu0 0.0
        %3024 = vmatpush.msra.mxu0 0.0
        %3025 = vmatpush.msra.mxu0 0.0
        %3026 = vmatpush.msra.mxu0 0.0
        %3027 = vmatpush.msra.mxu0 0.0
        %3028 = vmatpush.msra.mxu0 0.0
        %3029 = vmatpush.msra.mxu0 0.0
        %3030 = vmatpush.msra.mxu0 0.0
        %3031 = vmatpush.msra.mxu0 0.0
        %3032 = vmatpush.msra.mxu0 0.0
        %3033 = vmatpush.msra.mxu0 0.0
        %v3034 = vand.u32 %v2988, 4294901760
        %v3035 = vsub.f32 %v2988, %v3034
        %v3036 = vand.u32 %v3035, 4294901760
        %v3037 = vsub.f32 %v3035, %v3036
        %v3038 = vand.u32 %v3037, 4294901760
        %3039 = vmatpush.msra.mxu0 %v3038
        %v3040 = vand.u32 %v2985, 4294901760
        %3041 = vmatmul.f32.gmra.mxu0 %v3040
        %v3042 = vpop.f32.mrf.mxu0
        %v3043 = vadd.f32 %v3017, %v3042
        %3044 = vdwg.mxu0
        %3045 = vmatpush.msra.mxu0 0.0
        %3046 = vmatpush.msra.mxu0 0.0
        %3047 = vmatpush.msra.mxu0 0.0
        %3048 = vmatpush.msra.mxu0 0.0
        %3049 = vmatpush.msra.mxu0 0.0
        %3050 = vmatpush.msra.mxu0 0.0
        %3051 = vmatpush.msra.mxu0 0.0
        %3052 = vmatpush.msra.mxu0 0.0
        %3053 = vmatpush.msra.mxu0 0.0
        %3054 = vmatpush.msra.mxu0 0.0
        %3055 = vmatpush.msra.mxu0 0.0
        %3056 = vmatpush.msra.mxu0 0.0
        %3057 = vmatpush.msra.mxu0 0.0
        %3058 = vmatpush.msra.mxu0 0.0
        %3059 = vmatpush.msra.mxu0 0.0
        %v3060 = vand.u32 %v2988, 4294901760
        %v3061 = vsub.f32 %v2988, %v3060
        %3062 = vmatpush.msra.mxu0 %v3061
        %v3063 = vand.u32 %v2985, 4294901760
        %v3064 = vsub.f32 %v2985, %v3063
        %3065 = vmatmul.f32.gmra.mxu0 %v3064
        %v3066 = vpop.f32.mrf.mxu0
        %v3067 = vadd.f32 %v3043, %v3066
        %3068 = vdwg.mxu0
        %3069 = vmatpush.msra.mxu0 0.0
        %3070 = vmatpush.msra.mxu0 0.0
        %3071 = vmatpush.msra.mxu0 0.0
        %3072 = vmatpush.msra.mxu0 0.0
        %3073 = vmatpush.msra.mxu0 0.0
        %3074 = vmatpush.msra.mxu0 0.0
        %3075 = vmatpush.msra.mxu0 0.0
        %3076 = vmatpush.msra.mxu0 0.0
        %3077 = vmatpush.msra.mxu0 0.0
        %3078 = vmatpush.msra.mxu0 0.0
        %3079 = vmatpush.msra.mxu0 0.0
        %3080 = vmatpush.msra.mxu0 0.0
        %3081 = vmatpush.msra.mxu0 0.0
        %3082 = vmatpush.msra.mxu0 0.0
        %3083 = vmatpush.msra.mxu0 0.0
        %v3084 = vand.u32 %v2988, 4294901760
        %3085 = vmatpush.msra.mxu0 %v3084
        %v3086 = vand.u32 %v2985, 4294901760
        %v3087 = vsub.f32 %v2985, %v3086
        %v3088 = vand.u32 %v3087, 4294901760
        %3089 = vmatmul.f32.gmra.mxu0 %v3088
        %v3090 = vpop.f32.mrf.mxu0
        %v3091 = vadd.f32 %v3067, %v3090
        %3092 = vdwg.mxu0
        %3093 = vmatpush.msra.mxu0 0.0
        %3094 = vmatpush.msra.mxu0 0.0
        %3095 = vmatpush.msra.mxu0 0.0
        %3096 = vmatpush.msra.mxu0 0.0
        %3097 = vmatpush.msra.mxu0 0.0
        %3098 = vmatpush.msra.mxu0 0.0
        %3099 = vmatpush.msra.mxu0 0.0
        %3100 = vmatpush.msra.mxu0 0.0
        %3101 = vmatpush.msra.mxu0 0.0
        %3102 = vmatpush.msra.mxu0 0.0
        %3103 = vmatpush.msra.mxu0 0.0
        %3104 = vmatpush.msra.mxu0 0.0
        %3105 = vmatpush.msra.mxu0 0.0
        %3106 = vmatpush.msra.mxu0 0.0
        %3107 = vmatpush.msra.mxu0 0.0
        %v3108 = vand.u32 %v2988, 4294901760
        %v3109 = vsub.f32 %v2988, %v3108
        %v3110 = vand.u32 %v3109, 4294901760
        %3111 = vmatpush.msra.mxu0 %v3110
        %v3112 = vand.u32 %v2985, 4294901760
        %3113 = vmatmul.f32.gmra.mxu0 %v3112
        %v3114 = vpop.f32.mrf.mxu0
        %v3115 = vadd.f32 %v3091, %v3114
        %3116 = vdwg.mxu0
        %3117 = vmatpush.msra.mxu0 0.0
        %3118 = vmatpush.msra.mxu0 0.0
        %3119 = vmatpush.msra.mxu0 0.0
        %3120 = vmatpush.msra.mxu0 0.0
        %3121 = vmatpush.msra.mxu0 0.0
        %3122 = vmatpush.msra.mxu0 0.0
        %3123 = vmatpush.msra.mxu0 0.0
        %3124 = vmatpush.msra.mxu0 0.0
        %3125 = vmatpush.msra.mxu0 0.0
        %3126 = vmatpush.msra.mxu0 0.0
        %3127 = vmatpush.msra.mxu0 0.0
        %3128 = vmatpush.msra.mxu0 0.0
        %3129 = vmatpush.msra.mxu0 0.0
        %3130 = vmatpush.msra.mxu0 0.0
        %3131 = vmatpush.msra.mxu0 0.0
        %v3132 = vand.u32 %v2988, 4294901760
        %3133 = vmatpush.msra.mxu0 %v3132
        %v3134 = vand.u32 %v2985, 4294901760
        %3135 = vmatmul.f32.gmra.mxu0 %v3134
        %v3136 = vpop.f32.mrf.mxu0
        %v3137 = vadd.f32 %v3115, %v3136
        %3138 = vdwg.mxu0
        %3139 = vmatpush.msra.mxu0 0.0
        %3140 = vmatpush.msra.mxu0 0.0
        %3141 = vmatpush.msra.mxu0 0.0
        %3142 = vmatpush.msra.mxu0 0.0
        %3143 = vmatpush.msra.mxu0 0.0
        %3144 = vmatpush.msra.mxu0 0.0
        %3145 = vmatpush.msra.mxu0 0.0
        %3146 = vmatpush.msra.mxu0 0.0
        %3147 = vmatpush.msra.mxu0 0.0
        %3148 = vmatpush.msra.mxu0 0.0
        %3149 = vmatpush.msra.mxu0 0.0
        %3150 = vmatpush.msra.mxu0 0.0
        %3151 = vmatpush.msra.mxu0 0.0
        %3152 = vmatpush.msra.mxu0 0.0
        %3153 = vmatpush.msra.mxu0 0.0
        %v3154 = vand.u32 %v2991, 4294901760
        %3155 = vmatpush.msra.mxu0 %v3154
        %v3156 = vand.u32 %v2985, 4294901760
        %v3157 = vsub.f32 %v2985, %v3156
        %v3158 = vand.u32 %v3157, 4294901760
        %v3159 = vsub.f32 %v3157, %v3158
        %v3160 = vand.u32 %v3159, 4294901760
        %3161 = vmatmul.f32.gmra.mxu0 %v3160
        %v3162 = vpop.f32.mrf.mxu0
        %v3163 = vadd.f32 0.0, %v3162
        %3164 = vdwg.mxu0
        %3165 = vmatpush.msra.mxu0 0.0
        %3166 = vmatpush.msra.mxu0 0.0
        %3167 = vmatpush.msra.mxu0 0.0
        %3168 = vmatpush.msra.mxu0 0.0
        %3169 = vmatpush.msra.mxu0 0.0
        %3170 = vmatpush.msra.mxu0 0.0
        %3171 = vmatpush.msra.mxu0 0.0
        %3172 = vmatpush.msra.mxu0 0.0
        %3173 = vmatpush.msra.mxu0 0.0
        %3174 = vmatpush.msra.mxu0 0.0
        %3175 = vmatpush.msra.mxu0 0.0
        %3176 = vmatpush.msra.mxu0 0.0
        %3177 = vmatpush.msra.mxu0 0.0
        %3178 = vmatpush.msra.mxu0 0.0
        %3179 = vmatpush.msra.mxu0 0.0
        %v3180 = vand.u32 %v2991, 4294901760
        %v3181 = vsub.f32 %v2991, %v3180
        %v3182 = vand.u32 %v3181, 4294901760
        %v3183 = vsub.f32 %v3181, %v3182
        %v3184 = vand.u32 %v3183, 4294901760
        %3185 = vmatpush.msra.mxu0 %v3184
        %v3186 = vand.u32 %v2985, 4294901760
        %3187 = vmatmul.f32.gmra.mxu0 %v3186
        %v3188 = vpop.f32.mrf.mxu0
        %v3189 = vadd.f32 %v3163, %v3188
        %3190 = vdwg.mxu0
        %3191 = vmatpush.msra.mxu0 0.0
        %3192 = vmatpush.msra.mxu0 0.0
        %3193 = vmatpush.msra.mxu0 0.0
        %3194 = vmatpush.msra.mxu0 0.0
        %3195 = vmatpush.msra.mxu0 0.0
        %3196 = vmatpush.msra.mxu0 0.0
        %3197 = vmatpush.msra.mxu0 0.0
        %3198 = vmatpush.msra.mxu0 0.0
        %3199 = vmatpush.msra.mxu0 0.0
        %3200 = vmatpush.msra.mxu0 0.0
        %3201 = vmatpush.msra.mxu0 0.0
        %3202 = vmatpush.msra.mxu0 0.0
        %3203 = vmatpush.msra.mxu0 0.0
        %3204 = vmatpush.msra.mxu0 0.0
        %3205 = vmatpush.msra.mxu0 0.0
        %v3206 = vand.u32 %v2991, 4294901760
        %v3207 = vsub.f32 %v2991, %v3206
        %3208 = vmatpush.msra.mxu0 %v3207
        %v3209 = vand.u32 %v2985, 4294901760
        %v3210 = vsub.f32 %v2985, %v3209
        %3211 = vmatmul.f32.gmra.mxu0 %v3210
        %v3212 = vpop.f32.mrf.mxu0
        %v3213 = vadd.f32 %v3189, %v3212
        %3214 = vdwg.mxu0
        %3215 = vmatpush.msra.mxu0 0.0
        %3216 = vmatpush.msra.mxu0 0.0
        %3217 = vmatpush.msra.mxu0 0.0
        %3218 = vmatpush.msra.mxu0 0.0
        %3219 = vmatpush.msra.mxu0 0.0
        %3220 = vmatpush.msra.mxu0 0.0
        %3221 = vmatpush.msra.mxu0 0.0
        %3222 = vmatpush.msra.mxu0 0.0
        %3223 = vmatpush.msra.mxu0 0.0
        %3224 = vmatpush.msra.mxu0 0.0
        %3225 = vmatpush.msra.mxu0 0.0
        %3226 = vmatpush.msra.mxu0 0.0
        %3227 = vmatpush.msra.mxu0 0.0
        %3228 = vmatpush.msra.mxu0 0.0
        %3229 = vmatpush.msra.mxu0 0.0
        %v3230 = vand.u32 %v2991, 4294901760
        %3231 = vmatpush.msra.mxu0 %v3230
        %v3232 = vand.u32 %v2985, 4294901760
        %v3233 = vsub.f32 %v2985, %v3232
        %v3234 = vand.u32 %v3233, 4294901760
        %3235 = vmatmul.f32.gmra.mxu0 %v3234
        %v3236 = vpop.f32.mrf.mxu0
        %v3237 = vadd.f32 %v3213, %v3236
        %3238 = vdwg.mxu0
        %3239 = vmatpush.msra.mxu0 0.0
        %3240 = vmatpush.msra.mxu0 0.0
        %3241 = vmatpush.msra.mxu0 0.0
        %3242 = vmatpush.msra.mxu0 0.0
        %3243 = vmatpush.msra.mxu0 0.0
        %3244 = vmatpush.msra.mxu0 0.0
        %3245 = vmatpush.msra.mxu0 0.0
        %3246 = vmatpush.msra.mxu0 0.0
        %3247 = vmatpush.msra.mxu0 0.0
        %3248 = vmatpush.msra.mxu0 0.0
        %3249 = vmatpush.msra.mxu0 0.0
        %3250 = vmatpush.msra.mxu0 0.0
        %3251 = vmatpush.msra.mxu0 0.0
        %3252 = vmatpush.msra.mxu0 0.0
        %3253 = vmatpush.msra.mxu0 0.0
        %v3254 = vand.u32 %v2991, 4294901760
        %v3255 = vsub.f32 %v2991, %v3254
        %v3256 = vand.u32 %v3255, 4294901760
        %3257 = vmatpush.msra.mxu0 %v3256
        %v3258 = vand.u32 %v2985, 4294901760
        %3259 = vmatmul.f32.gmra.mxu0 %v3258
        %v3260 = vpop.f32.mrf.mxu0
        %v3261 = vadd.f32 %v3237, %v3260
        %3262 = vdwg.mxu0
        %3263 = vmatpush.msra.mxu0 0.0
        %3264 = vmatpush.msra.mxu0 0.0
        %3265 = vmatpush.msra.mxu0 0.0
        %3266 = vmatpush.msra.mxu0 0.0
        %3267 = vmatpush.msra.mxu0 0.0
        %3268 = vmatpush.msra.mxu0 0.0
        %3269 = vmatpush.msra.mxu0 0.0
        %3270 = vmatpush.msra.mxu0 0.0
        %3271 = vmatpush.msra.mxu0 0.0
        %3272 = vmatpush.msra.mxu0 0.0
        %3273 = vmatpush.msra.mxu0 0.0
        %3274 = vmatpush.msra.mxu0 0.0
        %3275 = vmatpush.msra.mxu0 0.0
        %3276 = vmatpush.msra.mxu0 0.0
        %3277 = vmatpush.msra.mxu0 0.0
        %v3278 = vand.u32 %v2991, 4294901760
        %3279 = vmatpush.msra.mxu0 %v3278
        %v3280 = vand.u32 %v2985, 4294901760
        %3281 = vmatmul.f32.gmra.mxu0 %v3280
        %v3282 = vpop.f32.mrf.mxu0
        %v3283 = vadd.f32 %v3261, %v3282
        %3284 = vdwg.mxu0
        %v3285 = vadd.f32 %v2954, %v3137
        %v3286 = vadd.f32 %v2955, %v3283
        %v3287 = vld [vmem:[%s5] sm:$0xff]
        %3289 = vset.pattern.permute.xlu0 0
        %3290 = vperm.xlu0 %3289, %v3287
        %v3291 = vpop.permute.xlu0 %3290
        %v3293 = vadd.f32 %v3285, %v3291
        %v3294 = vadd.f32 %v3286, %v3291
        %v3295 = vmax.f32 %v3293, 0.0
        %v3296 = vmax.f32 %v3294, 0.0
        %v3297 = vadd.f32 %v3295, %v3296
        %3298 = vadd.xlane.f32.xlu0 %v3297
        %v3299 = vpop.xlane.xlu0 %3298
        %v3300 = vrcp.pop 256.0
        %v3301 = vmul.f32 256.0, %v3300
        %v3302 = vsub.f32 1.0, %v3301
        %v3303 = vmul.f32 %v3300, %v3302
        %v3304 = vadd.f32 %v3300, %v3303
        %vm3305 = vweird.f32 %v3300
        %v3306 = vsel %vm3305, %v3300, %v3304
        %v3307 = vmul.f32 %v3299, %v3306
        %v3308 = vld [vmem:[%s6] sm:$0xff]
        %v3309 = vmul.f32 %v3307, %v3308
        %v3310 = vrot.slane %v3309, 4
        %v3311 = vadd.f32 %v3309, %v3310
        %v3312 = vrot.slane %v3311, 2
        %v3313 = vadd.f32 %v3311, %v3312
        %v3314 = vrot.slane %v3313, 1
        %v3315 = vadd.f32 %v3313, %v3314
        %v3316 = vld [vmem:[%s7] sm:$0x1]
        %v3317 = vadd.f32 %v3315, %v3316
        %3318 = vst [vmem:[%s297] sm:$0x1] %v3317
        %s3319 = sand.u32 %s203, 1
        %s3320 = scalar_lea.sflag [#allocation3], %s3319
        %s3321 = sand.u32 %s203, 1
        %s3322 = scalar_lea.vmem [#allocation2], %s3321
        // Predicated region
        $region53: #{tpu_custom_call.1} parent=51 // pred_check
          %p3323 = pneg %p213
        $region54: #{tpu_custom_call.1} parent=51 // pred_check_branch
          %3325 = sbr.rel (%p3323) target = $region56
        $region55: #{tpu_custom_call.1} parent=51 // pred_region
          %3327 = vsyncadd %s3320, 0
          %s3328 = scalar_lea.hbm %s8, %s22
          %s3330 = sshll.u32 %s3322, 4
          %s3331 = int_to_ptr.vmem [resolvable:$true] %s3330
          %s3332 = sshll.u32 %s3328, 4
          %s3333 = int_to_ptr.hbm [resolvable:$true] %s3332
          %3335 = dma.vmem_to_hbm [thread:$0]  %s3331, 16, %s3333, %s3320
        $region56: #{tpu_custom_call.1} parent=51 // pred_fallthru
          _
      $region52: #{tpu_custom_call.1} parent=5 // pred_fallthru
        _
      %p3336 = scmp.le.s32.totalorder 2, %s17
      // Predicated region
      $region57: #{tpu_custom_call.1} parent=5 // pred_check
        %p3337 = pneg %p3336
      $region58: #{tpu_custom_call.1} parent=5 // pred_check_branch
        %3339 = sbr.rel (%p3337) target = $region60
      $region59: #{tpu_custom_call.1} parent=5 // pred_region
        %s3340 = ssub.s32 %s17, 2
        // Predicated region
        $region61: #{tpu_custom_call.1} parent=59 // pred_check
          %p3341 = pneg %p219
        $region62: #{tpu_custom_call.1} parent=59 // pred_check_branch
          %3343 = sbr.rel (%p3341) target = $region64
        $region63: #{tpu_custom_call.1} parent=59 // pred_region
          %s3344 = sand.u32 %s204, 1
          %s3345 = scalar_lea.sflag [#allocation3], %s3344
          %s3346 = sand.u32 %s204, 1
          %s3347 = scalar_lea.vmem [#allocation2], %s3346
          %3349 = dma.done %s3345, 16
        $region64: #{tpu_custom_call.1} parent=59 // pred_fallthru
          _
      $region60: #{tpu_custom_call.1} parent=5 // pred_fallthru
        _
    $region6: #{tpu_custom_call.1} parent=1 // loop_footer
      %s21 = sadd.s32 1, %s17
    $region7: #{tpu_custom_call.1} parent=1 // loop_footer_branch
      %16 = sbr.rel target = $region3
    $region8: #{tpu_custom_call.1} parent=1 // loop_exit
      _
    %3350 = vsyncpa [#allocation3], 1
    %s3351 = scalar_lea.sflag [#allocation3], 1
    %3352 = vsyncpa %s3351, 1

</llo_original>
